<compile_context>
chip_gen: v7x
topology: tpu7x:2x2x1
jax: 0.10.0
libtpu: 0.0.40
codegen_flags: <defaults>
</compile_context>

<pallas_src>
import jax
import jax.numpy as jnp
from jax import lax
from jax.experimental import pallas as pl
from jax.experimental.pallas import tpu as pltpu

EPS = 1e-5


def _interp_matrix(out_sz, in_sz):
    """1-D bilinear resize (align_corners=True) as a dense (out_sz, in_sz) matrix."""
    if out_sz == 1:
        # TODO(synk): degenerate out_sz==1 picks input index 0; verify vs PyTorch if ever used.
        return jnp.zeros((1, in_sz), jnp.float32).at[0, 0].set(1.0)
    src = jnp.arange(out_sz, dtype=jnp.float32) * ((in_sz - 1) / (out_sz - 1))
    j0 = jnp.clip(jnp.floor(src), 0, in_sz - 1).astype(jnp.int32)
    j1 = jnp.clip(j0 + 1, 0, in_sz - 1)
    w = src - j0.astype(jnp.float32)
    return (jax.nn.one_hot(j0, in_sz, dtype=jnp.float32) * (1.0 - w)[:, None]
            + jax.nn.one_hot(j1, in_sz, dtype=jnp.float32) * w[:, None])


def _vmem_budgets():
    """(per-tile activation budget, vmem_limit_bytes) chosen per chip generation."""
    try:
        cap = int(pltpu.get_tpu_info().vmem_capacity_bytes)
    except Exception:
        cap = 64 * 1024 * 1024
    if cap >= 100 * 1024 * 1024:                     # v5e / v6e: 128 MiB physical VMEM
        return 6 * 1024 * 1024, 96 * 1024 * 1024
    return 3 * 1024 * 1024, 40 * 1024 * 1024         # v7x (64 MiB / TC) or unknown


def _pick_tile_h(Ho, Wo, C, budget_bytes):
    """Largest row-tile TH that keeps blocks legal (TH%8==0, TH*Wo%128==0) and in budget."""
    cands = [Ho]                                      # T == 1 is always legal
    for d in range(8, Ho, 8):
        if Ho % d == 0 and (d * Wo) % 128 == 0:
            cands.append(d)
    per_row = 4 * Wo * max(27, C)                     # widest live f32 value per output row
    fits = [d for d in cands if d * per_row <= budget_bytes]
    return max(fits) if fits else min(cands)


# ----------------------------- Pallas kernels -----------------------------

def _upsample_conv_kernel(xw_ref, bh_ref, wt_ref, b_ref, y_ref, stat_ref):
    # xw_ref  : (1, 9, H, Wo)  bf16  width-resized, dx-shifted low-res image (per sample n)
    # bh_ref  : (1, 3*TH, H)   bf16  dy-shifted height-interp rows for this row tile
    # wt_ref  : (27, C) f32 SMEM     conv_in taps, k = (dx*3 + ci)*3 + dy
    # b_ref   : (C,)    f32 SMEM     conv_in bias
    # y_ref   : (1, C, TH, Wo) f32   conv_in output tile (channel-major NCHW slice)
    # stat_ref: (1, 1, C, 2)   f32   per-tile BN partial sums (sum, sum of squares)
    TH = bh_ref.shape[1] // 3
    C = wt_ref.shape[1]

    bh = bh_ref[0]                                                   # (3*TH, H) bf16
    # Stage 1: height interp + the 3 vertical conv taps as 9 MXU matmuls
    # (one per (dx, ci) group; all three dy taps share one matmul with 3x larger M).
    planes = []                                                      # planes[(dx*3+ci)*3+dy]
    for g in range(9):
        r = jnp.dot(bh, xw_ref[0, g], preferred_element_type=jnp.float32)   # (3*TH, Wo) f32
        for dy in range(3):
            planes.append(r[dy * TH:(dy + 1) * TH, :])

    # Stage 2: combine the 27 taps per output channel with SMEM scalar weights.
    # TODO(synk): for large C move this contraction onto the MXU as (C,27)@(27,TH*Wo).
    for c in range(C):
        acc = jnp.full((TH, planes[0].shape[1]), b_ref[c], jnp.float32)
        for k in range(27):
            acc = acc + wt_ref[k, c] * planes[k]
        y_ref[0, c] = acc

    yb = y_ref[0]                                                    # (C, TH, Wo)
    stat_ref[0, 0, :, 0:1] = jnp.sum(jnp.sum(yb, axis=2), axis=1, keepdims=True)
    stat_ref[0, 0, :, 1:2] = jnp.sum(jnp.sum(yb * yb, axis=2), axis=1, keepdims=True)


def _bn_concat_conv_kernel(y_ref, f_ref, wy_ref, wf_ref, b_ref, o_ref):
    # Folded BN + channel concat + 1x1 conv as two MXU matmuls over the channel dim.
    # y_ref/f_ref/o_ref : (1, C, TILE)  flattened-spatial, lane-dense (TILE % 128 == 0)
    # wy_ref/wf_ref     : (C, C)        conv_out weights (BN scale folded into wy)
    # b_ref             : (C, 1)        conv_out bias (BN shift folded in)
    acc = jnp.dot(wy_ref[...], y_ref[0], preferred_element_type=jnp.float32)
    acc = acc + jnp.dot(wf_ref[...], f_ref[0], preferred_element_type=jnp.float32)
    o_ref[0] = acc + b_ref[...]


# ------------------------------- wrapper -----------------------------------

def make_params(key, in_channels):
    C = in_channels
    ks = jax.random.split(key, 6)
    return dict(
        w_in=0.1 * jax.random.normal(ks[0], (C, 3, 3, 3), jnp.float32),       # Conv2d(3,C,3,pad=1)
        b_in=0.1 * jax.random.normal(ks[1], (C,), jnp.float32),
        gamma=1.0 + 0.1 * jax.random.normal(ks[2], (C,), jnp.float32),        # BatchNorm2d(C)
        beta=0.1 * jax.random.normal(ks[3], (C,), jnp.float32),
        w_out=0.1 * jax.random.normal(ks[4], (C, 2 * C, 1, 1), jnp.float32),  # Conv2d(2C,C,1)
        b_out=0.1 * jax.random.normal(ks[5], (C,), jnp.float32),
    )


def multi_input_forward(img, features, params, factor, tile_h=None):
    N, ci_img, H, W = img.shape
    assert ci_img == 3, "conv_in expects a 3-channel image"
    C = params['w_in'].shape[0]
    Ho, Wo = int(H * factor), int(W * factor)
    assert features.shape == (N, C, Ho, Wo), features.shape
    f32 = jnp.float32

    act_budget, vmem_limit = _vmem_budgets()
    TH = _pick_tile_h(Ho, Wo, C, act_budget) if tile_h is None else int(tile_h)
    assert Ho % TH == 0, (Ho, TH)
    assert TH % 8 == 0 or TH == Ho, TH
    T = Ho // TH
    assert (TH * Wo) % 128 == 0 or T == 1, (TH, Wo)

    # ---- bilinear interp matrices (align_corners=True) ----
    A_h = _interp_matrix(Ho, H)                                        # (Ho, H)
    A_w = _interp_matrix(Wo, W)                                        # (Wo, W)

    # ---- width resize hoisted out of the grid; conv dx taps / zero pad pre-shifted ----
    xw = jnp.einsum('ncpq,jq->ncpj', img.astype(f32), A_w)             # (N, 3, H, Wo)
    xp = jnp.pad(xw, ((0, 0), (0, 0), (0, 0), (1, 1)))
    xw9 = jnp.stack([xp[..., dx:dx + Wo] for dx in range(3)], axis=1)  # (N, 3dx, 3ci, H, Wo)
    xw9 = xw9.reshape(N, 9, H, Wo).astype(jnp.bfloat16)                # g = dx*3 + ci

    # ---- dy-shifted height-interp rows, pre-stacked per tile: (T, 3*TH, H) ----
    zr = jnp.zeros((1, H), f32)
    bh = jnp.stack([jnp.concatenate([zr, A_h[:-1]], axis=0),           # dy = 0
                    A_h,                                               # dy = 1
                    jnp.concatenate([A_h[1:], zr], axis=0)], axis=0)   # dy = 2  -> (3, Ho, H)
    bh_tiles = (bh.reshape(3, T, TH, H).transpose(1, 0, 2, 3)
                  .reshape(T, 3 * TH, H).astype(jnp.bfloat16))

    # ---- conv_in taps/bias as small SMEM tables (no (…,1,1) VMEM tile padding) ----
    w_taps = jnp.transpose(params['w_in'], (3, 1, 2, 0)).reshape(27, C).astype(f32)
    b_in = params['b_in'].astype(f32)                                  # (C,)

    cparams = pltpu.CompilerParams(
        dimension_semantics=("parallel", "parallel"),
        vmem_limit_bytes=vmem_limit)

    # ---- kernel 1: fused (hoisted-width) upsample + 3x3 conv + per-tile BN partial sums ----
    y, stats = pl.pallas_call(
        _upsample_conv_kernel,
        out_shape=(jax.ShapeDtypeStruct((N, C, Ho, Wo), f32),
                   jax.ShapeDtypeStruct((N, T, C, 2), f32)),
        grid=(N, T),
        in_specs=[pl.BlockSpec((1, 9, H, Wo), lambda n, t: (n, 0, 0, 0)),
                  pl.BlockSpec((1, 3 * TH, H), lambda n, t: (t, 0, 0)),
                  pl.BlockSpec(memory_space=pltpu.MemorySpace.SMEM),
                  pl.BlockSpec(memory_space=pltpu.MemorySpace.SMEM)],
        out_specs=(pl.BlockSpec((1, C, TH, Wo), lambda n, t: (n, 0, t, 0)),
                   pl.BlockSpec((1, 1, C, 2), lambda n, t: (n, t, 0, 0))),
        compiler_params=cparams,
    )(xw9, bh_tiles, w_taps, b_in)

    # ---- BatchNorm (training-mode batch stats) reduced in wrapper & folded into conv_out ----
    cnt = float(N * Ho * Wo)
    s1 = jnp.sum(stats[..., 0], axis=(0, 1))                           # (C,)
    s2 = jnp.sum(stats[..., 1], axis=(0, 1))
    mean = s1 / cnt
    var = jnp.maximum(s2 / cnt - mean * mean, 0.0)
    # TODO(synk): f32 sum / sum-of-squares variance can cancel at very large N*Ho*Wo;
    #             switch to a two-pass mean-then-variance beyond toy sizes.
    scale = params['gamma'] / jnp.sqrt(var + EPS)
    shift = params['beta'] - mean * scale

    w_out = params['w_out'][:, :, 0, 0]                                 # (C, 2C)
    wy = (w_out[:, :C] * scale[None, :]).astype(f32)                    # (C, C) BN scale folded
    wf = w_out[:, C:].astype(f32)                                       # (C, C)
    b_fold = (w_out[:, :C] @ shift + params['b_out']).reshape(C, 1).astype(f32)

    # ---- kernel 2: (folded BN) + concat + 1x1 conv on lane-dense (C, Ho*Wo) slabs ----
    # TODO(synk): y / features could be stored in bf16 to halve kernel-2 HBM bytes.
    S, TS = Ho * Wo, TH * Wo
    y2 = y.reshape(N, C, S)                                             # free contiguous reshape
    f2 = features.astype(f32).reshape(N, C, S)

    out = pl.pallas_call(
        _bn_concat_conv_kernel,
        out_shape=jax.ShapeDtypeStruct((N, C, S), f32),
        grid=(N, T),
        in_specs=[pl.BlockSpec((1, C, TS), lambda n, t: (n, 0, t)),
                  pl.BlockSpec((1, C, TS), lambda n, t: (n, 0, t)),
                  pl.BlockSpec((C, C), lambda n, t: (0, 0)),
                  pl.BlockSpec((C, C), lambda n, t: (0, 0)),
                  pl.BlockSpec((C, 1), lambda n, t: (0, 0))],
        out_specs=pl.BlockSpec((1, C, TS), lambda n, t: (n, 0, t)),
        compiler_params=cparams,
    )(y2, f2, wy, wf, b_fold)

    return out.reshape(N, C, Ho, Wo)                                    # NCHW


# ------------------------- pure-JAX reference (for check) -------------------------

def reference_forward(img, features, params, factor):
    N, _, H, W = img.shape
    Ho, Wo = int(H * factor), int(W * factor)
    ys = jnp.arange(Ho, dtype=jnp.float32) * ((H - 1) / (Ho - 1))
    xs = jnp.arange(Wo, dtype=jnp.float32) * ((W - 1) / (Wo - 1))
    y0 = jnp.clip(jnp.floor(ys), 0, H - 1).astype(jnp.int32)
    y1 = jnp.clip(y0 + 1, 0, H - 1)
    x0 = jnp.clip(jnp.floor(xs), 0, W - 1).astype(jnp.int32)
    x1 = jnp.clip(x0 + 1, 0, W - 1)
    wy = (ys - y0.astype(jnp.float32))[None, None, :, None]
    wx = (xs - x0.astype(jnp.float32))[None, None, None, :]
    g = lambda yi, xi: img[:, :, yi, :][:, :, :, xi]
    top = g(y0, x0) * (1 - wx) + g(y0, x1) * wx
    bot = g(y1, x0) * (1 - wx) + g(y1, x1) * wx
    x_up = top * (1 - wy) + bot * wy                                   # (N, 3, Ho, Wo)

    x_nhwc = jnp.transpose(x_up, (0, 2, 3, 1))
    w_hwio = jnp.transpose(params['w_in'], (2, 3, 1, 0))
    yconv = lax.conv_general_dilated(
        x_nhwc, w_hwio, (1, 1), 'SAME',
        dimension_numbers=('NHWC', 'HWIO', 'NHWC')) + params['b_in']
    mean = yconv.mean(axis=(0, 1, 2))
    var = yconv.var(axis=(0, 1, 2))
    xbn = (yconv - mean) / jnp.sqrt(var + EPS) * params['gamma'] + params['beta']
    cat = jnp.concatenate([xbn, jnp.transpose(features, (0, 2, 3, 1))], axis=-1)
    w_out_mat = jnp.transpose(params['w_out'][:, :, 0, 0], (1, 0))
    out = jnp.einsum('nhwk,kc->nhwc', cat, w_out_mat) + params['b_out']
    return jnp.transpose(out, (0, 3, 1, 2))


if __name__ == "__main__":
    N, C_in, H, W, factor = 2, 4, 16, 16, 2
    Ho, Wo = H * factor, W * factor

    key = jax.random.PRNGKey(0)
    k_img, k_feat, k_par = jax.random.split(key, 3)
    img = jax.random.normal(k_img, (N, 3, H, W), jnp.float32)
    features = jax.random.normal(k_feat, (N, C_in, Ho, Wo), jnp.float32)
    params = make_params(k_par, C_in)

    fwd = jax.jit(multi_input_forward, static_argnums=(3, 4))
    out = fwd(img, features, params, factor, 16)      # tile_h=16 -> 2 spatial tiles per image
    out = jax.block_until_ready(out)

    ref = reference_forward(img, features, params, factor)
    assert out.shape == (N, C_in, Ho, Wo), out.shape
    max_err = float(jnp.max(jnp.abs(out - ref)))
    # Tolerance relaxed vs pure-f32 since kernel-1 MXU operands (interp matrices + image)
    # are cast to bf16 per the perf review; accumulation and BN stats stay f32.
    assert jnp.allclose(out, ref, rtol=1e-2, atol=1e-2), f"mismatch, max abs err={max_err}"
    print("KERNEL_OK")
</pallas_src>

<mosaic_0001>
module attributes {stable_mosaic.version = 11 : i64} {
  func.func @_upsample_conv_kernel(%arg0: i32, %arg1: i32, %arg2: memref<1x9x16x32xbf16, #tpu.memory_space<vmem>>, %arg3: memref<1x48x16xbf16, #tpu.memory_space<vmem>>, %arg4: memref<27x4xf32, #tpu.memory_space<smem>>, %arg5: memref<4xf32, #tpu.memory_space<smem>>, %arg6: memref<1x4x16x32xf32, #tpu.memory_space<vmem>>, %arg7: memref<1x1x4x2xf32, #tpu.memory_space<vmem>>) attributes {dimension_semantics = [#tpu.dimension_semantics<parallel>, #tpu.dimension_semantics<parallel>], iteration_bounds = array<i64: 2, 2>, scalar_prefetch = 0 : i64, scratch_operands = 0 : i64, tpu.core_type = #tpu.core_type<tc>, window_params = [{transform_indices = @transform_0, window_bounds = array<i64: 1, 9, 16, 32>}, {transform_indices = @transform_1, window_bounds = array<i64: 1, 48, 16>}, {transform_indices = @transform_2, window_bounds = array<i64: 27, 4>}, {transform_indices = @transform_3, window_bounds = array<i64: 4>}, {transform_indices = @transform_4, window_bounds = array<i64: 1, 4, 16, 32>}, {transform_indices = @transform_5, window_bounds = array<i64: 1, 1, 4, 2>}]} {
    %c0 = arith.constant 0 : index
    %c0_0 = arith.constant 0 : index
    %c0_1 = arith.constant 0 : index
    %0 = vector.load %arg3[%c0, %c0_0, %c0_1] : memref<1x48x16xbf16, #tpu.memory_space<vmem>>, vector<1x48x16xbf16>
    %1 = vector.shape_cast %0 : vector<1x48x16xbf16> to vector<48x16xbf16>
    %c0_2 = arith.constant 0 : index
    %c0_3 = arith.constant 0 : index
    %c0_4 = arith.constant 0 : index
    %c0_5 = arith.constant 0 : index
    %2 = vector.load %arg2[%c0_2, %c0_3, %c0_4, %c0_5] : memref<1x9x16x32xbf16, #tpu.memory_space<vmem>>, vector<1x1x16x32xbf16>
    %3 = vector.shape_cast %2 : vector<1x1x16x32xbf16> to vector<16x32xbf16>
    %cst = arith.constant dense<0.000000e+00> : vector<48x32xf32>
    %4 = tpu.matmul %1, %3, %cst {dimension_numbers = #tpu.dot_dimension_numbers<[1], [0], [0], [1], [0, 0, 1, 1], [], []>} : vector<48x16xbf16>, vector<16x32xbf16>, vector<48x32xf32> -> vector<48x32xf32>
    %5 = vector.extract_strided_slice %4 {offsets = [0, 0], sizes = [16, 32], strides = [1, 1]} : vector<48x32xf32> to vector<16x32xf32>
    %6 = vector.extract_strided_slice %4 {offsets = [16, 0], sizes = [16, 32], strides = [1, 1]} : vector<48x32xf32> to vector<16x32xf32>
    %7 = vector.extract_strided_slice %4 {offsets = [32, 0], sizes = [16, 32], strides = [1, 1]} : vector<48x32xf32> to vector<16x32xf32>
    %c0_6 = arith.constant 0 : index
    %c1 = arith.constant 1 : index
    %c0_7 = arith.constant 0 : index
    %c0_8 = arith.constant 0 : index
    %8 = vector.load %arg2[%c0_6, %c1, %c0_7, %c0_8] : memref<1x9x16x32xbf16, #tpu.memory_space<vmem>>, vector<1x1x16x32xbf16>
    %9 = vector.shape_cast %8 : vector<1x1x16x32xbf16> to vector<16x32xbf16>
    %cst_9 = arith.constant dense<0.000000e+00> : vector<48x32xf32>
    %10 = tpu.matmul %1, %9, %cst_9 {dimension_numbers = #tpu.dot_dimension_numbers<[1], [0], [0], [1], [0, 0, 1, 1], [], []>} : vector<48x16xbf16>, vector<16x32xbf16>, vector<48x32xf32> -> vector<48x32xf32>
    %11 = vector.extract_strided_slice %10 {offsets = [0, 0], sizes = [16, 32], strides = [1, 1]} : vector<48x32xf32> to vector<16x32xf32>
    %12 = vector.extract_strided_slice %10 {offsets = [16, 0], sizes = [16, 32], strides = [1, 1]} : vector<48x32xf32> to vector<16x32xf32>
    %13 = vector.extract_strided_slice %10 {offsets = [32, 0], sizes = [16, 32], strides = [1, 1]} : vector<48x32xf32> to vector<16x32xf32>
    %c0_10 = arith.constant 0 : index
    %c2 = arith.constant 2 : index
    %c0_11 = arith.constant 0 : index
    %c0_12 = arith.constant 0 : index
    %14 = vector.load %arg2[%c0_10, %c2, %c0_11, %c0_12] : memref<1x9x16x32xbf16, #tpu.memory_space<vmem>>, vector<1x1x16x32xbf16>
    %15 = vector.shape_cast %14 : vector<1x1x16x32xbf16> to vector<16x32xbf16>
    %cst_13 = arith.constant dense<0.000000e+00> : vector<48x32xf32>
    %16 = tpu.matmul %1, %15, %cst_13 {dimension_numbers = #tpu.dot_dimension_numbers<[1], [0], [0], [1], [0, 0, 1, 1], [], []>} : vector<48x16xbf16>, vector<16x32xbf16>, vector<48x32xf32> -> vector<48x32xf32>
    %17 = vector.extract_strided_slice %16 {offsets = [0, 0], sizes = [16, 32], strides = [1, 1]} : vector<48x32xf32> to vector<16x32xf32>
    %18 = vector.extract_strided_slice %16 {offsets = [16, 0], sizes = [16, 32], strides = [1, 1]} : vector<48x32xf32> to vector<16x32xf32>
    %19 = vector.extract_strided_slice %16 {offsets = [32, 0], sizes = [16, 32], strides = [1, 1]} : vector<48x32xf32> to vector<16x32xf32>
    %c0_14 = arith.constant 0 : index
    %c3 = arith.constant 3 : index
    %c0_15 = arith.constant 0 : index
    %c0_16 = arith.constant 0 : index
    %20 = vector.load %arg2[%c0_14, %c3, %c0_15, %c0_16] : memref<1x9x16x32xbf16, #tpu.memory_space<vmem>>, vector<1x1x16x32xbf16>
    %21 = vector.shape_cast %20 : vector<1x1x16x32xbf16> to vector<16x32xbf16>
    %cst_17 = arith.constant dense<0.000000e+00> : vector<48x32xf32>
    %22 = tpu.matmul %1, %21, %cst_17 {dimension_numbers = #tpu.dot_dimension_numbers<[1], [0], [0], [1], [0, 0, 1, 1], [], []>} : vector<48x16xbf16>, vector<16x32xbf16>, vector<48x32xf32> -> vector<48x32xf32>
    %23 = vector.extract_strided_slice %22 {offsets = [0, 0], sizes = [16, 32], strides = [1, 1]} : vector<48x32xf32> to vector<16x32xf32>
    %24 = vector.extract_strided_slice %22 {offsets = [16, 0], sizes = [16, 32], strides = [1, 1]} : vector<48x32xf32> to vector<16x32xf32>
    %25 = vector.extract_strided_slice %22 {offsets = [32, 0], sizes = [16, 32], strides = [1, 1]} : vector<48x32xf32> to vector<16x32xf32>
    %c0_18 = arith.constant 0 : index
    %c4 = arith.constant 4 : index
    %c0_19 = arith.constant 0 : index
    %c0_20 = arith.constant 0 : index
    %26 = vector.load %arg2[%c0_18, %c4, %c0_19, %c0_20] : memref<1x9x16x32xbf16, #tpu.memory_space<vmem>>, vector<1x1x16x32xbf16>
    %27 = vector.shape_cast %26 : vector<1x1x16x32xbf16> to vector<16x32xbf16>
    %cst_21 = arith.constant dense<0.000000e+00> : vector<48x32xf32>
    %28 = tpu.matmul %1, %27, %cst_21 {dimension_numbers = #tpu.dot_dimension_numbers<[1], [0], [0], [1], [0, 0, 1, 1], [], []>} : vector<48x16xbf16>, vector<16x32xbf16>, vector<48x32xf32> -> vector<48x32xf32>
    %29 = vector.extract_strided_slice %28 {offsets = [0, 0], sizes = [16, 32], strides = [1, 1]} : vector<48x32xf32> to vector<16x32xf32>
    %30 = vector.extract_strided_slice %28 {offsets = [16, 0], sizes = [16, 32], strides = [1, 1]} : vector<48x32xf32> to vector<16x32xf32>
    %31 = vector.extract_strided_slice %28 {offsets = [32, 0], sizes = [16, 32], strides = [1, 1]} : vector<48x32xf32> to vector<16x32xf32>
    %c0_22 = arith.constant 0 : index
    %c5 = arith.constant 5 : index
    %c0_23 = arith.constant 0 : index
    %c0_24 = arith.constant 0 : index
    %32 = vector.load %arg2[%c0_22, %c5, %c0_23, %c0_24] : memref<1x9x16x32xbf16, #tpu.memory_space<vmem>>, vector<1x1x16x32xbf16>
    %33 = vector.shape_cast %32 : vector<1x1x16x32xbf16> to vector<16x32xbf16>
    %cst_25 = arith.constant dense<0.000000e+00> : vector<48x32xf32>
    %34 = tpu.matmul %1, %33, %cst_25 {dimension_numbers = #tpu.dot_dimension_numbers<[1], [0], [0], [1], [0, 0, 1, 1], [], []>} : vector<48x16xbf16>, vector<16x32xbf16>, vector<48x32xf32> -> vector<48x32xf32>
    %35 = vector.extract_strided_slice %34 {offsets = [0, 0], sizes = [16, 32], strides = [1, 1]} : vector<48x32xf32> to vector<16x32xf32>
    %36 = vector.extract_strided_slice %34 {offsets = [16, 0], sizes = [16, 32], strides = [1, 1]} : vector<48x32xf32> to vector<16x32xf32>
    %37 = vector.extract_strided_slice %34 {offsets = [32, 0], sizes = [16, 32], strides = [1, 1]} : vector<48x32xf32> to vector<16x32xf32>
    %c0_26 = arith.constant 0 : index
    %c6 = arith.constant 6 : index
    %c0_27 = arith.constant 0 : index
    %c0_28 = arith.constant 0 : index
    %38 = vector.load %arg2[%c0_26, %c6, %c0_27, %c0_28] : memref<1x9x16x32xbf16, #tpu.memory_space<vmem>>, vector<1x1x16x32xbf16>
    %39 = vector.shape_cast %38 : vector<1x1x16x32xbf16> to vector<16x32xbf16>
    %cst_29 = arith.constant dense<0.000000e+00> : vector<48x32xf32>
    %40 = tpu.matmul %1, %39, %cst_29 {dimension_numbers = #tpu.dot_dimension_numbers<[1], [0], [0], [1], [0, 0, 1, 1], [], []>} : vector<48x16xbf16>, vector<16x32xbf16>, vector<48x32xf32> -> vector<48x32xf32>
    %41 = vector.extract_strided_slice %40 {offsets = [0, 0], sizes = [16, 32], strides = [1, 1]} : vector<48x32xf32> to vector<16x32xf32>
    %42 = vector.extract_strided_slice %40 {offsets = [16, 0], sizes = [16, 32], strides = [1, 1]} : vector<48x32xf32> to vector<16x32xf32>
    %43 = vector.extract_strided_slice %40 {offsets = [32, 0], sizes = [16, 32], strides = [1, 1]} : vector<48x32xf32> to vector<16x32xf32>
    %c0_30 = arith.constant 0 : index
    %c7 = arith.constant 7 : index
    %c0_31 = arith.constant 0 : index
    %c0_32 = arith.constant 0 : index
    %44 = vector.load %arg2[%c0_30, %c7, %c0_31, %c0_32] : memref<1x9x16x32xbf16, #tpu.memory_space<vmem>>, vector<1x1x16x32xbf16>
    %45 = vector.shape_cast %44 : vector<1x1x16x32xbf16> to vector<16x32xbf16>
    %cst_33 = arith.constant dense<0.000000e+00> : vector<48x32xf32>
    %46 = tpu.matmul %1, %45, %cst_33 {dimension_numbers = #tpu.dot_dimension_numbers<[1], [0], [0], [1], [0, 0, 1, 1], [], []>} : vector<48x16xbf16>, vector<16x32xbf16>, vector<48x32xf32> -> vector<48x32xf32>
    %47 = vector.extract_strided_slice %46 {offsets = [0, 0], sizes = [16, 32], strides = [1, 1]} : vector<48x32xf32> to vector<16x32xf32>
    %48 = vector.extract_strided_slice %46 {offsets = [16, 0], sizes = [16, 32], strides = [1, 1]} : vector<48x32xf32> to vector<16x32xf32>
    %49 = vector.extract_strided_slice %46 {offsets = [32, 0], sizes = [16, 32], strides = [1, 1]} : vector<48x32xf32> to vector<16x32xf32>
    %c0_34 = arith.constant 0 : index
    %c8 = arith.constant 8 : index
    %c0_35 = arith.constant 0 : index
    %c0_36 = arith.constant 0 : index
    %50 = vector.load %arg2[%c0_34, %c8, %c0_35, %c0_36] : memref<1x9x16x32xbf16, #tpu.memory_space<vmem>>, vector<1x1x16x32xbf16>
    %51 = vector.shape_cast %50 : vector<1x1x16x32xbf16> to vector<16x32xbf16>
    %cst_37 = arith.constant dense<0.000000e+00> : vector<48x32xf32>
    %52 = tpu.matmul %1, %51, %cst_37 {dimension_numbers = #tpu.dot_dimension_numbers<[1], [0], [0], [1], [0, 0, 1, 1], [], []>} : vector<48x16xbf16>, vector<16x32xbf16>, vector<48x32xf32> -> vector<48x32xf32>
    %53 = vector.extract_strided_slice %52 {offsets = [0, 0], sizes = [16, 32], strides = [1, 1]} : vector<48x32xf32> to vector<16x32xf32>
    %54 = vector.extract_strided_slice %52 {offsets = [16, 0], sizes = [16, 32], strides = [1, 1]} : vector<48x32xf32> to vector<16x32xf32>
    %55 = vector.extract_strided_slice %52 {offsets = [32, 0], sizes = [16, 32], strides = [1, 1]} : vector<48x32xf32> to vector<16x32xf32>
    %c0_38 = arith.constant 0 : index
    %56 = memref.load %arg5[%c0_38] : memref<4xf32, #tpu.memory_space<smem>>
    %57 = vector.broadcast %56 : f32 to vector<16x32xf32>
    %c0_39 = arith.constant 0 : index
    %c0_40 = arith.constant 0 : index
    %58 = memref.load %arg4[%c0_39, %c0_40] : memref<27x4xf32, #tpu.memory_space<smem>>
    %59 = vector.broadcast %58 : f32 to vector<16x32xf32>
    %60 = arith.mulf %59, %5 : vector<16x32xf32>
    %61 = arith.addf %57, %60 : vector<16x32xf32>
    %c1_41 = arith.constant 1 : index
    %c0_42 = arith.constant 0 : index
    %62 = memref.load %arg4[%c1_41, %c0_42] : memref<27x4xf32, #tpu.memory_space<smem>>
    %63 = vector.broadcast %62 : f32 to vector<16x32xf32>
    %64 = arith.mulf %63, %6 : vector<16x32xf32>
    %65 = arith.addf %61, %64 : vector<16x32xf32>
    %c2_43 = arith.constant 2 : index
    %c0_44 = arith.constant 0 : index
    %66 = memref.load %arg4[%c2_43, %c0_44] : memref<27x4xf32, #tpu.memory_space<smem>>
    %67 = vector.broadcast %66 : f32 to vector<16x32xf32>
    %68 = arith.mulf %67, %7 : vector<16x32xf32>
    %69 = arith.addf %65, %68 : vector<16x32xf32>
    %c3_45 = arith.constant 3 : index
    %c0_46 = arith.constant 0 : index
    %70 = memref.load %arg4[%c3_45, %c0_46] : memref<27x4xf32, #tpu.memory_space<smem>>
    %71 = vector.broadcast %70 : f32 to vector<16x32xf32>
    %72 = arith.mulf %71, %11 : vector<16x32xf32>
    %73 = arith.addf %69, %72 : vector<16x32xf32>
    %c4_47 = arith.constant 4 : index
    %c0_48 = arith.constant 0 : index
    %74 = memref.load %arg4[%c4_47, %c0_48] : memref<27x4xf32, #tpu.memory_space<smem>>
    %75 = vector.broadcast %74 : f32 to vector<16x32xf32>
    %76 = arith.mulf %75, %12 : vector<16x32xf32>
    %77 = arith.addf %73, %76 : vector<16x32xf32>
    %c5_49 = arith.constant 5 : index
    %c0_50 = arith.constant 0 : index
    %78 = memref.load %arg4[%c5_49, %c0_50] : memref<27x4xf32, #tpu.memory_space<smem>>
    %79 = vector.broadcast %78 : f32 to vector<16x32xf32>
    %80 = arith.mulf %79, %13 : vector<16x32xf32>
    %81 = arith.addf %77, %80 : vector<16x32xf32>
    %c6_51 = arith.constant 6 : index
    %c0_52 = arith.constant 0 : index
    %82 = memref.load %arg4[%c6_51, %c0_52] : memref<27x4xf32, #tpu.memory_space<smem>>
    %83 = vector.broadcast %82 : f32 to vector<16x32xf32>
    %84 = arith.mulf %83, %17 : vector<16x32xf32>
    %85 = arith.addf %81, %84 : vector<16x32xf32>
    %c7_53 = arith.constant 7 : index
    %c0_54 = arith.constant 0 : index
    %86 = memref.load %arg4[%c7_53, %c0_54] : memref<27x4xf32, #tpu.memory_space<smem>>
    %87 = vector.broadcast %86 : f32 to vector<16x32xf32>
    %88 = arith.mulf %87, %18 : vector<16x32xf32>
    %89 = arith.addf %85, %88 : vector<16x32xf32>
    %c8_55 = arith.constant 8 : index
    %c0_56 = arith.constant 0 : index
    %90 = memref.load %arg4[%c8_55, %c0_56] : memref<27x4xf32, #tpu.memory_space<smem>>
    %91 = vector.broadcast %90 : f32 to vector<16x32xf32>
    %92 = arith.mulf %91, %19 : vector<16x32xf32>
    %93 = arith.addf %89, %92 : vector<16x32xf32>
    %c9 = arith.constant 9 : index
    %c0_57 = arith.constant 0 : index
    %94 = memref.load %arg4[%c9, %c0_57] : memref<27x4xf32, #tpu.memory_space<smem>>
    %95 = vector.broadcast %94 : f32 to vector<16x32xf32>
    %96 = arith.mulf %95, %23 : vector<16x32xf32>
    %97 = arith.addf %93, %96 : vector<16x32xf32>
    %c10 = arith.constant 10 : index
    %c0_58 = arith.constant 0 : index
    %98 = memref.load %arg4[%c10, %c0_58] : memref<27x4xf32, #tpu.memory_space<smem>>
    %99 = vector.broadcast %98 : f32 to vector<16x32xf32>
    %100 = arith.mulf %99, %24 : vector<16x32xf32>
    %101 = arith.addf %97, %100 : vector<16x32xf32>
    %c11 = arith.constant 11 : index
    %c0_59 = arith.constant 0 : index
    %102 = memref.load %arg4[%c11, %c0_59] : memref<27x4xf32, #tpu.memory_space<smem>>
    %103 = vector.broadcast %102 : f32 to vector<16x32xf32>
    %104 = arith.mulf %103, %25 : vector<16x32xf32>
    %105 = arith.addf %101, %104 : vector<16x32xf32>
    %c12 = arith.constant 12 : index
    %c0_60 = arith.constant 0 : index
    %106 = memref.load %arg4[%c12, %c0_60] : memref<27x4xf32, #tpu.memory_space<smem>>
    %107 = vector.broadcast %106 : f32 to vector<16x32xf32>
    %108 = arith.mulf %107, %29 : vector<16x32xf32>
    %109 = arith.addf %105, %108 : vector<16x32xf32>
    %c13 = arith.constant 13 : index
    %c0_61 = arith.constant 0 : index
    %110 = memref.load %arg4[%c13, %c0_61] : memref<27x4xf32, #tpu.memory_space<smem>>
    %111 = vector.broadcast %110 : f32 to vector<16x32xf32>
    %112 = arith.mulf %111, %30 : vector<16x32xf32>
    %113 = arith.addf %109, %112 : vector<16x32xf32>
    %c14 = arith.constant 14 : index
    %c0_62 = arith.constant 0 : index
    %114 = memref.load %arg4[%c14, %c0_62] : memref<27x4xf32, #tpu.memory_space<smem>>
    %115 = vector.broadcast %114 : f32 to vector<16x32xf32>
    %116 = arith.mulf %115, %31 : vector<16x32xf32>
    %117 = arith.addf %113, %116 : vector<16x32xf32>
    %c15 = arith.constant 15 : index
    %c0_63 = arith.constant 0 : index
    %118 = memref.load %arg4[%c15, %c0_63] : memref<27x4xf32, #tpu.memory_space<smem>>
    %119 = vector.broadcast %118 : f32 to vector<16x32xf32>
    %120 = arith.mulf %119, %35 : vector<16x32xf32>
    %121 = arith.addf %117, %120 : vector<16x32xf32>
    %c16 = arith.constant 16 : index
    %c0_64 = arith.constant 0 : index
    %122 = memref.load %arg4[%c16, %c0_64] : memref<27x4xf32, #tpu.memory_space<smem>>
    %123 = vector.broadcast %122 : f32 to vector<16x32xf32>
    %124 = arith.mulf %123, %36 : vector<16x32xf32>
    %125 = arith.addf %121, %124 : vector<16x32xf32>
    %c17 = arith.constant 17 : index
    %c0_65 = arith.constant 0 : index
    %126 = memref.load %arg4[%c17, %c0_65] : memref<27x4xf32, #tpu.memory_space<smem>>
    %127 = vector.broadcast %126 : f32 to vector<16x32xf32>
    %128 = arith.mulf %127, %37 : vector<16x32xf32>
    %129 = arith.addf %125, %128 : vector<16x32xf32>
    %c18 = arith.constant 18 : index
    %c0_66 = arith.constant 0 : index
    %130 = memref.load %arg4[%c18, %c0_66] : memref<27x4xf32, #tpu.memory_space<smem>>
    %131 = vector.broadcast %130 : f32 to vector<16x32xf32>
    %132 = arith.mulf %131, %41 : vector<16x32xf32>
    %133 = arith.addf %129, %132 : vector<16x32xf32>
    %c19 = arith.constant 19 : index
    %c0_67 = arith.constant 0 : index
    %134 = memref.load %arg4[%c19, %c0_67] : memref<27x4xf32, #tpu.memory_space<smem>>
    %135 = vector.broadcast %134 : f32 to vector<16x32xf32>
    %136 = arith.mulf %135, %42 : vector<16x32xf32>
    %137 = arith.addf %133, %136 : vector<16x32xf32>
    %c20 = arith.constant 20 : index
    %c0_68 = arith.constant 0 : index
    %138 = memref.load %arg4[%c20, %c0_68] : memref<27x4xf32, #tpu.memory_space<smem>>
    %139 = vector.broadcast %138 : f32 to vector<16x32xf32>
    %140 = arith.mulf %139, %43 : vector<16x32xf32>
    %141 = arith.addf %137, %140 : vector<16x32xf32>
    %c21 = arith.constant 21 : index
    %c0_69 = arith.constant 0 : index
    %142 = memref.load %arg4[%c21, %c0_69] : memref<27x4xf32, #tpu.memory_space<smem>>
    %143 = vector.broadcast %142 : f32 to vector<16x32xf32>
    %144 = arith.mulf %143, %47 : vector<16x32xf32>
    %145 = arith.addf %141, %144 : vector<16x32xf32>
    %c22 = arith.constant 22 : index
    %c0_70 = arith.constant 0 : index
    %146 = memref.load %arg4[%c22, %c0_70] : memref<27x4xf32, #tpu.memory_space<smem>>
    %147 = vector.broadcast %146 : f32 to vector<16x32xf32>
    %148 = arith.mulf %147, %48 : vector<16x32xf32>
    %149 = arith.addf %145, %148 : vector<16x32xf32>
    %c23 = arith.constant 23 : index
    %c0_71 = arith.constant 0 : index
    %150 = memref.load %arg4[%c23, %c0_71] : memref<27x4xf32, #tpu.memory_space<smem>>
    %151 = vector.broadcast %150 : f32 to vector<16x32xf32>
    %152 = arith.mulf %151, %49 : vector<16x32xf32>
    %153 = arith.addf %149, %152 : vector<16x32xf32>
    %c24 = arith.constant 24 : index
    %c0_72 = arith.constant 0 : index
    %154 = memref.load %arg4[%c24, %c0_72] : memref<27x4xf32, #tpu.memory_space<smem>>
    %155 = vector.broadcast %154 : f32 to vector<16x32xf32>
    %156 = arith.mulf %155, %53 : vector<16x32xf32>
    %157 = arith.addf %153, %156 : vector<16x32xf32>
    %c25 = arith.constant 25 : index
    %c0_73 = arith.constant 0 : index
    %158 = memref.load %arg4[%c25, %c0_73] : memref<27x4xf32, #tpu.memory_space<smem>>
    %159 = vector.broadcast %158 : f32 to vector<16x32xf32>
    %160 = arith.mulf %159, %54 : vector<16x32xf32>
    %161 = arith.addf %157, %160 : vector<16x32xf32>
    %c26 = arith.constant 26 : index
    %c0_74 = arith.constant 0 : index
    %162 = memref.load %arg4[%c26, %c0_74] : memref<27x4xf32, #tpu.memory_space<smem>>
    %163 = vector.broadcast %162 : f32 to vector<16x32xf32>
    %164 = arith.mulf %163, %55 : vector<16x32xf32>
    %165 = arith.addf %161, %164 : vector<16x32xf32>
    %c0_75 = arith.constant 0 : index
    %c0_76 = arith.constant 0 : index
    %c0_77 = arith.constant 0 : index
    %c0_78 = arith.constant 0 : index
    %166 = vector.load %arg6[%c0_75, %c0_76, %c0_77, %c0_78] : memref<1x4x16x32xf32, #tpu.memory_space<vmem>>, vector<1x1x16x32xf32>
    %167 = vector.shape_cast %166 : vector<1x1x16x32xf32> to vector<16x32xf32>
    %168 = vector.shape_cast %165 : vector<16x32xf32> to vector<1x1x16x32xf32>
    tpu.vector_store %arg6[%c0_75, %c0_76, %c0_77, %c0_78], %168 {strides = array<i32>} : memref<1x4x16x32xf32, #tpu.memory_space<vmem>>, vector<1x1x16x32xf32>,
    %c1_79 = arith.constant 1 : index
    %169 = memref.load %arg5[%c1_79] : memref<4xf32, #tpu.memory_space<smem>>
    %170 = vector.broadcast %169 : f32 to vector<16x32xf32>
    %c0_80 = arith.constant 0 : index
    %c1_81 = arith.constant 1 : index
    %171 = memref.load %arg4[%c0_80, %c1_81] : memref<27x4xf32, #tpu.memory_space<smem>>
    %172 = vector.broadcast %171 : f32 to vector<16x32xf32>
    %173 = arith.mulf %172, %5 : vector<16x32xf32>
    %174 = arith.addf %170, %173 : vector<16x32xf32>
    %c1_82 = arith.constant 1 : index
    %c1_83 = arith.constant 1 : index
    %175 = memref.load %arg4[%c1_82, %c1_83] : memref<27x4xf32, #tpu.memory_space<smem>>
    %176 = vector.broadcast %175 : f32 to vector<16x32xf32>
    %177 = arith.mulf %176, %6 : vector<16x32xf32>
    %178 = arith.addf %174, %177 : vector<16x32xf32>
    %c2_84 = arith.constant 2 : index
    %c1_85 = arith.constant 1 : index
    %179 = memref.load %arg4[%c2_84, %c1_85] : memref<27x4xf32, #tpu.memory_space<smem>>
    %180 = vector.broadcast %179 : f32 to vector<16x32xf32>
    %181 = arith.mulf %180, %7 : vector<16x32xf32>
    %182 = arith.addf %178, %181 : vector<16x32xf32>
    %c3_86 = arith.constant 3 : index
    %c1_87 = arith.constant 1 : index
    %183 = memref.load %arg4[%c3_86, %c1_87] : memref<27x4xf32, #tpu.memory_space<smem>>
    %184 = vector.broadcast %183 : f32 to vector<16x32xf32>
    %185 = arith.mulf %184, %11 : vector<16x32xf32>
    %186 = arith.addf %182, %185 : vector<16x32xf32>
    %c4_88 = arith.constant 4 : index
    %c1_89 = arith.constant 1 : index
    %187 = memref.load %arg4[%c4_88, %c1_89] : memref<27x4xf32, #tpu.memory_space<smem>>
    %188 = vector.broadcast %187 : f32 to vector<16x32xf32>
    %189 = arith.mulf %188, %12 : vector<16x32xf32>
    %190 = arith.addf %186, %189 : vector<16x32xf32>
    %c5_90 = arith.constant 5 : index
    %c1_91 = arith.constant 1 : index
    %191 = memref.load %arg4[%c5_90, %c1_91] : memref<27x4xf32, #tpu.memory_space<smem>>
    %192 = vector.broadcast %191 : f32 to vector<16x32xf32>
    %193 = arith.mulf %192, %13 : vector<16x32xf32>
    %194 = arith.addf %190, %193 : vector<16x32xf32>
    %c6_92 = arith.constant 6 : index
    %c1_93 = arith.constant 1 : index
    %195 = memref.load %arg4[%c6_92, %c1_93] : memref<27x4xf32, #tpu.memory_space<smem>>
    %196 = vector.broadcast %195 : f32 to vector<16x32xf32>
    %197 = arith.mulf %196, %17 : vector<16x32xf32>
    %198 = arith.addf %194, %197 : vector<16x32xf32>
    %c7_94 = arith.constant 7 : index
    %c1_95 = arith.constant 1 : index
    %199 = memref.load %arg4[%c7_94, %c1_95] : memref<27x4xf32, #tpu.memory_space<smem>>
    %200 = vector.broadcast %199 : f32 to vector<16x32xf32>
    %201 = arith.mulf %200, %18 : vector<16x32xf32>
    %202 = arith.addf %198, %201 : vector<16x32xf32>
    %c8_96 = arith.constant 8 : index
    %c1_97 = arith.constant 1 : index
    %203 = memref.load %arg4[%c8_96, %c1_97] : memref<27x4xf32, #tpu.memory_space<smem>>
    %204 = vector.broadcast %203 : f32 to vector<16x32xf32>
    %205 = arith.mulf %204, %19 : vector<16x32xf32>
    %206 = arith.addf %202, %205 : vector<16x32xf32>
    %c9_98 = arith.constant 9 : index
    %c1_99 = arith.constant 1 : index
    %207 = memref.load %arg4[%c9_98, %c1_99] : memref<27x4xf32, #tpu.memory_space<smem>>
    %208 = vector.broadcast %207 : f32 to vector<16x32xf32>
    %209 = arith.mulf %208, %23 : vector<16x32xf32>
    %210 = arith.addf %206, %209 : vector<16x32xf32>
    %c10_100 = arith.constant 10 : index
    %c1_101 = arith.constant 1 : index
    %211 = memref.load %arg4[%c10_100, %c1_101] : memref<27x4xf32, #tpu.memory_space<smem>>
    %212 = vector.broadcast %211 : f32 to vector<16x32xf32>
    %213 = arith.mulf %212, %24 : vector<16x32xf32>
    %214 = arith.addf %210, %213 : vector<16x32xf32>
    %c11_102 = arith.constant 11 : index
    %c1_103 = arith.constant 1 : index
    %215 = memref.load %arg4[%c11_102, %c1_103] : memref<27x4xf32, #tpu.memory_space<smem>>
    %216 = vector.broadcast %215 : f32 to vector<16x32xf32>
    %217 = arith.mulf %216, %25 : vector<16x32xf32>
    %218 = arith.addf %214, %217 : vector<16x32xf32>
    %c12_104 = arith.constant 12 : index
    %c1_105 = arith.constant 1 : index
    %219 = memref.load %arg4[%c12_104, %c1_105] : memref<27x4xf32, #tpu.memory_space<smem>>
    %220 = vector.broadcast %219 : f32 to vector<16x32xf32>
    %221 = arith.mulf %220, %29 : vector<16x32xf32>
    %222 = arith.addf %218, %221 : vector<16x32xf32>
    %c13_106 = arith.constant 13 : index
    %c1_107 = arith.constant 1 : index
    %223 = memref.load %arg4[%c13_106, %c1_107] : memref<27x4xf32, #tpu.memory_space<smem>>
    %224 = vector.broadcast %223 : f32 to vector<16x32xf32>
    %225 = arith.mulf %224, %30 : vector<16x32xf32>
    %226 = arith.addf %222, %225 : vector<16x32xf32>
    %c14_108 = arith.constant 14 : index
    %c1_109 = arith.constant 1 : index
    %227 = memref.load %arg4[%c14_108, %c1_109] : memref<27x4xf32, #tpu.memory_space<smem>>
    %228 = vector.broadcast %227 : f32 to vector<16x32xf32>
    %229 = arith.mulf %228, %31 : vector<16x32xf32>
    %230 = arith.addf %226, %229 : vector<16x32xf32>
    %c15_110 = arith.constant 15 : index
    %c1_111 = arith.constant 1 : index
    %231 = memref.load %arg4[%c15_110, %c1_111] : memref<27x4xf32, #tpu.memory_space<smem>>
    %232 = vector.broadcast %231 : f32 to vector<16x32xf32>
    %233 = arith.mulf %232, %35 : vector<16x32xf32>
    %234 = arith.addf %230, %233 : vector<16x32xf32>
    %c16_112 = arith.constant 16 : index
    %c1_113 = arith.constant 1 : index
    %235 = memref.load %arg4[%c16_112, %c1_113] : memref<27x4xf32, #tpu.memory_space<smem>>
    %236 = vector.broadcast %235 : f32 to vector<16x32xf32>
    %237 = arith.mulf %236, %36 : vector<16x32xf32>
    %238 = arith.addf %234, %237 : vector<16x32xf32>
    %c17_114 = arith.constant 17 : index
    %c1_115 = arith.constant 1 : index
    %239 = memref.load %arg4[%c17_114, %c1_115] : memref<27x4xf32, #tpu.memory_space<smem>>
    %240 = vector.broadcast %239 : f32 to vector<16x32xf32>
    %241 = arith.mulf %240, %37 : vector<16x32xf32>
    %242 = arith.addf %238, %241 : vector<16x32xf32>
    %c18_116 = arith.constant 18 : index
    %c1_117 = arith.constant 1 : index
    %243 = memref.load %arg4[%c18_116, %c1_117] : memref<27x4xf32, #tpu.memory_space<smem>>
    %244 = vector.broadcast %243 : f32 to vector<16x32xf32>
    %245 = arith.mulf %244, %41 : vector<16x32xf32>
    %246 = arith.addf %242, %245 : vector<16x32xf32>
    %c19_118 = arith.constant 19 : index
    %c1_119 = arith.constant 1 : index
    %247 = memref.load %arg4[%c19_118, %c1_119] : memref<27x4xf32, #tpu.memory_space<smem>>
    %248 = vector.broadcast %247 : f32 to vector<16x32xf32>
    %249 = arith.mulf %248, %42 : vector<16x32xf32>
    %250 = arith.addf %246, %249 : vector<16x32xf32>
    %c20_120 = arith.constant 20 : index
    %c1_121 = arith.constant 1 : index
    %251 = memref.load %arg4[%c20_120, %c1_121] : memref<27x4xf32, #tpu.memory_space<smem>>
    %252 = vector.broadcast %251 : f32 to vector<16x32xf32>
    %253 = arith.mulf %252, %43 : vector<16x32xf32>
    %254 = arith.addf %250, %253 : vector<16x32xf32>
    %c21_122 = arith.constant 21 : index
    %c1_123 = arith.constant 1 : index
    %255 = memref.load %arg4[%c21_122, %c1_123] : memref<27x4xf32, #tpu.memory_space<smem>>
    %256 = vector.broadcast %255 : f32 to vector<16x32xf32>
    %257 = arith.mulf %256, %47 : vector<16x32xf32>
    %258 = arith.addf %254, %257 : vector<16x32xf32>
    %c22_124 = arith.constant 22 : index
    %c1_125 = arith.constant 1 : index
    %259 = memref.load %arg4[%c22_124, %c1_125] : memref<27x4xf32, #tpu.memory_space<smem>>
    %260 = vector.broadcast %259 : f32 to vector<16x32xf32>
    %261 = arith.mulf %260, %48 : vector<16x32xf32>
    %262 = arith.addf %258, %261 : vector<16x32xf32>
    %c23_126 = arith.constant 23 : index
    %c1_127 = arith.constant 1 : index
    %263 = memref.load %arg4[%c23_126, %c1_127] : memref<27x4xf32, #tpu.memory_space<smem>>
    %264 = vector.broadcast %263 : f32 to vector<16x32xf32>
    %265 = arith.mulf %264, %49 : vector<16x32xf32>
    %266 = arith.addf %262, %265 : vector<16x32xf32>
    %c24_128 = arith.constant 24 : index
    %c1_129 = arith.constant 1 : index
    %267 = memref.load %arg4[%c24_128, %c1_129] : memref<27x4xf32, #tpu.memory_space<smem>>
    %268 = vector.broadcast %267 : f32 to vector<16x32xf32>
    %269 = arith.mulf %268, %53 : vector<16x32xf32>
    %270 = arith.addf %266, %269 : vector<16x32xf32>
    %c25_130 = arith.constant 25 : index
    %c1_131 = arith.constant 1 : index
    %271 = memref.load %arg4[%c25_130, %c1_131] : memref<27x4xf32, #tpu.memory_space<smem>>
    %272 = vector.broadcast %271 : f32 to vector<16x32xf32>
    %273 = arith.mulf %272, %54 : vector<16x32xf32>
    %274 = arith.addf %270, %273 : vector<16x32xf32>
    %c26_132 = arith.constant 26 : index
    %c1_133 = arith.constant 1 : index
    %275 = memref.load %arg4[%c26_132, %c1_133] : memref<27x4xf32, #tpu.memory_space<smem>>
    %276 = vector.broadcast %275 : f32 to vector<16x32xf32>
    %277 = arith.mulf %276, %55 : vector<16x32xf32>
    %278 = arith.addf %274, %277 : vector<16x32xf32>
    %c0_134 = arith.constant 0 : index
    %c1_135 = arith.constant 1 : index
    %c0_136 = arith.constant 0 : index
    %c0_137 = arith.constant 0 : index
    %279 = vector.load %arg6[%c0_134, %c1_135, %c0_136, %c0_137] : memref<1x4x16x32xf32, #tpu.memory_space<vmem>>, vector<1x1x16x32xf32>
    %280 = vector.shape_cast %279 : vector<1x1x16x32xf32> to vector<16x32xf32>
    %281 = vector.shape_cast %278 : vector<16x32xf32> to vector<1x1x16x32xf32>
    tpu.vector_store %arg6[%c0_134, %c1_135, %c0_136, %c0_137], %281 {strides = array<i32>} : memref<1x4x16x32xf32, #tpu.memory_space<vmem>>, vector<1x1x16x32xf32>,
    %c2_138 = arith.constant 2 : index
    %282 = memref.load %arg5[%c2_138] : memref<4xf32, #tpu.memory_space<smem>>
    %283 = vector.broadcast %282 : f32 to vector<16x32xf32>
    %c0_139 = arith.constant 0 : index
    %c2_140 = arith.constant 2 : index
    %284 = memref.load %arg4[%c0_139, %c2_140] : memref<27x4xf32, #tpu.memory_space<smem>>
    %285 = vector.broadcast %284 : f32 to vector<16x32xf32>
    %286 = arith.mulf %285, %5 : vector<16x32xf32>
    %287 = arith.addf %283, %286 : vector<16x32xf32>
    %c1_141 = arith.constant 1 : index
    %c2_142 = arith.constant 2 : index
    %288 = memref.load %arg4[%c1_141, %c2_142] : memref<27x4xf32, #tpu.memory_space<smem>>
    %289 = vector.broadcast %288 : f32 to vector<16x32xf32>
    %290 = arith.mulf %289, %6 : vector<16x32xf32>
    %291 = arith.addf %287, %290 : vector<16x32xf32>
    %c2_143 = arith.constant 2 : index
    %c2_144 = arith.constant 2 : index
    %292 = memref.load %arg4[%c2_143, %c2_144] : memref<27x4xf32, #tpu.memory_space<smem>>
    %293 = vector.broadcast %292 : f32 to vector<16x32xf32>
    %294 = arith.mulf %293, %7 : vector<16x32xf32>
    %295 = arith.addf %291, %294 : vector<16x32xf32>
    %c3_145 = arith.constant 3 : index
    %c2_146 = arith.constant 2 : index
    %296 = memref.load %arg4[%c3_145, %c2_146] : memref<27x4xf32, #tpu.memory_space<smem>>
    %297 = vector.broadcast %296 : f32 to vector<16x32xf32>
    %298 = arith.mulf %297, %11 : vector<16x32xf32>
    %299 = arith.addf %295, %298 : vector<16x32xf32>
    %c4_147 = arith.constant 4 : index
    %c2_148 = arith.constant 2 : index
    %300 = memref.load %arg4[%c4_147, %c2_148] : memref<27x4xf32, #tpu.memory_space<smem>>
    %301 = vector.broadcast %300 : f32 to vector<16x32xf32>
    %302 = arith.mulf %301, %12 : vector<16x32xf32>
    %303 = arith.addf %299, %302 : vector<16x32xf32>
    %c5_149 = arith.constant 5 : index
    %c2_150 = arith.constant 2 : index
    %304 = memref.load %arg4[%c5_149, %c2_150] : memref<27x4xf32, #tpu.memory_space<smem>>
    %305 = vector.broadcast %304 : f32 to vector<16x32xf32>
    %306 = arith.mulf %305, %13 : vector<16x32xf32>
    %307 = arith.addf %303, %306 : vector<16x32xf32>
    %c6_151 = arith.constant 6 : index
    %c2_152 = arith.constant 2 : index
    %308 = memref.load %arg4[%c6_151, %c2_152] : memref<27x4xf32, #tpu.memory_space<smem>>
    %309 = vector.broadcast %308 : f32 to vector<16x32xf32>
    %310 = arith.mulf %309, %17 : vector<16x32xf32>
    %311 = arith.addf %307, %310 : vector<16x32xf32>
    %c7_153 = arith.constant 7 : index
    %c2_154 = arith.constant 2 : index
    %312 = memref.load %arg4[%c7_153, %c2_154] : memref<27x4xf32, #tpu.memory_space<smem>>
    %313 = vector.broadcast %312 : f32 to vector<16x32xf32>
    %314 = arith.mulf %313, %18 : vector<16x32xf32>
    %315 = arith.addf %311, %314 : vector<16x32xf32>
    %c8_155 = arith.constant 8 : index
    %c2_156 = arith.constant 2 : index
    %316 = memref.load %arg4[%c8_155, %c2_156] : memref<27x4xf32, #tpu.memory_space<smem>>
    %317 = vector.broadcast %316 : f32 to vector<16x32xf32>
    %318 = arith.mulf %317, %19 : vector<16x32xf32>
    %319 = arith.addf %315, %318 : vector<16x32xf32>
    %c9_157 = arith.constant 9 : index
    %c2_158 = arith.constant 2 : index
    %320 = memref.load %arg4[%c9_157, %c2_158] : memref<27x4xf32, #tpu.memory_space<smem>>
    %321 = vector.broadcast %320 : f32 to vector<16x32xf32>
    %322 = arith.mulf %321, %23 : vector<16x32xf32>
    %323 = arith.addf %319, %322 : vector<16x32xf32>
    %c10_159 = arith.constant 10 : index
    %c2_160 = arith.constant 2 : index
    %324 = memref.load %arg4[%c10_159, %c2_160] : memref<27x4xf32, #tpu.memory_space<smem>>
    %325 = vector.broadcast %324 : f32 to vector<16x32xf32>
    %326 = arith.mulf %325, %24 : vector<16x32xf32>
    %327 = arith.addf %323, %326 : vector<16x32xf32>
    %c11_161 = arith.constant 11 : index
    %c2_162 = arith.constant 2 : index
    %328 = memref.load %arg4[%c11_161, %c2_162] : memref<27x4xf32, #tpu.memory_space<smem>>
    %329 = vector.broadcast %328 : f32 to vector<16x32xf32>
    %330 = arith.mulf %329, %25 : vector<16x32xf32>
    %331 = arith.addf %327, %330 : vector<16x32xf32>
    %c12_163 = arith.constant 12 : index
    %c2_164 = arith.constant 2 : index
    %332 = memref.load %arg4[%c12_163, %c2_164] : memref<27x4xf32, #tpu.memory_space<smem>>
    %333 = vector.broadcast %332 : f32 to vector<16x32xf32>
    %334 = arith.mulf %333, %29 : vector<16x32xf32>
    %335 = arith.addf %331, %334 : vector<16x32xf32>
    %c13_165 = arith.constant 13 : index
    %c2_166 = arith.constant 2 : index
    %336 = memref.load %arg4[%c13_165, %c2_166] : memref<27x4xf32, #tpu.memory_space<smem>>
    %337 = vector.broadcast %336 : f32 to vector<16x32xf32>
    %338 = arith.mulf %337, %30 : vector<16x32xf32>
    %339 = arith.addf %335, %338 : vector<16x32xf32>
    %c14_167 = arith.constant 14 : index
    %c2_168 = arith.constant 2 : index
    %340 = memref.load %arg4[%c14_167, %c2_168] : memref<27x4xf32, #tpu.memory_space<smem>>
    %341 = vector.broadcast %340 : f32 to vector<16x32xf32>
    %342 = arith.mulf %341, %31 : vector<16x32xf32>
    %343 = arith.addf %339, %342 : vector<16x32xf32>
    %c15_169 = arith.constant 15 : index
    %c2_170 = arith.constant 2 : index
    %344 = memref.load %arg4[%c15_169, %c2_170] : memref<27x4xf32, #tpu.memory_space<smem>>
    %345 = vector.broadcast %344 : f32 to vector<16x32xf32>
    %346 = arith.mulf %345, %35 : vector<16x32xf32>
    %347 = arith.addf %343, %346 : vector<16x32xf32>
    %c16_171 = arith.constant 16 : index
    %c2_172 = arith.constant 2 : index
    %348 = memref.load %arg4[%c16_171, %c2_172] : memref<27x4xf32, #tpu.memory_space<smem>>
    %349 = vector.broadcast %348 : f32 to vector<16x32xf32>
    %350 = arith.mulf %349, %36 : vector<16x32xf32>
    %351 = arith.addf %347, %350 : vector<16x32xf32>
    %c17_173 = arith.constant 17 : index
    %c2_174 = arith.constant 2 : index
    %352 = memref.load %arg4[%c17_173, %c2_174] : memref<27x4xf32, #tpu.memory_space<smem>>
    %353 = vector.broadcast %352 : f32 to vector<16x32xf32>
    %354 = arith.mulf %353, %37 : vector<16x32xf32>
    %355 = arith.addf %351, %354 : vector<16x32xf32>
    %c18_175 = arith.constant 18 : index
    %c2_176 = arith.constant 2 : index
    %356 = memref.load %arg4[%c18_175, %c2_176] : memref<27x4xf32, #tpu.memory_space<smem>>
    %357 = vector.broadcast %356 : f32 to vector<16x32xf32>
    %358 = arith.mulf %357, %41 : vector<16x32xf32>
    %359 = arith.addf %355, %358 : vector<16x32xf32>
    %c19_177 = arith.constant 19 : index
    %c2_178 = arith.constant 2 : index
    %360 = memref.load %arg4[%c19_177, %c2_178] : memref<27x4xf32, #tpu.memory_space<smem>>
    %361 = vector.broadcast %360 : f32 to vector<16x32xf32>
    %362 = arith.mulf %361, %42 : vector<16x32xf32>
    %363 = arith.addf %359, %362 : vector<16x32xf32>
    %c20_179 = arith.constant 20 : index
    %c2_180 = arith.constant 2 : index
    %364 = memref.load %arg4[%c20_179, %c2_180] : memref<27x4xf32, #tpu.memory_space<smem>>
    %365 = vector.broadcast %364 : f32 to vector<16x32xf32>
    %366 = arith.mulf %365, %43 : vector<16x32xf32>
    %367 = arith.addf %363, %366 : vector<16x32xf32>
    %c21_181 = arith.constant 21 : index
    %c2_182 = arith.constant 2 : index
    %368 = memref.load %arg4[%c21_181, %c2_182] : memref<27x4xf32, #tpu.memory_space<smem>>
    %369 = vector.broadcast %368 : f32 to vector<16x32xf32>
    %370 = arith.mulf %369, %47 : vector<16x32xf32>
    %371 = arith.addf %367, %370 : vector<16x32xf32>
    %c22_183 = arith.constant 22 : index
    %c2_184 = arith.constant 2 : index
    %372 = memref.load %arg4[%c22_183, %c2_184] : memref<27x4xf32, #tpu.memory_space<smem>>
    %373 = vector.broadcast %372 : f32 to vector<16x32xf32>
    %374 = arith.mulf %373, %48 : vector<16x32xf32>
    %375 = arith.addf %371, %374 : vector<16x32xf32>
    %c23_185 = arith.constant 23 : index
    %c2_186 = arith.constant 2 : index
    %376 = memref.load %arg4[%c23_185, %c2_186] : memref<27x4xf32, #tpu.memory_space<smem>>
    %377 = vector.broadcast %376 : f32 to vector<16x32xf32>
    %378 = arith.mulf %377, %49 : vector<16x32xf32>
    %379 = arith.addf %375, %378 : vector<16x32xf32>
    %c24_187 = arith.constant 24 : index
    %c2_188 = arith.constant 2 : index
    %380 = memref.load %arg4[%c24_187, %c2_188] : memref<27x4xf32, #tpu.memory_space<smem>>
    %381 = vector.broadcast %380 : f32 to vector<16x32xf32>
    %382 = arith.mulf %381, %53 : vector<16x32xf32>
    %383 = arith.addf %379, %382 : vector<16x32xf32>
    %c25_189 = arith.constant 25 : index
    %c2_190 = arith.constant 2 : index
    %384 = memref.load %arg4[%c25_189, %c2_190] : memref<27x4xf32, #tpu.memory_space<smem>>
    %385 = vector.broadcast %384 : f32 to vector<16x32xf32>
    %386 = arith.mulf %385, %54 : vector<16x32xf32>
    %387 = arith.addf %383, %386 : vector<16x32xf32>
    %c26_191 = arith.constant 26 : index
    %c2_192 = arith.constant 2 : index
    %388 = memref.load %arg4[%c26_191, %c2_192] : memref<27x4xf32, #tpu.memory_space<smem>>
    %389 = vector.broadcast %388 : f32 to vector<16x32xf32>
    %390 = arith.mulf %389, %55 : vector<16x32xf32>
    %391 = arith.addf %387, %390 : vector<16x32xf32>
    %c0_193 = arith.constant 0 : index
    %c2_194 = arith.constant 2 : index
    %c0_195 = arith.constant 0 : index
    %c0_196 = arith.constant 0 : index
    %392 = vector.load %arg6[%c0_193, %c2_194, %c0_195, %c0_196] : memref<1x4x16x32xf32, #tpu.memory_space<vmem>>, vector<1x1x16x32xf32>
    %393 = vector.shape_cast %392 : vector<1x1x16x32xf32> to vector<16x32xf32>
    %394 = vector.shape_cast %391 : vector<16x32xf32> to vector<1x1x16x32xf32>
    tpu.vector_store %arg6[%c0_193, %c2_194, %c0_195, %c0_196], %394 {strides = array<i32>} : memref<1x4x16x32xf32, #tpu.memory_space<vmem>>, vector<1x1x16x32xf32>,
    %c3_197 = arith.constant 3 : index
    %395 = memref.load %arg5[%c3_197] : memref<4xf32, #tpu.memory_space<smem>>
    %396 = vector.broadcast %395 : f32 to vector<16x32xf32>
    %c0_198 = arith.constant 0 : index
    %c3_199 = arith.constant 3 : index
    %397 = memref.load %arg4[%c0_198, %c3_199] : memref<27x4xf32, #tpu.memory_space<smem>>
    %398 = vector.broadcast %397 : f32 to vector<16x32xf32>
    %399 = arith.mulf %398, %5 : vector<16x32xf32>
    %400 = arith.addf %396, %399 : vector<16x32xf32>
    %c1_200 = arith.constant 1 : index
    %c3_201 = arith.constant 3 : index
    %401 = memref.load %arg4[%c1_200, %c3_201] : memref<27x4xf32, #tpu.memory_space<smem>>
    %402 = vector.broadcast %401 : f32 to vector<16x32xf32>
    %403 = arith.mulf %402, %6 : vector<16x32xf32>
    %404 = arith.addf %400, %403 : vector<16x32xf32>
    %c2_202 = arith.constant 2 : index
    %c3_203 = arith.constant 3 : index
    %405 = memref.load %arg4[%c2_202, %c3_203] : memref<27x4xf32, #tpu.memory_space<smem>>
    %406 = vector.broadcast %405 : f32 to vector<16x32xf32>
    %407 = arith.mulf %406, %7 : vector<16x32xf32>
    %408 = arith.addf %404, %407 : vector<16x32xf32>
    %c3_204 = arith.constant 3 : index
    %c3_205 = arith.constant 3 : index
    %409 = memref.load %arg4[%c3_204, %c3_205] : memref<27x4xf32, #tpu.memory_space<smem>>
    %410 = vector.broadcast %409 : f32 to vector<16x32xf32>
    %411 = arith.mulf %410, %11 : vector<16x32xf32>
    %412 = arith.addf %408, %411 : vector<16x32xf32>
    %c4_206 = arith.constant 4 : index
    %c3_207 = arith.constant 3 : index
    %413 = memref.load %arg4[%c4_206, %c3_207] : memref<27x4xf32, #tpu.memory_space<smem>>
    %414 = vector.broadcast %413 : f32 to vector<16x32xf32>
    %415 = arith.mulf %414, %12 : vector<16x32xf32>
    %416 = arith.addf %412, %415 : vector<16x32xf32>
    %c5_208 = arith.constant 5 : index
    %c3_209 = arith.constant 3 : index
    %417 = memref.load %arg4[%c5_208, %c3_209] : memref<27x4xf32, #tpu.memory_space<smem>>
    %418 = vector.broadcast %417 : f32 to vector<16x32xf32>
    %419 = arith.mulf %418, %13 : vector<16x32xf32>
    %420 = arith.addf %416, %419 : vector<16x32xf32>
    %c6_210 = arith.constant 6 : index
    %c3_211 = arith.constant 3 : index
    %421 = memref.load %arg4[%c6_210, %c3_211] : memref<27x4xf32, #tpu.memory_space<smem>>
    %422 = vector.broadcast %421 : f32 to vector<16x32xf32>
    %423 = arith.mulf %422, %17 : vector<16x32xf32>
    %424 = arith.addf %420, %423 : vector<16x32xf32>
    %c7_212 = arith.constant 7 : index
    %c3_213 = arith.constant 3 : index
    %425 = memref.load %arg4[%c7_212, %c3_213] : memref<27x4xf32, #tpu.memory_space<smem>>
    %426 = vector.broadcast %425 : f32 to vector<16x32xf32>
    %427 = arith.mulf %426, %18 : vector<16x32xf32>
    %428 = arith.addf %424, %427 : vector<16x32xf32>
    %c8_214 = arith.constant 8 : index
    %c3_215 = arith.constant 3 : index
    %429 = memref.load %arg4[%c8_214, %c3_215] : memref<27x4xf32, #tpu.memory_space<smem>>
    %430 = vector.broadcast %429 : f32 to vector<16x32xf32>
    %431 = arith.mulf %430, %19 : vector<16x32xf32>
    %432 = arith.addf %428, %431 : vector<16x32xf32>
    %c9_216 = arith.constant 9 : index
    %c3_217 = arith.constant 3 : index
    %433 = memref.load %arg4[%c9_216, %c3_217] : memref<27x4xf32, #tpu.memory_space<smem>>
    %434 = vector.broadcast %433 : f32 to vector<16x32xf32>
    %435 = arith.mulf %434, %23 : vector<16x32xf32>
    %436 = arith.addf %432, %435 : vector<16x32xf32>
    %c10_218 = arith.constant 10 : index
    %c3_219 = arith.constant 3 : index
    %437 = memref.load %arg4[%c10_218, %c3_219] : memref<27x4xf32, #tpu.memory_space<smem>>
    %438 = vector.broadcast %437 : f32 to vector<16x32xf32>
    %439 = arith.mulf %438, %24 : vector<16x32xf32>
    %440 = arith.addf %436, %439 : vector<16x32xf32>
    %c11_220 = arith.constant 11 : index
    %c3_221 = arith.constant 3 : index
    %441 = memref.load %arg4[%c11_220, %c3_221] : memref<27x4xf32, #tpu.memory_space<smem>>
    %442 = vector.broadcast %441 : f32 to vector<16x32xf32>
    %443 = arith.mulf %442, %25 : vector<16x32xf32>
    %444 = arith.addf %440, %443 : vector<16x32xf32>
    %c12_222 = arith.constant 12 : index
    %c3_223 = arith.constant 3 : index
    %445 = memref.load %arg4[%c12_222, %c3_223] : memref<27x4xf32, #tpu.memory_space<smem>>
    %446 = vector.broadcast %445 : f32 to vector<16x32xf32>
    %447 = arith.mulf %446, %29 : vector<16x32xf32>
    %448 = arith.addf %444, %447 : vector<16x32xf32>
    %c13_224 = arith.constant 13 : index
    %c3_225 = arith.constant 3 : index
    %449 = memref.load %arg4[%c13_224, %c3_225] : memref<27x4xf32, #tpu.memory_space<smem>>
    %450 = vector.broadcast %449 : f32 to vector<16x32xf32>
    %451 = arith.mulf %450, %30 : vector<16x32xf32>
    %452 = arith.addf %448, %451 : vector<16x32xf32>
    %c14_226 = arith.constant 14 : index
    %c3_227 = arith.constant 3 : index
    %453 = memref.load %arg4[%c14_226, %c3_227] : memref<27x4xf32, #tpu.memory_space<smem>>
    %454 = vector.broadcast %453 : f32 to vector<16x32xf32>
    %455 = arith.mulf %454, %31 : vector<16x32xf32>
    %456 = arith.addf %452, %455 : vector<16x32xf32>
    %c15_228 = arith.constant 15 : index
    %c3_229 = arith.constant 3 : index
    %457 = memref.load %arg4[%c15_228, %c3_229] : memref<27x4xf32, #tpu.memory_space<smem>>
    %458 = vector.broadcast %457 : f32 to vector<16x32xf32>
    %459 = arith.mulf %458, %35 : vector<16x32xf32>
    %460 = arith.addf %456, %459 : vector<16x32xf32>
    %c16_230 = arith.constant 16 : index
    %c3_231 = arith.constant 3 : index
    %461 = memref.load %arg4[%c16_230, %c3_231] : memref<27x4xf32, #tpu.memory_space<smem>>
    %462 = vector.broadcast %461 : f32 to vector<16x32xf32>
    %463 = arith.mulf %462, %36 : vector<16x32xf32>
    %464 = arith.addf %460, %463 : vector<16x32xf32>
    %c17_232 = arith.constant 17 : index
    %c3_233 = arith.constant 3 : index
    %465 = memref.load %arg4[%c17_232, %c3_233] : memref<27x4xf32, #tpu.memory_space<smem>>
    %466 = vector.broadcast %465 : f32 to vector<16x32xf32>
    %467 = arith.mulf %466, %37 : vector<16x32xf32>
    %468 = arith.addf %464, %467 : vector<16x32xf32>
    %c18_234 = arith.constant 18 : index
    %c3_235 = arith.constant 3 : index
    %469 = memref.load %arg4[%c18_234, %c3_235] : memref<27x4xf32, #tpu.memory_space<smem>>
    %470 = vector.broadcast %469 : f32 to vector<16x32xf32>
    %471 = arith.mulf %470, %41 : vector<16x32xf32>
    %472 = arith.addf %468, %471 : vector<16x32xf32>
    %c19_236 = arith.constant 19 : index
    %c3_237 = arith.constant 3 : index
    %473 = memref.load %arg4[%c19_236, %c3_237] : memref<27x4xf32, #tpu.memory_space<smem>>
    %474 = vector.broadcast %473 : f32 to vector<16x32xf32>
    %475 = arith.mulf %474, %42 : vector<16x32xf32>
    %476 = arith.addf %472, %475 : vector<16x32xf32>
    %c20_238 = arith.constant 20 : index
    %c3_239 = arith.constant 3 : index
    %477 = memref.load %arg4[%c20_238, %c3_239] : memref<27x4xf32, #tpu.memory_space<smem>>
    %478 = vector.broadcast %477 : f32 to vector<16x32xf32>
    %479 = arith.mulf %478, %43 : vector<16x32xf32>
    %480 = arith.addf %476, %479 : vector<16x32xf32>
    %c21_240 = arith.constant 21 : index
    %c3_241 = arith.constant 3 : index
    %481 = memref.load %arg4[%c21_240, %c3_241] : memref<27x4xf32, #tpu.memory_space<smem>>
    %482 = vector.broadcast %481 : f32 to vector<16x32xf32>
    %483 = arith.mulf %482, %47 : vector<16x32xf32>
    %484 = arith.addf %480, %483 : vector<16x32xf32>
    %c22_242 = arith.constant 22 : index
    %c3_243 = arith.constant 3 : index
    %485 = memref.load %arg4[%c22_242, %c3_243] : memref<27x4xf32, #tpu.memory_space<smem>>
    %486 = vector.broadcast %485 : f32 to vector<16x32xf32>
    %487 = arith.mulf %486, %48 : vector<16x32xf32>
    %488 = arith.addf %484, %487 : vector<16x32xf32>
    %c23_244 = arith.constant 23 : index
    %c3_245 = arith.constant 3 : index
    %489 = memref.load %arg4[%c23_244, %c3_245] : memref<27x4xf32, #tpu.memory_space<smem>>
    %490 = vector.broadcast %489 : f32 to vector<16x32xf32>
    %491 = arith.mulf %490, %49 : vector<16x32xf32>
    %492 = arith.addf %488, %491 : vector<16x32xf32>
    %c24_246 = arith.constant 24 : index
    %c3_247 = arith.constant 3 : index
    %493 = memref.load %arg4[%c24_246, %c3_247] : memref<27x4xf32, #tpu.memory_space<smem>>
    %494 = vector.broadcast %493 : f32 to vector<16x32xf32>
    %495 = arith.mulf %494, %53 : vector<16x32xf32>
    %496 = arith.addf %492, %495 : vector<16x32xf32>
    %c25_248 = arith.constant 25 : index
    %c3_249 = arith.constant 3 : index
    %497 = memref.load %arg4[%c25_248, %c3_249] : memref<27x4xf32, #tpu.memory_space<smem>>
    %498 = vector.broadcast %497 : f32 to vector<16x32xf32>
    %499 = arith.mulf %498, %54 : vector<16x32xf32>
    %500 = arith.addf %496, %499 : vector<16x32xf32>
    %c26_250 = arith.constant 26 : index
    %c3_251 = arith.constant 3 : index
    %501 = memref.load %arg4[%c26_250, %c3_251] : memref<27x4xf32, #tpu.memory_space<smem>>
    %502 = vector.broadcast %501 : f32 to vector<16x32xf32>
    %503 = arith.mulf %502, %55 : vector<16x32xf32>
    %504 = arith.addf %500, %503 : vector<16x32xf32>
    %c0_252 = arith.constant 0 : index
    %c3_253 = arith.constant 3 : index
    %c0_254 = arith.constant 0 : index
    %c0_255 = arith.constant 0 : index
    %505 = vector.load %arg6[%c0_252, %c3_253, %c0_254, %c0_255] : memref<1x4x16x32xf32, #tpu.memory_space<vmem>>, vector<1x1x16x32xf32>
    %506 = vector.shape_cast %505 : vector<1x1x16x32xf32> to vector<16x32xf32>
    %507 = vector.shape_cast %504 : vector<16x32xf32> to vector<1x1x16x32xf32>
    tpu.vector_store %arg6[%c0_252, %c3_253, %c0_254, %c0_255], %507 {strides = array<i32>} : memref<1x4x16x32xf32, #tpu.memory_space<vmem>>, vector<1x1x16x32xf32>,
    %c0_256 = arith.constant 0 : index
    %c0_257 = arith.constant 0 : index
    %c0_258 = arith.constant 0 : index
    %c0_259 = arith.constant 0 : index
    %508 = vector.load %arg6[%c0_256, %c0_257, %c0_258, %c0_259] : memref<1x4x16x32xf32, #tpu.memory_space<vmem>>, vector<1x4x16x32xf32>
    %509 = vector.shape_cast %508 : vector<1x4x16x32xf32> to vector<4x16x32xf32>
    %cst_260 = arith.constant dense<0.000000e+00> : vector<4x16xf32>
    %510 = vector.multi_reduction <add>, %509, %cst_260 [2] : vector<4x16x32xf32> to vector<4x16xf32>
    %cst_261 = arith.constant dense<0.000000e+00> : vector<4xf32>
    %511 = vector.multi_reduction <add>, %510, %cst_261 [1] : vector<4x16xf32> to vector<4xf32>
    %512 = vector.shape_cast %511 : vector<4xf32> to vector<4x1xf32>
    %c0_262 = arith.constant 0 : index
    %c0_263 = arith.constant 0 : index
    %c0_264 = arith.constant 0 : index
    %c0_265 = arith.constant 0 : index
    %513 = vector.load %arg7[%c0_262, %c0_263, %c0_264, %c0_265] : memref<1x1x4x2xf32, #tpu.memory_space<vmem>>, vector<1x1x4x1xf32>
    %514 = vector.shape_cast %513 : vector<1x1x4x1xf32> to vector<4x1xf32>
    %515 = vector.shape_cast %512 : vector<4x1xf32> to vector<1x1x4x1xf32>
    tpu.vector_store %arg7[%c0_262, %c0_263, %c0_264, %c0_265], %515 {strides = array<i32>} : memref<1x1x4x2xf32, #tpu.memory_space<vmem>>, vector<1x1x4x1xf32>,
    %516 = arith.mulf %509, %509 : vector<4x16x32xf32>
    %cst_266 = arith.constant dense<0.000000e+00> : vector<4x16xf32>
    %517 = vector.multi_reduction <add>, %516, %cst_266 [2] : vector<4x16x32xf32> to vector<4x16xf32>
    %cst_267 = arith.constant dense<0.000000e+00> : vector<4xf32>
    %518 = vector.multi_reduction <add>, %517, %cst_267 [1] : vector<4x16xf32> to vector<4xf32>
    %519 = vector.shape_cast %518 : vector<4xf32> to vector<4x1xf32>
    %c0_268 = arith.constant 0 : index
    %c0_269 = arith.constant 0 : index
    %c0_270 = arith.constant 0 : index
    %c1_271 = arith.constant 1 : index
    %520 = vector.load %arg7[%c0_268, %c0_269, %c0_270, %c1_271] : memref<1x1x4x2xf32, #tpu.memory_space<vmem>>, vector<1x1x4x1xf32>
    %521 = vector.shape_cast %520 : vector<1x1x4x1xf32> to vector<4x1xf32>
    %522 = vector.shape_cast %519 : vector<4x1xf32> to vector<1x1x4x1xf32>
    tpu.vector_store %arg7[%c0_268, %c0_269, %c0_270, %c1_271], %522 {strides = array<i32>} : memref<1x1x4x2xf32, #tpu.memory_space<vmem>>, vector<1x1x4x1xf32>,
    return
  }
  func.func @transform_0(%arg0: i32, %arg1: i32) -> (i32, i32, i32, i32) {
    %c0_i32 = arith.constant 0 : i32
    %c0_i32_0 = arith.constant 0 : i32
    %c0_i32_1 = arith.constant 0 : i32
    %c0_i32_2 = arith.constant 0 : i32
    return %arg0, %c0_i32, %c0_i32_0, %c0_i32_1 : i32, i32, i32, i32
  }
  func.func @transform_1(%arg0: i32, %arg1: i32) -> (i32, i32, i32) {
    %c0_i32 = arith.constant 0 : i32
    %c0_i32_0 = arith.constant 0 : i32
    %c0_i32_1 = arith.constant 0 : i32
    return %arg1, %c0_i32, %c0_i32_0 : i32, i32, i32
  }
  func.func @transform_2(%arg0: i32, %arg1: i32) -> (i32, i32) {
    %c0_i32 = arith.constant 0 : i32
    %c0_i32_0 = arith.constant 0 : i32
    %c0_i32_1 = arith.constant 0 : i32
    return %c0_i32, %c0_i32_0 : i32, i32
  }
  func.func @transform_3(%arg0: i32, %arg1: i32) -> i32 {
    %c0_i32 = arith.constant 0 : i32
    %c0_i32_0 = arith.constant 0 : i32
    return %c0_i32 : i32
  }
  func.func @transform_4(%arg0: i32, %arg1: i32) -> (i32, i32, i32, i32) {
    %c0_i32 = arith.constant 0 : i32
    %c0_i32_0 = arith.constant 0 : i32
    %c0_i32_1 = arith.constant 0 : i32
    return %arg0, %c0_i32, %arg1, %c0_i32_0 : i32, i32, i32, i32
  }
  func.func @transform_5(%arg0: i32, %arg1: i32) -> (i32, i32, i32, i32) {
    %c0_i32 = arith.constant 0 : i32
    %c0_i32_0 = arith.constant 0 : i32
    %c0_i32_1 = arith.constant 0 : i32
    return %arg0, %arg1, %c0_i32, %c0_i32_0 : i32, i32, i32, i32
  }
}

module attributes {stable_mosaic.version = 11 : i64} {
  func.func @_bn_concat_conv_kernel(%arg0: i32, %arg1: i32, %arg2: memref<1x4x512xf32, #tpu.memory_space<vmem>>, %arg3: memref<1x4x512xf32, #tpu.memory_space<vmem>>, %arg4: memref<4x4xf32, #tpu.memory_space<vmem>>, %arg5: memref<4x4xf32, #tpu.memory_space<vmem>>, %arg6: memref<4x1xf32, #tpu.memory_space<vmem>>, %arg7: memref<1x4x512xf32, #tpu.memory_space<vmem>>) attributes {dimension_semantics = [#tpu.dimension_semantics<parallel>, #tpu.dimension_semantics<parallel>], iteration_bounds = array<i64: 2, 2>, scalar_prefetch = 0 : i64, scratch_operands = 0 : i64, tpu.core_type = #tpu.core_type<tc>, window_params = [{transform_indices = @transform_0, window_bounds = array<i64: 1, 4, 512>}, {transform_indices = @transform_1, window_bounds = array<i64: 1, 4, 512>}, {pipeline_mode = #tpu.pipeline_mode<synchronous>, transform_indices = @transform_2, window_bounds = array<i64: 4, 4>}, {pipeline_mode = #tpu.pipeline_mode<synchronous>, transform_indices = @transform_3, window_bounds = array<i64: 4, 4>}, {pipeline_mode = #tpu.pipeline_mode<synchronous>, transform_indices = @transform_4, window_bounds = array<i64: 4, 1>}, {transform_indices = @transform_5, window_bounds = array<i64: 1, 4, 512>}]} {
    %c0 = arith.constant 0 : index
    %c0_0 = arith.constant 0 : index
    %0 = vector.load %arg4[%c0, %c0_0] : memref<4x4xf32, #tpu.memory_space<vmem>>, vector<4x4xf32>
    %c0_1 = arith.constant 0 : index
    %c0_2 = arith.constant 0 : index
    %c0_3 = arith.constant 0 : index
    %1 = vector.load %arg2[%c0_1, %c0_2, %c0_3] : memref<1x4x512xf32, #tpu.memory_space<vmem>>, vector<1x4x512xf32>
    %2 = vector.shape_cast %1 : vector<1x4x512xf32> to vector<4x512xf32>
    %cst = arith.constant dense<0.000000e+00> : vector<4x512xf32>
    %3 = tpu.matmul %0, %2, %cst {dimension_numbers = #tpu.dot_dimension_numbers<[1], [0], [0], [1], [0, 0, 1, 1], [], []>} : vector<4x4xf32>, vector<4x512xf32>, vector<4x512xf32> -> vector<4x512xf32>
    %c0_4 = arith.constant 0 : index
    %c0_5 = arith.constant 0 : index
    %4 = vector.load %arg5[%c0_4, %c0_5] : memref<4x4xf32, #tpu.memory_space<vmem>>, vector<4x4xf32>
    %c0_6 = arith.constant 0 : index
    %c0_7 = arith.constant 0 : index
    %c0_8 = arith.constant 0 : index
    %5 = vector.load %arg3[%c0_6, %c0_7, %c0_8] : memref<1x4x512xf32, #tpu.memory_space<vmem>>, vector<1x4x512xf32>
    %6 = vector.shape_cast %5 : vector<1x4x512xf32> to vector<4x512xf32>
    %cst_9 = arith.constant dense<0.000000e+00> : vector<4x512xf32>
    %7 = tpu.matmul %4, %6, %cst_9 {dimension_numbers = #tpu.dot_dimension_numbers<[1], [0], [0], [1], [0, 0, 1, 1], [], []>} : vector<4x4xf32>, vector<4x512xf32>, vector<4x512xf32> -> vector<4x512xf32>
    %8 = arith.addf %3, %7 : vector<4x512xf32>
    %c0_10 = arith.constant 0 : index
    %c0_11 = arith.constant 0 : index
    %9 = vector.load %arg6[%c0_10, %c0_11] : memref<4x1xf32, #tpu.memory_space<vmem>>, vector<4x1xf32>
    %10 = vector.broadcast %9 : vector<4x1xf32> to vector<4x512xf32>
    %11 = arith.addf %8, %10 : vector<4x512xf32>
    %c0_12 = arith.constant 0 : index
    %c0_13 = arith.constant 0 : index
    %c0_14 = arith.constant 0 : index
    %12 = vector.load %arg7[%c0_12, %c0_13, %c0_14] : memref<1x4x512xf32, #tpu.memory_space<vmem>>, vector<1x4x512xf32>
    %13 = vector.shape_cast %12 : vector<1x4x512xf32> to vector<4x512xf32>
    %14 = vector.shape_cast %11 : vector<4x512xf32> to vector<1x4x512xf32>
    tpu.vector_store %arg7[%c0_12, %c0_13, %c0_14], %14 {strides = array<i32>} : memref<1x4x512xf32, #tpu.memory_space<vmem>>, vector<1x4x512xf32>,
    return
  }
  func.func @transform_0(%arg0: i32, %arg1: i32) -> (i32, i32, i32) {
    %c0_i32 = arith.constant 0 : i32
    %c0_i32_0 = arith.constant 0 : i32
    return %arg0, %c0_i32, %arg1 : i32, i32, i32
  }
  func.func @transform_1(%arg0: i32, %arg1: i32) -> (i32, i32, i32) {
    %c0_i32 = arith.constant 0 : i32
    %c0_i32_0 = arith.constant 0 : i32
    return %arg0, %c0_i32, %arg1 : i32, i32, i32
  }
  func.func @transform_2(%arg0: i32, %arg1: i32) -> (i32, i32) {
    %c0_i32 = arith.constant 0 : i32
    %c0_i32_0 = arith.constant 0 : i32
    %c0_i32_1 = arith.constant 0 : i32
    return %c0_i32, %c0_i32_0 : i32, i32
  }
  func.func @transform_3(%arg0: i32, %arg1: i32) -> (i32, i32) {
    %c0_i32 = arith.constant 0 : i32
    %c0_i32_0 = arith.constant 0 : i32
    %c0_i32_1 = arith.constant 0 : i32
    return %c0_i32, %c0_i32_0 : i32, i32
  }
  func.func @transform_4(%arg0: i32, %arg1: i32) -> (i32, i32) {
    %c0_i32 = arith.constant 0 : i32
    %c0_i32_0 = arith.constant 0 : i32
    %c0_i32_1 = arith.constant 0 : i32
    return %c0_i32, %c0_i32_0 : i32, i32
  }
  func.func @transform_5(%arg0: i32, %arg1: i32) -> (i32, i32, i32) {
    %c0_i32 = arith.constant 0 : i32
    %c0_i32_0 = arith.constant 0 : i32
    return %arg0, %c0_i32, %arg1 : i32, i32, i32
  }
}

</mosaic_0001>

<llo_original>
// kernel: multi_input_forward.3
$region0: #{multi_input_forward.3}
  #allocation0 [shape = 'u32[]', space=smem, size = 0x4, offset = 0x4, fixed_abs, tag = 'smem constant byte address 0x4 - core index']
  #allocation1 [shape = 'u32[144,128]{1,0:T(1,128)}', space=vmem, size = 0x12000, scoped, tag = 'internal scratch']
  %s0 = inlined_call_operand.vmem [shape: f32[2,4,1024], index: 0, kind: input, shape index: {}]
  %s1 = inlined_call_operand.vmem [shape: f32[2,4,1024], index: 1, kind: input, shape index: {}]
  %s2 = inlined_call_operand.vmem [shape: f32[4,4], index: 2, kind: input, shape index: {}]
  %s3 = inlined_call_operand.vmem [shape: f32[4,4], index: 3, kind: input, shape index: {}]
  %s4 = inlined_call_operand.vmem [shape: f32[4,1], index: 4, kind: input, shape index: {}]
  %s5 = inlined_call_operand.vmem [shape: f32[2,4,1024], index: 5, kind: output, shape index: {}]
  %s6 = sld [smem:[#allocation0]]
  $region53: #{multi_input_forward.3} parent=0
    _
  %s8 = ssub.s32 1, %s6
  %s9 = scalar_select 0, %s8, %s6
  loop: start=0, step=1, limit=6
  $region2: #{multi_input_forward.3} parent=0 // loop_pre_header
    _
  $region3: #{multi_input_forward.3} parent=0 // loop_header
    %s11 = sphi 0, %s15
    %p12 = scmp.ge.s32.totalorder %s11, 6
    %s18 = sphi 0, %s30
    %s19 = sphi 0, %s26
    %s20 = sphi 0, %s18
    %s21 = sphi 0, %s19
    %s22 = sphi 0, %s20
    %s23 = sphi 0, %s21
    %s35 = sphi 0, %s37
    %s38 = sphi 0, %s35
    %s39 = sphi 0, %s38
    %s55 = sphi 0, %s39
    %s63 = sphi 0, %s65
    %s66 = sphi 0, %s63
    %s67 = sphi 0, %s66
    %s83 = sphi 0, %s67
    %s87 = sphi 0, %s87
    %s89 = sphi 0, %s87
    %s90 = sphi 0, %s89
    %s104 = sphi 0, %s90
    %s108 = sphi 0, %s108
    %s110 = sphi 0, %s108
    %s111 = sphi 0, %s110
    %s125 = sphi 0, %s111
    %s129 = sphi 0, %s129
    %s131 = sphi 0, %s129
    %s132 = sphi 0, %s131
    %s146 = sphi 0, %s132
    %s154 = sphi 0, %s156
    %s157 = sphi 0, %s154
    %s158 = sphi 0, %s157
    %s174 = sphi 0, %s158
  $region4: #{multi_input_forward.3} parent=0 // loop_header_branch
    %14 = sbr.rel (%p12) target = $region8
  $region5: #{multi_input_forward.3} parent=0 // loop_body
    %s16 = ssub.s32 %s11, 1
    %s17 = ssub.s32 %s11, 2
    %s24 = sadd.s32 1, %s19
    %p25 = scmp.ge.s32.totalorder %s24, 2
    %s26 = scalar_select %p25, 0, %s24
    %s27 = sadd.s32 1, %s18
    %s28 = scalar_select %p25, %s27, %s18
    %p29 = scmp.ge.s32.totalorder %s28, 2
    %s30 = scalar_select %p29, 0, %s28
    %s31 = ssub.s32 %s18, %s30
    %s32 = ssub.s32 %s19, %s26
    %s33 = sor.u32 %s31, %s32
    %p34 = scmp.eq.s32.totalorder %s33, 0
    %s36 = sadd.s32 %s35, 1
    %s37 = scalar_select %p34, %s35, %s36
    %p40 = pneg %p34
    %p41 = scmp.eq.s32.totalorder %s11, 3
    %p42 = por %p40, %p41
    %p43 = scmp.ne.s32.totalorder %s35, %s38
    %p44 = scmp.eq.s32.totalorder %s11, 0
    %p45 = por %p43, %p44
    %p46 = scmp.ne.s32.totalorder %s35, %s38
    %p47 = scmp.eq.s32.totalorder %s16, 3
    %p48 = por %p46, %p47
    %p49 = scmp.ne.s32.totalorder %s38, %s39
    %p50 = scmp.eq.s32.totalorder %s16, 0
    %p51 = por %p49, %p50
    %p52 = scmp.ne.s32.totalorder %s38, %s39
    %p53 = scmp.eq.s32.totalorder %s17, 3
    %p54 = por %p52, %p53
    %p56 = scmp.ne.s32.totalorder %s39, %s55
    %p57 = scmp.eq.s32.totalorder %s17, 0
    %p58 = por %p56, %p57
    %s59 = ssub.s32 %s18, %s30
    %s60 = ssub.s32 %s19, %s26
    %s61 = sor.u32 %s59, %s60
    %p62 = scmp.eq.s32.totalorder %s61, 0
    %s64 = sadd.s32 %s63, 1
    %s65 = scalar_select %p62, %s63, %s64
    %p68 = pneg %p62
    %p69 = scmp.eq.s32.totalorder %s11, 3
    %p70 = por %p68, %p69
    %p71 = scmp.ne.s32.totalorder %s63, %s66
    %p72 = scmp.eq.s32.totalorder %s11, 0
    %p73 = por %p71, %p72
    %p74 = scmp.ne.s32.totalorder %s63, %s66
    %p75 = scmp.eq.s32.totalorder %s16, 3
    %p76 = por %p74, %p75
    %p77 = scmp.ne.s32.totalorder %s66, %s67
    %p78 = scmp.eq.s32.totalorder %s16, 0
    %p79 = por %p77, %p78
    %p80 = scmp.ne.s32.totalorder %s66, %s67
    %p81 = scmp.eq.s32.totalorder %s17, 3
    %p82 = por %p80, %p81
    %p84 = scmp.ne.s32.totalorder %s67, %s83
    %p85 = scmp.eq.s32.totalorder %s17, 0
    %p86 = por %p84, %p85
    %s88 = sadd.s32 %s87, 1
    %p91 = scmp.eq.s32.totalorder %s11, 3
    %p92 = scmp.ne.s32.totalorder %s87, %s89
    %p93 = scmp.eq.s32.totalorder %s11, 0
    %p94 = por %p92, %p93
    %p95 = scmp.ne.s32.totalorder %s87, %s89
    %p96 = scmp.eq.s32.totalorder %s16, 3
    %p97 = por %p95, %p96
    %p98 = scmp.ne.s32.totalorder %s89, %s90
    %p99 = scmp.eq.s32.totalorder %s16, 0
    %p100 = por %p98, %p99
    %p101 = scmp.ne.s32.totalorder %s89, %s90
    %p102 = scmp.eq.s32.totalorder %s17, 3
    %p103 = por %p101, %p102
    %p105 = scmp.ne.s32.totalorder %s90, %s104
    %p106 = scmp.eq.s32.totalorder %s17, 0
    %p107 = por %p105, %p106
    %s109 = sadd.s32 %s108, 1
    %p112 = scmp.eq.s32.totalorder %s11, 3
    %p113 = scmp.ne.s32.totalorder %s108, %s110
    %p114 = scmp.eq.s32.totalorder %s11, 0
    %p115 = por %p113, %p114
    %p116 = scmp.ne.s32.totalorder %s108, %s110
    %p117 = scmp.eq.s32.totalorder %s16, 3
    %p118 = por %p116, %p117
    %p119 = scmp.ne.s32.totalorder %s110, %s111
    %p120 = scmp.eq.s32.totalorder %s16, 0
    %p121 = por %p119, %p120
    %p122 = scmp.ne.s32.totalorder %s110, %s111
    %p123 = scmp.eq.s32.totalorder %s17, 3
    %p124 = por %p122, %p123
    %p126 = scmp.ne.s32.totalorder %s111, %s125
    %p127 = scmp.eq.s32.totalorder %s17, 0
    %p128 = por %p126, %p127
    %s130 = sadd.s32 %s129, 1
    %p133 = scmp.eq.s32.totalorder %s11, 3
    %p134 = scmp.ne.s32.totalorder %s129, %s131
    %p135 = scmp.eq.s32.totalorder %s11, 0
    %p136 = por %p134, %p135
    %p137 = scmp.ne.s32.totalorder %s129, %s131
    %p138 = scmp.eq.s32.totalorder %s16, 3
    %p139 = por %p137, %p138
    %p140 = scmp.ne.s32.totalorder %s131, %s132
    %p141 = scmp.eq.s32.totalorder %s16, 0
    %p142 = por %p140, %p141
    %p143 = scmp.ne.s32.totalorder %s131, %s132
    %p144 = scmp.eq.s32.totalorder %s17, 3
    %p145 = por %p143, %p144
    %p147 = scmp.ne.s32.totalorder %s132, %s146
    %p148 = scmp.eq.s32.totalorder %s17, 0
    %p149 = por %p147, %p148
    %s150 = ssub.s32 %s18, %s30
    %s151 = ssub.s32 %s19, %s26
    %s152 = sor.u32 %s150, %s151
    %p153 = scmp.eq.s32.totalorder %s152, 0
    %s155 = sadd.s32 %s154, 1
    %s156 = scalar_select %p153, %s154, %s155
    %p159 = pneg %p153
    %p160 = scmp.eq.s32.totalorder %s11, 3
    %p161 = por %p159, %p160
    %p162 = scmp.ne.s32.totalorder %s154, %s157
    %p163 = scmp.eq.s32.totalorder %s11, 0
    %p164 = por %p162, %p163
    %p165 = scmp.ne.s32.totalorder %s154, %s157
    %p166 = scmp.eq.s32.totalorder %s16, 3
    %p167 = por %p165, %p166
    %p168 = scmp.ne.s32.totalorder %s157, %s158
    %p169 = scmp.eq.s32.totalorder %s16, 0
    %p170 = por %p168, %p169
    %p171 = scmp.ne.s32.totalorder %s157, %s158
    %p172 = scmp.eq.s32.totalorder %s17, 3
    %p173 = por %p171, %p172
    %p175 = scmp.ne.s32.totalorder %s158, %s174
    %p176 = scmp.eq.s32.totalorder %s17, 0
    %p177 = por %p175, %p176
    %p178 = scmp.le.s32.totalorder 1, %s11
    %p179 = scmp.lt.s32.totalorder %s11, 5
    %p180 = pnand %p178, %p179
    %p181 = pneg %p180
    // Predicated region
    $region9: #{multi_input_forward.3} parent=5 // pred_check
      _
    $region10: #{multi_input_forward.3} parent=5 // pred_check_branch
      %183 = sbr.rel (%p180) target = $region12
    $region11: #{multi_input_forward.3} parent=5 // pred_region
      %s184 = ssub.s32 %s11, 1
      // Predicated region
      $region13: #{multi_input_forward.3} parent=11 // pred_check
        %p185 = pneg %p100
      $region14: #{multi_input_forward.3} parent=11 // pred_check_branch
        %187 = sbr.rel (%p185) target = $region16
      $region15: #{multi_input_forward.3} parent=11 // pred_region
        _
      $region16: #{multi_input_forward.3} parent=11 // pred_fallthru
        _
      // Predicated region
      $region17: #{multi_input_forward.3} parent=11 // pred_check
        %p188 = pneg %p121
      $region18: #{multi_input_forward.3} parent=11 // pred_check_branch
        %190 = sbr.rel (%p188) target = $region20
      $region19: #{multi_input_forward.3} parent=11 // pred_region
        _
      $region20: #{multi_input_forward.3} parent=11 // pred_fallthru
        _
      // Predicated region
      $region21: #{multi_input_forward.3} parent=11 // pred_check
        %p191 = pneg %p142
      $region22: #{multi_input_forward.3} parent=11 // pred_check_branch
        %193 = sbr.rel (%p191) target = $region24
      $region23: #{multi_input_forward.3} parent=11 // pred_region
        _
      $region24: #{multi_input_forward.3} parent=11 // pred_fallthru
        _
    $region12: #{multi_input_forward.3} parent=5 // pred_fallthru
      _
    %p194 = scmp.lt.s32.totalorder %s11, 4
    // Predicated region
    $region25: #{multi_input_forward.3} parent=5 // pred_check
      %p195 = pneg %p194
    $region26: #{multi_input_forward.3} parent=5 // pred_check_branch
      %197 = sbr.rel (%p195) target = $region28
    $region27: #{multi_input_forward.3} parent=5 // pred_region
      // Predicated region
      $region29: #{multi_input_forward.3} parent=27 // pred_check
        %p198 = pneg %p45
      $region30: #{multi_input_forward.3} parent=27 // pred_check_branch
        %200 = sbr.rel (%p198) target = $region32
      $region31: #{multi_input_forward.3} parent=27 // pred_region
        %s201 = smul.u32 4, %s19
        %p202 = scmp.lt.s32.totalorder %s18, 1
        %s203 = scalar_select %p202, %s18, 1
        %p204 = scmp.lt.s32.totalorder %s201, 7
        %s205 = scalar_select %p204, %s201, 7
        %s206 = smul.addr %s203, 8
        %s207 = sadd.s32 %s205, %s206
        %s208 = smul.addr %s207, 4
        %s209 = scalar_lea.vmem %s0, %s208
        %s210 = smul.u32 4, %s19
      $region32: #{multi_input_forward.3} parent=27 // pred_fallthru
        _
      // Predicated region
      $region33: #{multi_input_forward.3} parent=27 // pred_check
        %p211 = pneg %p73
      $region34: #{multi_input_forward.3} parent=27 // pred_check_branch
        %213 = sbr.rel (%p211) target = $region36
      $region35: #{multi_input_forward.3} parent=27 // pred_region
        %s214 = smul.u32 4, %s19
        %p215 = scmp.lt.s32.totalorder %s18, 1
        %s216 = scalar_select %p215, %s18, 1
        %p217 = scmp.lt.s32.totalorder %s214, 7
        %s218 = scalar_select %p217, %s214, 7
        %s219 = smul.addr %s216, 8
        %s220 = sadd.s32 %s218, %s219
        %s221 = smul.addr %s220, 4
        %s222 = scalar_lea.vmem %s1, %s221
        %s223 = smul.u32 4, %s19
      $region36: #{multi_input_forward.3} parent=27 // pred_fallthru
        _
    $region28: #{multi_input_forward.3} parent=5 // pred_fallthru
      _
    %p224 = scmp.le.s32.totalorder 1, %s11
    %p225 = scmp.lt.s32.totalorder %s11, 5
    %p226 = pnand %p224, %p225
    %p227 = pneg %p226
    // Predicated region
    $region37: #{multi_input_forward.3} parent=5 // pred_check
      _
    $region38: #{multi_input_forward.3} parent=5 // pred_check_branch
      %229 = sbr.rel (%p226) target = $region40
    $region39: #{multi_input_forward.3} parent=5 // pred_region
      %s230 = ssub.s32 %s11, 1
      %s231 = smul.u32 4, %s21
      %p232 = scmp.lt.s32.totalorder %s20, 1
      %s233 = scalar_select %p232, %s20, 1
      %p234 = scmp.lt.s32.totalorder %s231, 7
      %s235 = scalar_select %p234, %s231, 7
      %s236 = smul.addr %s233, 8
      %s237 = sadd.s32 %s235, %s236
      %s238 = smul.addr %s237, 4
      %s239 = scalar_lea.vmem %s0, %s238
      %p240 = pneg %p51
      %p241 = pneg %p48
      %s242 = smul.u32 4, %s21
      %p243 = scmp.lt.s32.totalorder %s20, 1
      %s244 = scalar_select %p243, %s20, 1
      %p245 = scmp.lt.s32.totalorder %s242, 7
      %s246 = scalar_select %p245, %s242, 7
      %s247 = smul.addr %s244, 8
      %s248 = sadd.s32 %s246, %s247
      %s249 = smul.addr %s248, 4
      %s250 = scalar_lea.vmem %s1, %s249
      %p251 = pneg %p79
      %p252 = pneg %p76
      %p253 = pneg %p100
      %p254 = pneg %p97
      %p255 = pneg %p121
      %p256 = pneg %p118
      %p257 = pneg %p142
      %p258 = pneg %p139
      %p259 = pneg %p170
      %p260 = pneg %p167
      %s261 = smul.u32 4, %s21
      %p262 = scmp.lt.s32.totalorder %s20, 1
      %s263 = scalar_select %p262, %s20, 1
      %p264 = scmp.lt.s32.totalorder %s261, 7
      %s265 = scalar_select %p264, %s261, 7
      %s266 = smul.addr %s263, 8
      %s267 = sadd.s32 %s265, %s266
      %s268 = smul.addr %s267, 4
      %s269 = scalar_lea.vmem %s5, %s268
      %s270 = smul.u32 4, %s21
      %p271 = scmp.lt.s32.totalorder %s20, 1
      %s272 = scalar_select %p271, %s20, 1
      %p273 = scmp.lt.s32.totalorder %s270, 7
      %s274 = scalar_select %p273, %s270, 7
      %s275 = smul.addr %s272, 8
      %s276 = sadd.s32 %s274, %s275
      %s277 = smul.addr %s276, 4
      %s278 = scalar_lea.vmem %s0, %s277
      %s279 = smul.u32 4, %s21
      %s280 = smul.u32 4, %s21
      %p281 = scmp.lt.s32.totalorder %s20, 1
      %s282 = scalar_select %p281, %s20, 1
      %p283 = scmp.lt.s32.totalorder %s280, 7
      %s284 = scalar_select %p283, %s280, 7
      %s285 = smul.addr %s282, 8
      %s286 = sadd.s32 %s284, %s285
      %s287 = smul.addr %s286, 4
      %s288 = scalar_lea.vmem %s1, %s287
      %s289 = smul.u32 4, %s21
      %s290 = smul.u32 4, %s21
      %p291 = scmp.lt.s32.totalorder %s20, 1
      %s292 = scalar_select %p291, %s20, 1
      %p293 = scmp.lt.s32.totalorder %s290, 7
      %s294 = scalar_select %p293, %s290, 7
      %s295 = smul.addr %s292, 8
      %s296 = sadd.s32 %s294, %s295
      %s297 = smul.addr %s296, 4
      %s298 = scalar_lea.vmem %s5, %s297
      %s299 = smul.u32 4, %s21
      %v300 = vld [vmem:[%s2] sm:$0xf]
      %v301 = vld [vmem:[%s278] sm:$0xff]
      %v302 = vld [vmem:[%s278 + $0x8] sm:$0xff]
      %v303 = vld [vmem:[%s3] sm:$0xf]
      %v304 = vld [vmem:[%s288] sm:$0xff]
      %v305 = vld [vmem:[%s288 + $0x8] sm:$0xff]
      %v308 = vcombine.high %v304, %v304
      %v309 = vcombine.high %v305, %v305
      %vm310 = vcmask 31744
      %v312 = vsel %vm310, %v303, 0
      %vm314 = vcmask 1043456
      %v315 = vsel %vm314, %v304, 0
      %v317 = vsel %vm314, %v308, 0
      %v319 = vsel %vm314, %v305, 0
      %v321 = vsel %vm314, %v309, 0
      %323 = vmatprep.subr.mxu0 %v317
      %324 = vmatpush1.msra.mxu0 %v315
      %325 = vmatprep.subr.mxu0 0.0
      %326 = vmatpush1.msra.mxu0 0.0
      %327 = vmatprep.subr.mxu0 0.0
      %328 = vmatpush1.msra.mxu0 0.0
      %329 = vmatprep.subr.mxu0 0.0
      %330 = vmatpush1.msra.mxu0 0.0
      %331 = vmatprep.subr.mxu0 0.0
      %332 = vmatpush1.msra.mxu0 0.0
      %333 = vmatprep.subr.mxu0 0.0
      %334 = vmatpush1.msra.mxu0 0.0
      %335 = vmatprep.subr.mxu0 0.0
      %336 = vmatpush1.msra.mxu0 0.0
      %337 = vmatprep.subr.mxu0 0.0
      %338 = vmatpush1.msra.mxu0 0.0
      %339 = vmatprep.subr.mxu0 0.0
      %340 = vmatpush1.msra.mxu0 0.0
      %341 = vmatprep.subr.mxu0 0.0
      %342 = vmatpush1.msra.mxu0 0.0
      %343 = vmatprep.subr.mxu0 0.0
      %344 = vmatpush1.msra.mxu0 0.0
      %345 = vmatprep.subr.mxu0 0.0
      %346 = vmatpush1.msra.mxu0 0.0
      %347 = vmatprep.subr.mxu0 0.0
      %348 = vmatpush1.msra.mxu0 0.0
      %349 = vmatprep.subr.mxu0 0.0
      %350 = vmatpush1.msra.mxu0 0.0
      %351 = vmatprep.subr.mxu0 0.0
      %352 = vmatpush1.msra.mxu0 0.0
      %353 = vmatprep.subr.mxu0 0.0
      %354 = vmatpush1.msra.mxu0 0.0
      %355 = vmatprep.subr.mxu0 0.0
      %356 = vmatpush1.msra.mxu0 0.0
      %357 = vmatprep.subr.mxu0 0.0
      %358 = vmatpush1.msra.mxu0 0.0
      %359 = vmatprep.subr.mxu0 0.0
      %360 = vmatpush1.msra.mxu0 0.0
      %361 = vmatprep.subr.mxu0 0.0
      %362 = vmatpush1.msra.mxu0 0.0
      %363 = vmatprep.subr.mxu0 0.0
      %364 = vmatpush1.msra.mxu0 0.0
      %365 = vmatprep.subr.mxu0 0.0
      %366 = vmatpush1.msra.mxu0 0.0
      %367 = vmatprep.subr.mxu0 0.0
      %368 = vmatpush1.msra.mxu0 0.0
      %369 = vmatprep.subr.mxu0 0.0
      %370 = vmatpush1.msra.mxu0 0.0
      %371 = vmatprep.subr.mxu0 0.0
      %372 = vmatpush1.msra.mxu0 0.0
      %373 = vmatprep.subr.mxu0 0.0
      %374 = vmatpush1.msra.mxu0 0.0
      %375 = vmatprep.subr.mxu0 0.0
      %376 = vmatpush1.msra.mxu0 0.0
      %377 = vmatprep.subr.mxu0 0.0
      %378 = vmatpush1.msra.mxu0 0.0
      %379 = vmatprep.subr.mxu0 0.0
      %380 = vmatpush1.msra.mxu0 0.0
      %381 = vmatprep.subr.mxu0 0.0
      %382 = vmatpush1.msra.mxu0 0.0
      %383 = vmatprep.subr.mxu0 0.0
      %384 = vmatpush1.msra.mxu0 0.0
      %385 = vmatprep.subr.mxu0 0.0
      %386 = vmatpush1.msra.mxu0 0.0
      %387 = vmatprep.mubr.f32.mxu0 0.0
      %388 = vmatmul.mubr.f32.gmra.mrb[0].mxu0 %v312
      %v389 = vpop.f32.mrb[0].mxu0
      %v390 = vadd.f32 0.0, %v389
      %v391 = vpop.f32.mrb[0].mxu0
      %v392 = vadd.f32 0.0, %v391
      %393 = vdwg.mxu0
      %394 = vmatprep.subr.mxu0 %v321
      %395 = vmatpush1.msra.mxu0 %v319
      %396 = vmatprep.subr.mxu0 0.0
      %397 = vmatpush1.msra.mxu0 0.0
      %398 = vmatprep.subr.mxu0 0.0
      %399 = vmatpush1.msra.mxu0 0.0
      %400 = vmatprep.subr.mxu0 0.0
      %401 = vmatpush1.msra.mxu0 0.0
      %402 = vmatprep.subr.mxu0 0.0
      %403 = vmatpush1.msra.mxu0 0.0
      %404 = vmatprep.subr.mxu0 0.0
      %405 = vmatpush1.msra.mxu0 0.0
      %406 = vmatprep.subr.mxu0 0.0
      %407 = vmatpush1.msra.mxu0 0.0
      %408 = vmatprep.subr.mxu0 0.0
      %409 = vmatpush1.msra.mxu0 0.0
      %410 = vmatprep.subr.mxu0 0.0
      %411 = vmatpush1.msra.mxu0 0.0
      %412 = vmatprep.subr.mxu0 0.0
      %413 = vmatpush1.msra.mxu0 0.0
      %414 = vmatprep.subr.mxu0 0.0
      %415 = vmatpush1.msra.mxu0 0.0
      %416 = vmatprep.subr.mxu0 0.0
      %417 = vmatpush1.msra.mxu0 0.0
      %418 = vmatprep.subr.mxu0 0.0
      %419 = vmatpush1.msra.mxu0 0.0
      %420 = vmatprep.subr.mxu0 0.0
      %421 = vmatpush1.msra.mxu0 0.0
      %422 = vmatprep.subr.mxu0 0.0
      %423 = vmatpush1.msra.mxu0 0.0
      %424 = vmatprep.subr.mxu0 0.0
      %425 = vmatpush1.msra.mxu0 0.0
      %426 = vmatprep.subr.mxu0 0.0
      %427 = vmatpush1.msra.mxu0 0.0
      %428 = vmatprep.subr.mxu0 0.0
      %429 = vmatpush1.msra.mxu0 0.0
      %430 = vmatprep.subr.mxu0 0.0
      %431 = vmatpush1.msra.mxu0 0.0
      %432 = vmatprep.subr.mxu0 0.0
      %433 = vmatpush1.msra.mxu0 0.0
      %434 = vmatprep.subr.mxu0 0.0
      %435 = vmatpush1.msra.mxu0 0.0
      %436 = vmatprep.subr.mxu0 0.0
      %437 = vmatpush1.msra.mxu0 0.0
      %438 = vmatprep.subr.mxu0 0.0
      %439 = vmatpush1.msra.mxu0 0.0
      %440 = vmatprep.subr.mxu0 0.0
      %441 = vmatpush1.msra.mxu0 0.0
      %442 = vmatprep.subr.mxu0 0.0
      %443 = vmatpush1.msra.mxu0 0.0
      %444 = vmatprep.subr.mxu0 0.0
      %445 = vmatpush1.msra.mxu0 0.0
      %446 = vmatprep.subr.mxu0 0.0
      %447 = vmatpush1.msra.mxu0 0.0
      %448 = vmatprep.subr.mxu0 0.0
      %449 = vmatpush1.msra.mxu0 0.0
      %450 = vmatprep.subr.mxu0 0.0
      %451 = vmatpush1.msra.mxu0 0.0
      %452 = vmatprep.subr.mxu0 0.0
      %453 = vmatpush1.msra.mxu0 0.0
      %454 = vmatprep.subr.mxu0 0.0
      %455 = vmatpush1.msra.mxu0 0.0
      %456 = vmatprep.subr.mxu0 0.0
      %457 = vmatpush1.msra.mxu0 0.0
      %458 = vmatprep.mubr.f32.mxu0 0.0
      %459 = vmatmul.mubr.f32.gmra.mrb[0].mxu0 %v312
      %v460 = vpop.f32.mrb[0].mxu0
      %v461 = vadd.f32 0.0, %v460
      %v462 = vpop.f32.mrb[0].mxu0
      %v463 = vadd.f32 0.0, %v462
      %464 = vdwg.mxu0
      %v467 = vcombine.high %v301, %v301
      %v468 = vcombine.high %v302, %v302
      %v470 = vsel %vm310, %v300, 0
      %v472 = vsel %vm314, %v301, 0
      %v474 = vsel %vm314, %v467, 0
      %v476 = vsel %vm314, %v302, 0
      %v478 = vsel %vm314, %v468, 0
      %480 = vmatprep.subr.mxu0 %v474
      %481 = vmatpush1.msra.mxu0 %v472
      %482 = vmatprep.subr.mxu0 0.0
      %483 = vmatpush1.msra.mxu0 0.0
      %484 = vmatprep.subr.mxu0 0.0
      %485 = vmatpush1.msra.mxu0 0.0
      %486 = vmatprep.subr.mxu0 0.0
      %487 = vmatpush1.msra.mxu0 0.0
      %488 = vmatprep.subr.mxu0 0.0
      %489 = vmatpush1.msra.mxu0 0.0
      %490 = vmatprep.subr.mxu0 0.0
      %491 = vmatpush1.msra.mxu0 0.0
      %492 = vmatprep.subr.mxu0 0.0
      %493 = vmatpush1.msra.mxu0 0.0
      %494 = vmatprep.subr.mxu0 0.0
      %495 = vmatpush1.msra.mxu0 0.0
      %496 = vmatprep.subr.mxu0 0.0
      %497 = vmatpush1.msra.mxu0 0.0
      %498 = vmatprep.subr.mxu0 0.0
      %499 = vmatpush1.msra.mxu0 0.0
      %500 = vmatprep.subr.mxu0 0.0
      %501 = vmatpush1.msra.mxu0 0.0
      %502 = vmatprep.subr.mxu0 0.0
      %503 = vmatpush1.msra.mxu0 0.0
      %504 = vmatprep.subr.mxu0 0.0
      %505 = vmatpush1.msra.mxu0 0.0
      %506 = vmatprep.subr.mxu0 0.0
      %507 = vmatpush1.msra.mxu0 0.0
      %508 = vmatprep.subr.mxu0 0.0
      %509 = vmatpush1.msra.mxu0 0.0
      %510 = vmatprep.subr.mxu0 0.0
      %511 = vmatpush1.msra.mxu0 0.0
      %512 = vmatprep.subr.mxu0 0.0
      %513 = vmatpush1.msra.mxu0 0.0
      %514 = vmatprep.subr.mxu0 0.0
      %515 = vmatpush1.msra.mxu0 0.0
      %516 = vmatprep.subr.mxu0 0.0
      %517 = vmatpush1.msra.mxu0 0.0
      %518 = vmatprep.subr.mxu0 0.0
      %519 = vmatpush1.msra.mxu0 0.0
      %520 = vmatprep.subr.mxu0 0.0
      %521 = vmatpush1.msra.mxu0 0.0
      %522 = vmatprep.subr.mxu0 0.0
      %523 = vmatpush1.msra.mxu0 0.0
      %524 = vmatprep.subr.mxu0 0.0
      %525 = vmatpush1.msra.mxu0 0.0
      %526 = vmatprep.subr.mxu0 0.0
      %527 = vmatpush1.msra.mxu0 0.0
      %528 = vmatprep.subr.mxu0 0.0
      %529 = vmatpush1.msra.mxu0 0.0
      %530 = vmatprep.subr.mxu0 0.0
      %531 = vmatpush1.msra.mxu0 0.0
      %532 = vmatprep.subr.mxu0 0.0
      %533 = vmatpush1.msra.mxu0 0.0
      %534 = vmatprep.subr.mxu0 0.0
      %535 = vmatpush1.msra.mxu0 0.0
      %536 = vmatprep.subr.mxu0 0.0
      %537 = vmatpush1.msra.mxu0 0.0
      %538 = vmatprep.subr.mxu0 0.0
      %539 = vmatpush1.msra.mxu0 0.0
      %540 = vmatprep.subr.mxu0 0.0
      %541 = vmatpush1.msra.mxu0 0.0
      %542 = vmatprep.subr.mxu0 0.0
      %543 = vmatpush1.msra.mxu0 0.0
      %544 = vmatprep.mubr.f32.mxu0 0.0
      %545 = vmatmul.mubr.f32.gmra.mrb[0].mxu0 %v470
      %v546 = vpop.f32.mrb[0].mxu0
      %v547 = vadd.f32 %v390, %v546
      %v548 = vpop.f32.mrb[0].mxu0
      %v549 = vadd.f32 %v392, %v548
      %550 = vdwg.mxu0
      %551 = vmatprep.subr.mxu0 %v478
      %552 = vmatpush1.msra.mxu0 %v476
      %553 = vmatprep.subr.mxu0 0.0
      %554 = vmatpush1.msra.mxu0 0.0
      %555 = vmatprep.subr.mxu0 0.0
      %556 = vmatpush1.msra.mxu0 0.0
      %557 = vmatprep.subr.mxu0 0.0
      %558 = vmatpush1.msra.mxu0 0.0
      %559 = vmatprep.subr.mxu0 0.0
      %560 = vmatpush1.msra.mxu0 0.0
      %561 = vmatprep.subr.mxu0 0.0
      %562 = vmatpush1.msra.mxu0 0.0
      %563 = vmatprep.subr.mxu0 0.0
      %564 = vmatpush1.msra.mxu0 0.0
      %565 = vmatprep.subr.mxu0 0.0
      %566 = vmatpush1.msra.mxu0 0.0
      %567 = vmatprep.subr.mxu0 0.0
      %568 = vmatpush1.msra.mxu0 0.0
      %569 = vmatprep.subr.mxu0 0.0
      %570 = vmatpush1.msra.mxu0 0.0
      %571 = vmatprep.subr.mxu0 0.0
      %572 = vmatpush1.msra.mxu0 0.0
      %573 = vmatprep.subr.mxu0 0.0
      %574 = vmatpush1.msra.mxu0 0.0
      %575 = vmatprep.subr.mxu0 0.0
      %576 = vmatpush1.msra.mxu0 0.0
      %577 = vmatprep.subr.mxu0 0.0
      %578 = vmatpush1.msra.mxu0 0.0
      %579 = vmatprep.subr.mxu0 0.0
      %580 = vmatpush1.msra.mxu0 0.0
      %581 = vmatprep.subr.mxu0 0.0
      %582 = vmatpush1.msra.mxu0 0.0
      %583 = vmatprep.subr.mxu0 0.0
      %584 = vmatpush1.msra.mxu0 0.0
      %585 = vmatprep.subr.mxu0 0.0
      %586 = vmatpush1.msra.mxu0 0.0
      %587 = vmatprep.subr.mxu0 0.0
      %588 = vmatpush1.msra.mxu0 0.0
      %589 = vmatprep.subr.mxu0 0.0
      %590 = vmatpush1.msra.mxu0 0.0
      %591 = vmatprep.subr.mxu0 0.0
      %592 = vmatpush1.msra.mxu0 0.0
      %593 = vmatprep.subr.mxu0 0.0
      %594 = vmatpush1.msra.mxu0 0.0
      %595 = vmatprep.subr.mxu0 0.0
      %596 = vmatpush1.msra.mxu0 0.0
      %597 = vmatprep.subr.mxu0 0.0
      %598 = vmatpush1.msra.mxu0 0.0
      %599 = vmatprep.subr.mxu0 0.0
      %600 = vmatpush1.msra.mxu0 0.0
      %601 = vmatprep.subr.mxu0 0.0
      %602 = vmatpush1.msra.mxu0 0.0
      %603 = vmatprep.subr.mxu0 0.0
      %604 = vmatpush1.msra.mxu0 0.0
      %605 = vmatprep.subr.mxu0 0.0
      %606 = vmatpush1.msra.mxu0 0.0
      %607 = vmatprep.subr.mxu0 0.0
      %608 = vmatpush1.msra.mxu0 0.0
      %609 = vmatprep.subr.mxu0 0.0
      %610 = vmatpush1.msra.mxu0 0.0
      %611 = vmatprep.subr.mxu0 0.0
      %612 = vmatpush1.msra.mxu0 0.0
      %613 = vmatprep.subr.mxu0 0.0
      %614 = vmatpush1.msra.mxu0 0.0
      %615 = vmatprep.mubr.f32.mxu0 0.0
      %616 = vmatmul.mubr.f32.gmra.mrb[0].mxu0 %v470
      %v617 = vpop.f32.mrb[0].mxu0
      %v618 = vadd.f32 %v461, %v617
      %v619 = vpop.f32.mrb[0].mxu0
      %v620 = vadd.f32 %v463, %v619
      %621 = vdwg.mxu0
      %v622 = vld [vmem:[%s4] sm:$0xf]
      %624 = vset.pattern.permute.xlu0 0
      %625 = vperm.xlu0 %624, %v622
      %v626 = vpop.permute.xlu0 %625
      %v628 = vadd.f32 %v547, %v626
      %v629 = vadd.f32 %v549, %v626
      %v630 = vadd.f32 %v618, %v626
      %v631 = vadd.f32 %v620, %v626
      %v636 = vcombine.low %v628, %v629
      %v637 = vcombine.low %v630, %v631
      %640 = vst [vmem:[%s298] sm:$0xff] %v636
      %641 = vst [vmem:[%s298 + $0x8] sm:$0xff] %v637
      %s642 = smul.u32 4, %s21
      %p643 = scmp.lt.s32.totalorder %s20, 1
      %s644 = scalar_select %p643, %s20, 1
      %p645 = scmp.lt.s32.totalorder %s642, 7
      %s646 = scalar_select %p645, %s642, 7
      %s647 = smul.addr %s644, 8
      %s648 = sadd.s32 %s646, %s647
      %s649 = smul.addr %s648, 4
      %s650 = scalar_lea.vmem %s5, %s649
      // Predicated region
      $region41: #{multi_input_forward.3} parent=39 // pred_check
        %p651 = pneg %p167
      $region42: #{multi_input_forward.3} parent=39 // pred_check_branch
        %653 = sbr.rel (%p651) target = $region44
      $region43: #{multi_input_forward.3} parent=39 // pred_region
        %s654 = smul.u32 4, %s21
      $region44: #{multi_input_forward.3} parent=39 // pred_fallthru
        _
    $region40: #{multi_input_forward.3} parent=5 // pred_fallthru
      _
    %p655 = scmp.le.s32.totalorder 2, %s11
    // Predicated region
    $region45: #{multi_input_forward.3} parent=5 // pred_check
      %p656 = pneg %p655
    $region46: #{multi_input_forward.3} parent=5 // pred_check_branch
      %658 = sbr.rel (%p656) target = $region48
    $region47: #{multi_input_forward.3} parent=5 // pred_region
      %s659 = ssub.s32 %s11, 2
      // Predicated region
      $region49: #{multi_input_forward.3} parent=47 // pred_check
        %p660 = pneg %p173
      $region50: #{multi_input_forward.3} parent=47 // pred_check_branch
        %662 = sbr.rel (%p660) target = $region52
      $region51: #{multi_input_forward.3} parent=47 // pred_region
        %s663 = smul.u32 4, %s23
        %p664 = scmp.lt.s32.totalorder %s22, 1
        %s665 = scalar_select %p664, %s22, 1
        %p666 = scmp.lt.s32.totalorder %s663, 7
        %s667 = scalar_select %p666, %s663, 7
        %s668 = smul.addr %s665, 8
        %s669 = sadd.s32 %s667, %s668
        %s670 = smul.addr %s669, 4
        %s671 = scalar_lea.vmem %s5, %s670
      $region52: #{multi_input_forward.3} parent=47 // pred_fallthru
        _
    $region48: #{multi_input_forward.3} parent=5 // pred_fallthru
      _
  $region6: #{multi_input_forward.3} parent=0 // loop_footer
    %s15 = sadd.s32 1, %s11
  $region7: #{multi_input_forward.3} parent=0 // loop_footer_branch
    %10 = sbr.rel target = $region3
  $region8: #{multi_input_forward.3} parent=0 // loop_exit
    _

// kernel: multi_input_forward.2
$region0: #{multi_input_forward.2}
  #allocation0 [shape = 'u32[]', space=smem, size = 0x4, offset = 0x4, fixed_abs, tag = 'smem constant byte address 0x4 - core index']
  #allocation1 [shape = 'u32[144,128]{1,0:T(1,128)}', space=vmem, size = 0x12000, scoped, tag = 'internal scratch']
  %s0 = inlined_call_operand.vmem [shape: bf16[2,9,16,32], index: 0, kind: input, shape index: {}]
  %s1 = inlined_call_operand.vmem [shape: bf16[2,48,16], index: 1, kind: input, shape index: {}]
  %s2 = inlined_call_operand.vmem [shape: f32[27,4], index: 2, kind: input, shape index: {}]
  %s3 = inlined_call_operand.vmem [shape: f32[4], index: 3, kind: input, shape index: {}]
  %s4 = inlined_call_operand.vmem [shape: f32[2,4,32,32], index: 4, kind: output, shape index: {0}]
  %s5 = inlined_call_operand.vmem [shape: f32[2,2,4,2], index: 5, kind: output, shape index: {1}]
  %6 = xla_tuple %s4, %s5
  %s7 = sld [smem:[#allocation0]]
  $region99: #{multi_input_forward.2} parent=0
    _
  %s9 = ssub.s32 1, %s7
  %s10 = scalar_select 0, %s9, %s7
  $region1: #{multi_input_forward.2} parent=0
    #allocation2 [shape = 'u8[16384]{0}', space=smem, size = 0x4000, scoped, tag = 'input window, operand 2, single buffered']
    #allocation3 [shape = 's32[2]{0}', space=sflag, size = 0x8, scoped, tag = 'scoped memory for multi_input_forward.2']
    #allocation4 [shape = 'u8[512]{0}', space=smem, size = 0x200, scoped, tag = 'input window, operand 3, single buffered']
    #allocation5 [shape = 's32[1]{0}', space=sflag, size = 0x4, scoped, tag = 'scoped memory for multi_input_forward.2']
    #allocation6 [shape = 'u8[65536]{0}', space=vmem, size = 0x10000, scoped, tag = 'output window, operand 0']
    %11 = vsyncpa [#allocation3], 0
    %12 = vsyncpa [#allocation5], 0
    loop: start=0, step=1, limit=6
    $region2: #{multi_input_forward.2} parent=1 // loop_pre_header
      _
    $region3: #{multi_input_forward.2} parent=1 // loop_header
      %s14 = sphi 0, %s18
      %p15 = scmp.ge.s32.totalorder %s14, 6
      %s21 = sphi 0, %s33
      %s22 = sphi 0, %s29
      %s23 = sphi 0, %s21
      %s24 = sphi 0, %s22
      %s25 = sphi 0, %s23
      %s26 = sphi 0, %s24
      %s36 = sphi 0, %s38
      %s39 = sphi 0, %s36
      %s40 = sphi 0, %s39
      %s56 = sphi 0, %s40
      %s62 = sphi 0, %s64
      %s65 = sphi 0, %s62
      %s66 = sphi 0, %s65
      %s82 = sphi 0, %s66
      %s86 = sphi 0, %s86
      %s88 = sphi 0, %s86
      %s89 = sphi 0, %s88
      %s103 = sphi 0, %s89
      %s107 = sphi 0, %s107
      %s109 = sphi 0, %s107
      %s110 = sphi 0, %s109
      %s124 = sphi 0, %s110
      %s132 = sphi 0, %s134
      %s135 = sphi 0, %s132
      %s136 = sphi 0, %s135
      %s152 = sphi 0, %s136
      %s160 = sphi 0, %s162
      %s163 = sphi 0, %s160
      %s164 = sphi 0, %s163
      %s180 = sphi 0, %s164
    $region4: #{multi_input_forward.2} parent=1 // loop_header_branch
      %17 = sbr.rel (%p15) target = $region8
    $region5: #{multi_input_forward.2} parent=1 // loop_body
      %s19 = ssub.s32 %s14, 1
      %s20 = ssub.s32 %s14, 2
      %s27 = sadd.s32 1, %s22
      %p28 = scmp.ge.s32.totalorder %s27, 2
      %s29 = scalar_select %p28, 0, %s27
      %s30 = sadd.s32 1, %s21
      %s31 = scalar_select %p28, %s30, %s21
      %p32 = scmp.ge.s32.totalorder %s31, 2
      %s33 = scalar_select %p32, 0, %s31
      %s34 = ssub.s32 %s21, %s33
      %p35 = scmp.eq.s32.totalorder %s34, 0
      %s37 = sadd.s32 %s36, 1
      %s38 = scalar_select %p35, %s36, %s37
      %p41 = pneg %p35
      %p42 = scmp.eq.s32.totalorder %s14, 3
      %p43 = por %p41, %p42
      %p44 = scmp.ne.s32.totalorder %s36, %s39
      %p45 = scmp.eq.s32.totalorder %s14, 0
      %p46 = por %p44, %p45
      %p47 = scmp.ne.s32.totalorder %s36, %s39
      %p48 = scmp.eq.s32.totalorder %s19, 3
      %p49 = por %p47, %p48
      %p50 = scmp.ne.s32.totalorder %s39, %s40
      %p51 = scmp.eq.s32.totalorder %s19, 0
      %p52 = por %p50, %p51
      %p53 = scmp.ne.s32.totalorder %s39, %s40
      %p54 = scmp.eq.s32.totalorder %s20, 3
      %p55 = por %p53, %p54
      %p57 = scmp.ne.s32.totalorder %s40, %s56
      %p58 = scmp.eq.s32.totalorder %s20, 0
      %p59 = por %p57, %p58
      %s60 = ssub.s32 %s22, %s29
      %p61 = scmp.eq.s32.totalorder %s60, 0
      %s63 = sadd.s32 %s62, 1
      %s64 = scalar_select %p61, %s62, %s63
      %p67 = pneg %p61
      %p68 = scmp.eq.s32.totalorder %s14, 3
      %p69 = por %p67, %p68
      %p70 = scmp.ne.s32.totalorder %s62, %s65
      %p71 = scmp.eq.s32.totalorder %s14, 0
      %p72 = por %p70, %p71
      %p73 = scmp.ne.s32.totalorder %s62, %s65
      %p74 = scmp.eq.s32.totalorder %s19, 3
      %p75 = por %p73, %p74
      %p76 = scmp.ne.s32.totalorder %s65, %s66
      %p77 = scmp.eq.s32.totalorder %s19, 0
      %p78 = por %p76, %p77
      %p79 = scmp.ne.s32.totalorder %s65, %s66
      %p80 = scmp.eq.s32.totalorder %s20, 3
      %p81 = por %p79, %p80
      %p83 = scmp.ne.s32.totalorder %s66, %s82
      %p84 = scmp.eq.s32.totalorder %s20, 0
      %p85 = por %p83, %p84
      %s87 = sadd.s32 %s86, 1
      %p90 = scmp.eq.s32.totalorder %s14, 3
      %p91 = scmp.ne.s32.totalorder %s86, %s88
      %p92 = scmp.eq.s32.totalorder %s14, 0
      %p93 = por %p91, %p92
      %p94 = scmp.ne.s32.totalorder %s86, %s88
      %p95 = scmp.eq.s32.totalorder %s19, 3
      %p96 = por %p94, %p95
      %p97 = scmp.ne.s32.totalorder %s88, %s89
      %p98 = scmp.eq.s32.totalorder %s19, 0
      %p99 = por %p97, %p98
      %p100 = scmp.ne.s32.totalorder %s88, %s89
      %p101 = scmp.eq.s32.totalorder %s20, 3
      %p102 = por %p100, %p101
      %p104 = scmp.ne.s32.totalorder %s89, %s103
      %p105 = scmp.eq.s32.totalorder %s20, 0
      %p106 = por %p104, %p105
      %s108 = sadd.s32 %s107, 1
      %p111 = scmp.eq.s32.totalorder %s14, 3
      %p112 = scmp.ne.s32.totalorder %s107, %s109
      %p113 = scmp.eq.s32.totalorder %s14, 0
      %p114 = por %p112, %p113
      %p115 = scmp.ne.s32.totalorder %s107, %s109
      %p116 = scmp.eq.s32.totalorder %s19, 3
      %p117 = por %p115, %p116
      %p118 = scmp.ne.s32.totalorder %s109, %s110
      %p119 = scmp.eq.s32.totalorder %s19, 0
      %p120 = por %p118, %p119
      %p121 = scmp.ne.s32.totalorder %s109, %s110
      %p122 = scmp.eq.s32.totalorder %s20, 3
      %p123 = por %p121, %p122
      %p125 = scmp.ne.s32.totalorder %s110, %s124
      %p126 = scmp.eq.s32.totalorder %s20, 0
      %p127 = por %p125, %p126
      %s128 = ssub.s32 %s21, %s33
      %s129 = ssub.s32 %s22, %s29
      %s130 = sor.u32 %s128, %s129
      %p131 = scmp.eq.s32.totalorder %s130, 0
      %s133 = sadd.s32 %s132, 1
      %s134 = scalar_select %p131, %s132, %s133
      %p137 = pneg %p131
      %p138 = scmp.eq.s32.totalorder %s14, 3
      %p139 = por %p137, %p138
      %p140 = scmp.ne.s32.totalorder %s132, %s135
      %p141 = scmp.eq.s32.totalorder %s14, 0
      %p142 = por %p140, %p141
      %p143 = scmp.ne.s32.totalorder %s132, %s135
      %p144 = scmp.eq.s32.totalorder %s19, 3
      %p145 = por %p143, %p144
      %p146 = scmp.ne.s32.totalorder %s135, %s136
      %p147 = scmp.eq.s32.totalorder %s19, 0
      %p148 = por %p146, %p147
      %p149 = scmp.ne.s32.totalorder %s135, %s136
      %p150 = scmp.eq.s32.totalorder %s20, 3
      %p151 = por %p149, %p150
      %p153 = scmp.ne.s32.totalorder %s136, %s152
      %p154 = scmp.eq.s32.totalorder %s20, 0
      %p155 = por %p153, %p154
      %s156 = ssub.s32 %s21, %s33
      %s157 = ssub.s32 %s22, %s29
      %s158 = sor.u32 %s156, %s157
      %p159 = scmp.eq.s32.totalorder %s158, 0
      %s161 = sadd.s32 %s160, 1
      %s162 = scalar_select %p159, %s160, %s161
      %p165 = pneg %p159
      %p166 = scmp.eq.s32.totalorder %s14, 3
      %p167 = por %p165, %p166
      %p168 = scmp.ne.s32.totalorder %s160, %s163
      %p169 = scmp.eq.s32.totalorder %s14, 0
      %p170 = por %p168, %p169
      %p171 = scmp.ne.s32.totalorder %s160, %s163
      %p172 = scmp.eq.s32.totalorder %s19, 3
      %p173 = por %p171, %p172
      %p174 = scmp.ne.s32.totalorder %s163, %s164
      %p175 = scmp.eq.s32.totalorder %s19, 0
      %p176 = por %p174, %p175
      %p177 = scmp.ne.s32.totalorder %s163, %s164
      %p178 = scmp.eq.s32.totalorder %s20, 3
      %p179 = por %p177, %p178
      %p181 = scmp.ne.s32.totalorder %s164, %s180
      %p182 = scmp.eq.s32.totalorder %s20, 0
      %p183 = por %p181, %p182
      %p184 = scmp.le.s32.totalorder 1, %s14
      %p185 = scmp.lt.s32.totalorder %s14, 5
      %p186 = pnand %p184, %p185
      %p187 = pneg %p186
      // Predicated region
      $region9: #{multi_input_forward.2} parent=5 // pred_check
        _
      $region10: #{multi_input_forward.2} parent=5 // pred_check_branch
        %189 = sbr.rel (%p186) target = $region12
      $region11: #{multi_input_forward.2} parent=5 // pred_region
        %s190 = ssub.s32 %s14, 1
        // Predicated region
        $region13: #{multi_input_forward.2} parent=11 // pred_check
          %p191 = pneg %p99
        $region14: #{multi_input_forward.2} parent=11 // pred_check_branch
          %193 = sbr.rel (%p191) target = $region16
        $region15: #{multi_input_forward.2} parent=11 // pred_region
          %s195 = ssub.s32 512, 512
          %196 = vsyncadd [#allocation3], %s195
          %s197 = sshll.u32 %s2, 4
          %s198 = int_to_ptr.vmem [resolvable:$true] %s197
          %203 = dma.vmem_to_smem %s198, 512, [#allocation2], [#allocation3], 128, 128, 8
        $region16: #{multi_input_forward.2} parent=11 // pred_fallthru
          _
        // Predicated region
        $region17: #{multi_input_forward.2} parent=11 // pred_check
          %p204 = pneg %p120
        $region18: #{multi_input_forward.2} parent=11 // pred_check_branch
          %206 = sbr.rel (%p204) target = $region20
        $region19: #{multi_input_forward.2} parent=11 // pred_region
          %s208 = ssub.s32 16, 16
          %209 = vsyncadd [#allocation5], %s208
          %s211 = sshll.u32 %s3, 4
          %s212 = int_to_ptr.vmem [resolvable:$true] %s211
          %214 = dma.vmem_to_smem %s212, 16, [#allocation4], [#allocation5]
        $region20: #{multi_input_forward.2} parent=11 // pred_fallthru
          _
      $region12: #{multi_input_forward.2} parent=5 // pred_fallthru
        _
      %p215 = scmp.lt.s32.totalorder %s14, 4
      // Predicated region
      $region21: #{multi_input_forward.2} parent=5 // pred_check
        %p216 = pneg %p215
      $region22: #{multi_input_forward.2} parent=5 // pred_check_branch
        %218 = sbr.rel (%p216) target = $region24
      $region23: #{multi_input_forward.2} parent=5 // pred_region
        // Predicated region
        $region25: #{multi_input_forward.2} parent=23 // pred_check
          %p219 = pneg %p46
        $region26: #{multi_input_forward.2} parent=23 // pred_check_branch
          %221 = sbr.rel (%p219) target = $region28
        $region27: #{multi_input_forward.2} parent=23 // pred_region
          %p222 = scmp.lt.s32.totalorder %s21, 1
          %s223 = scalar_select %p222, %s21, 1
          %s224 = smul.addr %s223, 18
          %s225 = smul.addr %s224, 4
          %s226 = scalar_lea.vmem %s0, %s225
        $region28: #{multi_input_forward.2} parent=23 // pred_fallthru
          _
        // Predicated region
        $region29: #{multi_input_forward.2} parent=23 // pred_check
          %p227 = pneg %p72
        $region30: #{multi_input_forward.2} parent=23 // pred_check_branch
          %229 = sbr.rel (%p227) target = $region32
        $region31: #{multi_input_forward.2} parent=23 // pred_region
          %p230 = scmp.lt.s32.totalorder %s22, 1
          %s231 = scalar_select %p230, %s22, 1
          %s232 = smul.addr %s231, 6
          %s233 = smul.addr %s232, 4
          %s234 = scalar_lea.vmem %s1, %s233
        $region32: #{multi_input_forward.2} parent=23 // pred_fallthru
          _
      $region24: #{multi_input_forward.2} parent=5 // pred_fallthru
        _
      %p235 = scmp.le.s32.totalorder 1, %s14
      %p236 = scmp.lt.s32.totalorder %s14, 5
      %p237 = pnand %p235, %p236
      %p238 = pneg %p237
      // Predicated region
      $region33: #{multi_input_forward.2} parent=5 // pred_check
        _
      $region34: #{multi_input_forward.2} parent=5 // pred_check_branch
        %240 = sbr.rel (%p237) target = $region36
      $region35: #{multi_input_forward.2} parent=5 // pred_region
        %s241 = ssub.s32 %s14, 1
        // Predicated region
        $region37: #{multi_input_forward.2} parent=35 // pred_check
          %p242 = pneg %p99
        $region38: #{multi_input_forward.2} parent=35 // pred_check_branch
          %244 = sbr.rel (%p242) target = $region40
        $region39: #{multi_input_forward.2} parent=35 // pred_region
          %245 = dma.done [#allocation3], 512
        $region40: #{multi_input_forward.2} parent=35 // pred_fallthru
          _
        // Predicated region
        $region41: #{multi_input_forward.2} parent=35 // pred_check
          %p246 = pneg %p120
        $region42: #{multi_input_forward.2} parent=35 // pred_check_branch
          %248 = sbr.rel (%p246) target = $region44
        $region43: #{multi_input_forward.2} parent=35 // pred_region
          %249 = dma.done [#allocation5], 16
        $region44: #{multi_input_forward.2} parent=35 // pred_fallthru
          _
        %250 = sfence
        %p251 = scmp.lt.s32.totalorder %s23, 1
        %s252 = scalar_select %p251, %s23, 1
        %s253 = smul.addr %s252, 18
        %s254 = smul.addr %s253, 4
        %s255 = scalar_lea.vmem %s0, %s254
        %p256 = pneg %p52
        %p257 = pneg %p49
        %p258 = scmp.lt.s32.totalorder %s24, 1
        %s259 = scalar_select %p258, %s24, 1
        %s260 = smul.addr %s259, 6
        %s261 = smul.addr %s260, 4
        %s262 = scalar_lea.vmem %s1, %s261
        %p263 = pneg %p78
        %p264 = pneg %p75
        %p265 = pneg %p99
        %p266 = pneg %p96
        %p267 = pneg %p120
        %p268 = pneg %p117
        %p269 = pneg %p148
        %p270 = pneg %p145
        %s271 = sand.u32 %s135, 1
        %s272 = sand.u32 %s135, 1
        %s273 = smul.addr %s272, 64
        %s274 = scalar_lea.vmem [#allocation6], %s273
        %p275 = pneg %p176
        %p276 = pneg %p173
        %p277 = scmp.lt.s32.totalorder %s23, 1
        %s278 = scalar_select %p277, %s23, 1
        %p279 = scmp.lt.s32.totalorder %s24, 1
        %s280 = scalar_select %p279, %s24, 1
        %s281 = smul.addr %s278, 2
        %s282 = sadd.s32 %s280, %s281
        %s283 = smul.addr %s282, 4
        %s284 = scalar_lea.vmem %s5, %s283
        %p285 = scmp.lt.s32.totalorder %s23, 1
        %s286 = scalar_select %p285, %s23, 1
        %s287 = smul.addr %s286, 18
        %s288 = smul.addr %s287, 4
        %s289 = scalar_lea.vmem %s0, %s288
        %p290 = scmp.lt.s32.totalorder %s24, 1
        %s291 = scalar_select %p290, %s24, 1
        %s292 = smul.addr %s291, 6
        %s293 = smul.addr %s292, 4
        %s294 = scalar_lea.vmem %s1, %s293
        %s295 = smul.u32 2, %s24
        %p296 = scmp.lt.s32.totalorder %s23, 1
        %s297 = scalar_select %p296, %s23, 1
        %p298 = scmp.lt.s32.totalorder %s24, 1
        %s299 = scalar_select %p298, %s24, 1
        %s300 = smul.addr %s297, 2
        %s301 = sadd.s32 %s299, %s300
        %s302 = smul.addr %s301, 4
        %s303 = scalar_lea.vmem %s5, %s302
        %v305 = vld [vmem:[%s294] sm:$0xf]
        %v306 = vld [vmem:[%s294 + $0x4] sm:$0xf]
        %v307 = vld [vmem:[%s294 + $0x8] sm:$0xf]
        %v308 = vld [vmem:[%s294 + $0xc] sm:$0xf]
        %v309 = vld [vmem:[%s294 + $0x10] sm:$0xf]
        %v310 = vld [vmem:[%s294 + $0x14] sm:$0xf]
        %v311 = vld [vmem:[%s289] sm:$0xf]
        %v312 = vld [vmem:[%s289 + $0x4] sm:$0xf]
        %v319 = vunpack.c.l.b16 %v305
        %v320 = vunpack.c.l.b16 %v306
        %v321 = vunpack.c.l.b16 %v307
        %v322 = vunpack.c.l.b16 %v308
        %v323 = vunpack.c.l.b16 %v309
        %v324 = vunpack.c.l.b16 %v310
        %v325 = vpack.c.b16 %v320, %v319
        %v326 = vpack.c.b16 %v322, %v321
        %v327 = vpack.c.b16 %v324, %v323
        %v330 = vunpack.c.l.b16 %v311
        %v331 = vunpack.c.l.b16 %v312
        %v332 = vpack.c.b16 %v331, %v330
        %vm334 = vcmask 130048
        %v336 = vsel %vm334, %v325, 0
        %v339 = vsel %vm334, %v326, 0
        %v342 = vsel %vm334, %v327, 0
        %344 = vmatprep.subr.bf16.mxu0 0
        %345 = vmatpush1.bf16.msra.mxu0 %v332
        %346 = vmatprep.subr.bf16.mxu0 0
        %347 = vmatpush1.bf16.msra.mxu0 0
        %348 = vmatprep.subr.bf16.mxu0 0
        %349 = vmatpush1.bf16.msra.mxu0 0
        %350 = vmatprep.subr.bf16.mxu0 0
        %351 = vmatpush1.bf16.msra.mxu0 0
        %352 = vmatprep.subr.bf16.mxu0 0
        %353 = vmatpush1.bf16.msra.mxu0 0
        %354 = vmatprep.subr.bf16.mxu0 0
        %355 = vmatpush1.bf16.msra.mxu0 0
        %356 = vmatprep.subr.bf16.mxu0 0
        %357 = vmatpush1.bf16.msra.mxu0 0
        %358 = vmatprep.subr.bf16.mxu0 0
        %359 = vmatpush1.bf16.msra.mxu0 0
        %360 = vmatprep.subr.bf16.mxu0 0
        %361 = vmatpush1.bf16.msra.mxu0 0
        %362 = vmatprep.subr.bf16.mxu0 0
        %363 = vmatpush1.bf16.msra.mxu0 0
        %364 = vmatprep.subr.bf16.mxu0 0
        %365 = vmatpush1.bf16.msra.mxu0 0
        %366 = vmatprep.subr.bf16.mxu0 0
        %367 = vmatpush1.bf16.msra.mxu0 0
        %368 = vmatprep.subr.bf16.mxu0 0
        %369 = vmatpush1.bf16.msra.mxu0 0
        %370 = vmatprep.subr.bf16.mxu0 0
        %371 = vmatpush1.bf16.msra.mxu0 0
        %372 = vmatprep.subr.bf16.mxu0 0
        %373 = vmatpush1.bf16.msra.mxu0 0
        %374 = vmatprep.subr.bf16.mxu0 0
        %375 = vmatpush1.bf16.msra.mxu0 0
        %376 = vmatprep.mubr.bf16.mxu0 0
        %377 = vmatmul.mubr.bf16.gmra.mrb[0].mxu0 %v336
        %v378 = vpop.f32.mrb[0].mxu0
        %v379 = vadd.f32 0.0, %v378
        %v380 = vpop.f32.mrb[0].mxu0
        %v381 = vpop.f32.mrb[0].mxu0
        %v382 = vadd.f32 0.0, %v381
        %v383 = vpop.f32.mrb[0].mxu0
        %384 = vmatprep.mubr.bf16.mxu0 0
        %385 = vmatmul.mubr.bf16.gmra.mrb[0].mxu0 %v339
        %v386 = vpop.f32.mrb[0].mxu0
        %v387 = vadd.f32 0.0, %v386
        %v388 = vpop.f32.mrb[0].mxu0
        %v389 = vpop.f32.mrb[0].mxu0
        %v390 = vadd.f32 0.0, %v389
        %v391 = vpop.f32.mrb[0].mxu0
        %392 = vmatprep.mubr.bf16.mxu0 0
        %393 = vmatmul.mubr.bf16.gmra.mrb[0].mxu0 %v342
        %v394 = vpop.f32.mrb[0].mxu0
        %v395 = vadd.f32 0.0, %v394
        %v396 = vpop.f32.mrb[0].mxu0
        %v397 = vpop.f32.mrb[0].mxu0
        %v398 = vadd.f32 0.0, %v397
        %v399 = vpop.f32.mrb[0].mxu0
        %400 = vdwg.mxu0
        %s401 = scalar_lea.vmem %s289, 8
        %v402 = vld [vmem:[%s401] sm:$0xf]
        %v403 = vld [vmem:[%s401 + $0x4] sm:$0xf]
        %v406 = vunpack.c.l.b16 %v402
        %v407 = vunpack.c.l.b16 %v403
        %v408 = vpack.c.b16 %v407, %v406
        %410 = vmatprep.subr.bf16.mxu0 0
        %411 = vmatpush1.bf16.msra.mxu0 %v408
        %412 = vmatprep.subr.bf16.mxu0 0
        %413 = vmatpush1.bf16.msra.mxu0 0
        %414 = vmatprep.subr.bf16.mxu0 0
        %415 = vmatpush1.bf16.msra.mxu0 0
        %416 = vmatprep.subr.bf16.mxu0 0
        %417 = vmatpush1.bf16.msra.mxu0 0
        %418 = vmatprep.subr.bf16.mxu0 0
        %419 = vmatpush1.bf16.msra.mxu0 0
        %420 = vmatprep.subr.bf16.mxu0 0
        %421 = vmatpush1.bf16.msra.mxu0 0
        %422 = vmatprep.subr.bf16.mxu0 0
        %423 = vmatpush1.bf16.msra.mxu0 0
        %424 = vmatprep.subr.bf16.mxu0 0
        %425 = vmatpush1.bf16.msra.mxu0 0
        %426 = vmatprep.subr.bf16.mxu0 0
        %427 = vmatpush1.bf16.msra.mxu0 0
        %428 = vmatprep.subr.bf16.mxu0 0
        %429 = vmatpush1.bf16.msra.mxu0 0
        %430 = vmatprep.subr.bf16.mxu0 0
        %431 = vmatpush1.bf16.msra.mxu0 0
        %432 = vmatprep.subr.bf16.mxu0 0
        %433 = vmatpush1.bf16.msra.mxu0 0
        %434 = vmatprep.subr.bf16.mxu0 0
        %435 = vmatpush1.bf16.msra.mxu0 0
        %436 = vmatprep.subr.bf16.mxu0 0
        %437 = vmatpush1.bf16.msra.mxu0 0
        %438 = vmatprep.subr.bf16.mxu0 0
        %439 = vmatpush1.bf16.msra.mxu0 0
        %440 = vmatprep.subr.bf16.mxu0 0
        %441 = vmatpush1.bf16.msra.mxu0 0
        %442 = vmatprep.mubr.bf16.mxu0 0
        %443 = vmatmul.mubr.bf16.gmra.mrb[0].mxu0 %v336
        %v444 = vpop.f32.mrb[0].mxu0
        %v445 = vadd.f32 0.0, %v444
        %v446 = vpop.f32.mrb[0].mxu0
        %v447 = vpop.f32.mrb[0].mxu0
        %v448 = vadd.f32 0.0, %v447
        %v449 = vpop.f32.mrb[0].mxu0
        %450 = vmatprep.mubr.bf16.mxu0 0
        %451 = vmatmul.mubr.bf16.gmra.mrb[0].mxu0 %v339
        %v452 = vpop.f32.mrb[0].mxu0
        %v453 = vadd.f32 0.0, %v452
        %v454 = vpop.f32.mrb[0].mxu0
        %v455 = vpop.f32.mrb[0].mxu0
        %v456 = vadd.f32 0.0, %v455
        %v457 = vpop.f32.mrb[0].mxu0
        %458 = vmatprep.mubr.bf16.mxu0 0
        %459 = vmatmul.mubr.bf16.gmra.mrb[0].mxu0 %v342
        %v460 = vpop.f32.mrb[0].mxu0
        %v461 = vadd.f32 0.0, %v460
        %v462 = vpop.f32.mrb[0].mxu0
        %v463 = vpop.f32.mrb[0].mxu0
        %v464 = vadd.f32 0.0, %v463
        %v465 = vpop.f32.mrb[0].mxu0
        %466 = vdwg.mxu0
        %s467 = scalar_lea.vmem %s289, 16
        %v468 = vld [vmem:[%s467] sm:$0xf]
        %v469 = vld [vmem:[%s467 + $0x4] sm:$0xf]
        %v472 = vunpack.c.l.b16 %v468
        %v473 = vunpack.c.l.b16 %v469
        %v474 = vpack.c.b16 %v473, %v472
        %476 = vmatprep.subr.bf16.mxu0 0
        %477 = vmatpush1.bf16.msra.mxu0 %v474
        %478 = vmatprep.subr.bf16.mxu0 0
        %479 = vmatpush1.bf16.msra.mxu0 0
        %480 = vmatprep.subr.bf16.mxu0 0
        %481 = vmatpush1.bf16.msra.mxu0 0
        %482 = vmatprep.subr.bf16.mxu0 0
        %483 = vmatpush1.bf16.msra.mxu0 0
        %484 = vmatprep.subr.bf16.mxu0 0
        %485 = vmatpush1.bf16.msra.mxu0 0
        %486 = vmatprep.subr.bf16.mxu0 0
        %487 = vmatpush1.bf16.msra.mxu0 0
        %488 = vmatprep.subr.bf16.mxu0 0
        %489 = vmatpush1.bf16.msra.mxu0 0
        %490 = vmatprep.subr.bf16.mxu0 0
        %491 = vmatpush1.bf16.msra.mxu0 0
        %492 = vmatprep.subr.bf16.mxu0 0
        %493 = vmatpush1.bf16.msra.mxu0 0
        %494 = vmatprep.subr.bf16.mxu0 0
        %495 = vmatpush1.bf16.msra.mxu0 0
        %496 = vmatprep.subr.bf16.mxu0 0
        %497 = vmatpush1.bf16.msra.mxu0 0
        %498 = vmatprep.subr.bf16.mxu0 0
        %499 = vmatpush1.bf16.msra.mxu0 0
        %500 = vmatprep.subr.bf16.mxu0 0
        %501 = vmatpush1.bf16.msra.mxu0 0
        %502 = vmatprep.subr.bf16.mxu0 0
        %503 = vmatpush1.bf16.msra.mxu0 0
        %504 = vmatprep.subr.bf16.mxu0 0
        %505 = vmatpush1.bf16.msra.mxu0 0
        %506 = vmatprep.subr.bf16.mxu0 0
        %507 = vmatpush1.bf16.msra.mxu0 0
        %508 = vmatprep.mubr.bf16.mxu0 0
        %509 = vmatmul.mubr.bf16.gmra.mrb[0].mxu0 %v336
        %v510 = vpop.f32.mrb[0].mxu0
        %v511 = vadd.f32 0.0, %v510
        %v512 = vpop.f32.mrb[0].mxu0
        %v513 = vpop.f32.mrb[0].mxu0
        %v514 = vadd.f32 0.0, %v513
        %v515 = vpop.f32.mrb[0].mxu0
        %516 = vmatprep.mubr.bf16.mxu0 0
        %517 = vmatmul.mubr.bf16.gmra.mrb[0].mxu0 %v339
        %v518 = vpop.f32.mrb[0].mxu0
        %v519 = vadd.f32 0.0, %v518
        %v520 = vpop.f32.mrb[0].mxu0
        %v521 = vpop.f32.mrb[0].mxu0
        %v522 = vadd.f32 0.0, %v521
        %v523 = vpop.f32.mrb[0].mxu0
        %524 = vmatprep.mubr.bf16.mxu0 0
        %525 = vmatmul.mubr.bf16.gmra.mrb[0].mxu0 %v342
        %v526 = vpop.f32.mrb[0].mxu0
        %v527 = vadd.f32 0.0, %v526
        %v528 = vpop.f32.mrb[0].mxu0
        %v529 = vpop.f32.mrb[0].mxu0
        %v530 = vadd.f32 0.0, %v529
        %v531 = vpop.f32.mrb[0].mxu0
        %532 = vdwg.mxu0
        %s533 = scalar_lea.vmem %s289, 24
        %v534 = vld [vmem:[%s533] sm:$0xf]
        %v535 = vld [vmem:[%s533 + $0x4] sm:$0xf]
        %v538 = vunpack.c.l.b16 %v534
        %v539 = vunpack.c.l.b16 %v535
        %v540 = vpack.c.b16 %v539, %v538
        %542 = vmatprep.subr.bf16.mxu0 0
        %543 = vmatpush1.bf16.msra.mxu0 %v540
        %544 = vmatprep.subr.bf16.mxu0 0
        %545 = vmatpush1.bf16.msra.mxu0 0
        %546 = vmatprep.subr.bf16.mxu0 0
        %547 = vmatpush1.bf16.msra.mxu0 0
        %548 = vmatprep.subr.bf16.mxu0 0
        %549 = vmatpush1.bf16.msra.mxu0 0
        %550 = vmatprep.subr.bf16.mxu0 0
        %551 = vmatpush1.bf16.msra.mxu0 0
        %552 = vmatprep.subr.bf16.mxu0 0
        %553 = vmatpush1.bf16.msra.mxu0 0
        %554 = vmatprep.subr.bf16.mxu0 0
        %555 = vmatpush1.bf16.msra.mxu0 0
        %556 = vmatprep.subr.bf16.mxu0 0
        %557 = vmatpush1.bf16.msra.mxu0 0
        %558 = vmatprep.subr.bf16.mxu0 0
        %559 = vmatpush1.bf16.msra.mxu0 0
        %560 = vmatprep.subr.bf16.mxu0 0
        %561 = vmatpush1.bf16.msra.mxu0 0
        %562 = vmatprep.subr.bf16.mxu0 0
        %563 = vmatpush1.bf16.msra.mxu0 0
        %564 = vmatprep.subr.bf16.mxu0 0
        %565 = vmatpush1.bf16.msra.mxu0 0
        %566 = vmatprep.subr.bf16.mxu0 0
        %567 = vmatpush1.bf16.msra.mxu0 0
        %568 = vmatprep.subr.bf16.mxu0 0
        %569 = vmatpush1.bf16.msra.mxu0 0
        %570 = vmatprep.subr.bf16.mxu0 0
        %571 = vmatpush1.bf16.msra.mxu0 0
        %572 = vmatprep.subr.bf16.mxu0 0
        %573 = vmatpush1.bf16.msra.mxu0 0
        %574 = vmatprep.mubr.bf16.mxu0 0
        %575 = vmatmul.mubr.bf16.gmra.mrb[0].mxu0 %v336
        %v576 = vpop.f32.mrb[0].mxu0
        %v577 = vadd.f32 0.0, %v576
        %v578 = vpop.f32.mrb[0].mxu0
        %v579 = vpop.f32.mrb[0].mxu0
        %v580 = vadd.f32 0.0, %v579
        %v581 = vpop.f32.mrb[0].mxu0
        %582 = vmatprep.mubr.bf16.mxu0 0
        %583 = vmatmul.mubr.bf16.gmra.mrb[0].mxu0 %v339
        %v584 = vpop.f32.mrb[0].mxu0
        %v585 = vadd.f32 0.0, %v584
        %v586 = vpop.f32.mrb[0].mxu0
        %v587 = vpop.f32.mrb[0].mxu0
        %v588 = vadd.f32 0.0, %v587
        %v589 = vpop.f32.mrb[0].mxu0
        %590 = vmatprep.mubr.bf16.mxu0 0
        %591 = vmatmul.mubr.bf16.gmra.mrb[0].mxu0 %v342
        %v592 = vpop.f32.mrb[0].mxu0
        %v593 = vadd.f32 0.0, %v592
        %v594 = vpop.f32.mrb[0].mxu0
        %v595 = vpop.f32.mrb[0].mxu0
        %v596 = vadd.f32 0.0, %v595
        %v597 = vpop.f32.mrb[0].mxu0
        %598 = vdwg.mxu0
        %s599 = scalar_lea.vmem %s289, 32
        %v600 = vld [vmem:[%s599] sm:$0xf]
        %v601 = vld [vmem:[%s599 + $0x4] sm:$0xf]
        %v604 = vunpack.c.l.b16 %v600
        %v605 = vunpack.c.l.b16 %v601
        %v606 = vpack.c.b16 %v605, %v604
        %608 = vmatprep.subr.bf16.mxu0 0
        %609 = vmatpush1.bf16.msra.mxu0 %v606
        %610 = vmatprep.subr.bf16.mxu0 0
        %611 = vmatpush1.bf16.msra.mxu0 0
        %612 = vmatprep.subr.bf16.mxu0 0
        %613 = vmatpush1.bf16.msra.mxu0 0
        %614 = vmatprep.subr.bf16.mxu0 0
        %615 = vmatpush1.bf16.msra.mxu0 0
        %616 = vmatprep.subr.bf16.mxu0 0
        %617 = vmatpush1.bf16.msra.mxu0 0
        %618 = vmatprep.subr.bf16.mxu0 0
        %619 = vmatpush1.bf16.msra.mxu0 0
        %620 = vmatprep.subr.bf16.mxu0 0
        %621 = vmatpush1.bf16.msra.mxu0 0
        %622 = vmatprep.subr.bf16.mxu0 0
        %623 = vmatpush1.bf16.msra.mxu0 0
        %624 = vmatprep.subr.bf16.mxu0 0
        %625 = vmatpush1.bf16.msra.mxu0 0
        %626 = vmatprep.subr.bf16.mxu0 0
        %627 = vmatpush1.bf16.msra.mxu0 0
        %628 = vmatprep.subr.bf16.mxu0 0
        %629 = vmatpush1.bf16.msra.mxu0 0
        %630 = vmatprep.subr.bf16.mxu0 0
        %631 = vmatpush1.bf16.msra.mxu0 0
        %632 = vmatprep.subr.bf16.mxu0 0
        %633 = vmatpush1.bf16.msra.mxu0 0
        %634 = vmatprep.subr.bf16.mxu0 0
        %635 = vmatpush1.bf16.msra.mxu0 0
        %636 = vmatprep.subr.bf16.mxu0 0
        %637 = vmatpush1.bf16.msra.mxu0 0
        %638 = vmatprep.subr.bf16.mxu0 0
        %639 = vmatpush1.bf16.msra.mxu0 0
        %640 = vmatprep.mubr.bf16.mxu0 0
        %641 = vmatmul.mubr.bf16.gmra.mrb[0].mxu0 %v336
        %v642 = vpop.f32.mrb[0].mxu0
        %v643 = vadd.f32 0.0, %v642
        %v644 = vpop.f32.mrb[0].mxu0
        %v645 = vpop.f32.mrb[0].mxu0
        %v646 = vadd.f32 0.0, %v645
        %v647 = vpop.f32.mrb[0].mxu0
        %648 = vmatprep.mubr.bf16.mxu0 0
        %649 = vmatmul.mubr.bf16.gmra.mrb[0].mxu0 %v339
        %v650 = vpop.f32.mrb[0].mxu0
        %v651 = vadd.f32 0.0, %v650
        %v652 = vpop.f32.mrb[0].mxu0
        %v653 = vpop.f32.mrb[0].mxu0
        %v654 = vadd.f32 0.0, %v653
        %v655 = vpop.f32.mrb[0].mxu0
        %656 = vmatprep.mubr.bf16.mxu0 0
        %657 = vmatmul.mubr.bf16.gmra.mrb[0].mxu0 %v342
        %v658 = vpop.f32.mrb[0].mxu0
        %v659 = vadd.f32 0.0, %v658
        %v660 = vpop.f32.mrb[0].mxu0
        %v661 = vpop.f32.mrb[0].mxu0
        %v662 = vadd.f32 0.0, %v661
        %v663 = vpop.f32.mrb[0].mxu0
        %664 = vdwg.mxu0
        %s665 = scalar_lea.vmem %s289, 40
        %v666 = vld [vmem:[%s665] sm:$0xf]
        %v667 = vld [vmem:[%s665 + $0x4] sm:$0xf]
        %v670 = vunpack.c.l.b16 %v666
        %v671 = vunpack.c.l.b16 %v667
        %v672 = vpack.c.b16 %v671, %v670
        %674 = vmatprep.subr.bf16.mxu0 0
        %675 = vmatpush1.bf16.msra.mxu0 %v672
        %676 = vmatprep.subr.bf16.mxu0 0
        %677 = vmatpush1.bf16.msra.mxu0 0
        %678 = vmatprep.subr.bf16.mxu0 0
        %679 = vmatpush1.bf16.msra.mxu0 0
        %680 = vmatprep.subr.bf16.mxu0 0
        %681 = vmatpush1.bf16.msra.mxu0 0
        %682 = vmatprep.subr.bf16.mxu0 0
        %683 = vmatpush1.bf16.msra.mxu0 0
        %684 = vmatprep.subr.bf16.mxu0 0
        %685 = vmatpush1.bf16.msra.mxu0 0
        %686 = vmatprep.subr.bf16.mxu0 0
        %687 = vmatpush1.bf16.msra.mxu0 0
        %688 = vmatprep.subr.bf16.mxu0 0
        %689 = vmatpush1.bf16.msra.mxu0 0
        %690 = vmatprep.subr.bf16.mxu0 0
        %691 = vmatpush1.bf16.msra.mxu0 0
        %692 = vmatprep.subr.bf16.mxu0 0
        %693 = vmatpush1.bf16.msra.mxu0 0
        %694 = vmatprep.subr.bf16.mxu0 0
        %695 = vmatpush1.bf16.msra.mxu0 0
        %696 = vmatprep.subr.bf16.mxu0 0
        %697 = vmatpush1.bf16.msra.mxu0 0
        %698 = vmatprep.subr.bf16.mxu0 0
        %699 = vmatpush1.bf16.msra.mxu0 0
        %700 = vmatprep.subr.bf16.mxu0 0
        %701 = vmatpush1.bf16.msra.mxu0 0
        %702 = vmatprep.subr.bf16.mxu0 0
        %703 = vmatpush1.bf16.msra.mxu0 0
        %704 = vmatprep.subr.bf16.mxu0 0
        %705 = vmatpush1.bf16.msra.mxu0 0
        %706 = vmatprep.mubr.bf16.mxu0 0
        %707 = vmatmul.mubr.bf16.gmra.mrb[0].mxu0 %v336
        %v708 = vpop.f32.mrb[0].mxu0
        %v709 = vadd.f32 0.0, %v708
        %v710 = vpop.f32.mrb[0].mxu0
        %v711 = vpop.f32.mrb[0].mxu0
        %v712 = vadd.f32 0.0, %v711
        %v713 = vpop.f32.mrb[0].mxu0
        %714 = vmatprep.mubr.bf16.mxu0 0
        %715 = vmatmul.mubr.bf16.gmra.mrb[0].mxu0 %v339
        %v716 = vpop.f32.mrb[0].mxu0
        %v717 = vadd.f32 0.0, %v716
        %v718 = vpop.f32.mrb[0].mxu0
        %v719 = vpop.f32.mrb[0].mxu0
        %v720 = vadd.f32 0.0, %v719
        %v721 = vpop.f32.mrb[0].mxu0
        %722 = vmatprep.mubr.bf16.mxu0 0
        %723 = vmatmul.mubr.bf16.gmra.mrb[0].mxu0 %v342
        %v724 = vpop.f32.mrb[0].mxu0
        %v725 = vadd.f32 0.0, %v724
        %v726 = vpop.f32.mrb[0].mxu0
        %v727 = vpop.f32.mrb[0].mxu0
        %v728 = vadd.f32 0.0, %v727
        %v729 = vpop.f32.mrb[0].mxu0
        %730 = vdwg.mxu0
        %s731 = scalar_lea.vmem %s289, 48
        %v732 = vld [vmem:[%s731] sm:$0xf]
        %v733 = vld [vmem:[%s731 + $0x4] sm:$0xf]
        %v736 = vunpack.c.l.b16 %v732
        %v737 = vunpack.c.l.b16 %v733
        %v738 = vpack.c.b16 %v737, %v736
        %740 = vmatprep.subr.bf16.mxu0 0
        %741 = vmatpush1.bf16.msra.mxu0 %v738
        %742 = vmatprep.subr.bf16.mxu0 0
        %743 = vmatpush1.bf16.msra.mxu0 0
        %744 = vmatprep.subr.bf16.mxu0 0
        %745 = vmatpush1.bf16.msra.mxu0 0
        %746 = vmatprep.subr.bf16.mxu0 0
        %747 = vmatpush1.bf16.msra.mxu0 0
        %748 = vmatprep.subr.bf16.mxu0 0
        %749 = vmatpush1.bf16.msra.mxu0 0
        %750 = vmatprep.subr.bf16.mxu0 0
        %751 = vmatpush1.bf16.msra.mxu0 0
        %752 = vmatprep.subr.bf16.mxu0 0
        %753 = vmatpush1.bf16.msra.mxu0 0
        %754 = vmatprep.subr.bf16.mxu0 0
        %755 = vmatpush1.bf16.msra.mxu0 0
        %756 = vmatprep.subr.bf16.mxu0 0
        %757 = vmatpush1.bf16.msra.mxu0 0
        %758 = vmatprep.subr.bf16.mxu0 0
        %759 = vmatpush1.bf16.msra.mxu0 0
        %760 = vmatprep.subr.bf16.mxu0 0
        %761 = vmatpush1.bf16.msra.mxu0 0
        %762 = vmatprep.subr.bf16.mxu0 0
        %763 = vmatpush1.bf16.msra.mxu0 0
        %764 = vmatprep.subr.bf16.mxu0 0
        %765 = vmatpush1.bf16.msra.mxu0 0
        %766 = vmatprep.subr.bf16.mxu0 0
        %767 = vmatpush1.bf16.msra.mxu0 0
        %768 = vmatprep.subr.bf16.mxu0 0
        %769 = vmatpush1.bf16.msra.mxu0 0
        %770 = vmatprep.subr.bf16.mxu0 0
        %771 = vmatpush1.bf16.msra.mxu0 0
        %772 = vmatprep.mubr.bf16.mxu0 0
        %773 = vmatmul.mubr.bf16.gmra.mrb[0].mxu0 %v336
        %v774 = vpop.f32.mrb[0].mxu0
        %v775 = vadd.f32 0.0, %v774
        %v776 = vpop.f32.mrb[0].mxu0
        %v777 = vpop.f32.mrb[0].mxu0
        %v778 = vadd.f32 0.0, %v777
        %v779 = vpop.f32.mrb[0].mxu0
        %780 = vmatprep.mubr.bf16.mxu0 0
        %781 = vmatmul.mubr.bf16.gmra.mrb[0].mxu0 %v339
        %v782 = vpop.f32.mrb[0].mxu0
        %v783 = vadd.f32 0.0, %v782
        %v784 = vpop.f32.mrb[0].mxu0
        %v785 = vpop.f32.mrb[0].mxu0
        %v786 = vadd.f32 0.0, %v785
        %v787 = vpop.f32.mrb[0].mxu0
        %788 = vmatprep.mubr.bf16.mxu0 0
        %789 = vmatmul.mubr.bf16.gmra.mrb[0].mxu0 %v342
        %v790 = vpop.f32.mrb[0].mxu0
        %v791 = vadd.f32 0.0, %v790
        %v792 = vpop.f32.mrb[0].mxu0
        %v793 = vpop.f32.mrb[0].mxu0
        %v794 = vadd.f32 0.0, %v793
        %v795 = vpop.f32.mrb[0].mxu0
        %796 = vdwg.mxu0
        %s797 = scalar_lea.vmem %s289, 56
        %v798 = vld [vmem:[%s797] sm:$0xf]
        %v799 = vld [vmem:[%s797 + $0x4] sm:$0xf]
        %v802 = vunpack.c.l.b16 %v798
        %v803 = vunpack.c.l.b16 %v799
        %v804 = vpack.c.b16 %v803, %v802
        %806 = vmatprep.subr.bf16.mxu0 0
        %807 = vmatpush1.bf16.msra.mxu0 %v804
        %808 = vmatprep.subr.bf16.mxu0 0
        %809 = vmatpush1.bf16.msra.mxu0 0
        %810 = vmatprep.subr.bf16.mxu0 0
        %811 = vmatpush1.bf16.msra.mxu0 0
        %812 = vmatprep.subr.bf16.mxu0 0
        %813 = vmatpush1.bf16.msra.mxu0 0
        %814 = vmatprep.subr.bf16.mxu0 0
        %815 = vmatpush1.bf16.msra.mxu0 0
        %816 = vmatprep.subr.bf16.mxu0 0
        %817 = vmatpush1.bf16.msra.mxu0 0
        %818 = vmatprep.subr.bf16.mxu0 0
        %819 = vmatpush1.bf16.msra.mxu0 0
        %820 = vmatprep.subr.bf16.mxu0 0
        %821 = vmatpush1.bf16.msra.mxu0 0
        %822 = vmatprep.subr.bf16.mxu0 0
        %823 = vmatpush1.bf16.msra.mxu0 0
        %824 = vmatprep.subr.bf16.mxu0 0
        %825 = vmatpush1.bf16.msra.mxu0 0
        %826 = vmatprep.subr.bf16.mxu0 0
        %827 = vmatpush1.bf16.msra.mxu0 0
        %828 = vmatprep.subr.bf16.mxu0 0
        %829 = vmatpush1.bf16.msra.mxu0 0
        %830 = vmatprep.subr.bf16.mxu0 0
        %831 = vmatpush1.bf16.msra.mxu0 0
        %832 = vmatprep.subr.bf16.mxu0 0
        %833 = vmatpush1.bf16.msra.mxu0 0
        %834 = vmatprep.subr.bf16.mxu0 0
        %835 = vmatpush1.bf16.msra.mxu0 0
        %836 = vmatprep.subr.bf16.mxu0 0
        %837 = vmatpush1.bf16.msra.mxu0 0
        %838 = vmatprep.mubr.bf16.mxu0 0
        %839 = vmatmul.mubr.bf16.gmra.mrb[0].mxu0 %v336
        %v840 = vpop.f32.mrb[0].mxu0
        %v841 = vadd.f32 0.0, %v840
        %v842 = vpop.f32.mrb[0].mxu0
        %v843 = vpop.f32.mrb[0].mxu0
        %v844 = vadd.f32 0.0, %v843
        %v845 = vpop.f32.mrb[0].mxu0
        %846 = vmatprep.mubr.bf16.mxu0 0
        %847 = vmatmul.mubr.bf16.gmra.mrb[0].mxu0 %v339
        %v848 = vpop.f32.mrb[0].mxu0
        %v849 = vadd.f32 0.0, %v848
        %v850 = vpop.f32.mrb[0].mxu0
        %v851 = vpop.f32.mrb[0].mxu0
        %v852 = vadd.f32 0.0, %v851
        %v853 = vpop.f32.mrb[0].mxu0
        %854 = vmatprep.mubr.bf16.mxu0 0
        %855 = vmatmul.mubr.bf16.gmra.mrb[0].mxu0 %v342
        %v856 = vpop.f32.mrb[0].mxu0
        %v857 = vadd.f32 0.0, %v856
        %v858 = vpop.f32.mrb[0].mxu0
        %v859 = vpop.f32.mrb[0].mxu0
        %v860 = vadd.f32 0.0, %v859
        %v861 = vpop.f32.mrb[0].mxu0
        %862 = vdwg.mxu0
        %s863 = scalar_lea.vmem %s289, 64
        %v864 = vld [vmem:[%s863] sm:$0xf]
        %v865 = vld [vmem:[%s863 + $0x4] sm:$0xf]
        %v868 = vunpack.c.l.b16 %v864
        %v869 = vunpack.c.l.b16 %v865
        %v870 = vpack.c.b16 %v869, %v868
        %872 = vmatprep.subr.bf16.mxu0 0
        %873 = vmatpush1.bf16.msra.mxu0 %v870
        %874 = vmatprep.subr.bf16.mxu0 0
        %875 = vmatpush1.bf16.msra.mxu0 0
        %876 = vmatprep.subr.bf16.mxu0 0
        %877 = vmatpush1.bf16.msra.mxu0 0
        %878 = vmatprep.subr.bf16.mxu0 0
        %879 = vmatpush1.bf16.msra.mxu0 0
        %880 = vmatprep.subr.bf16.mxu0 0
        %881 = vmatpush1.bf16.msra.mxu0 0
        %882 = vmatprep.subr.bf16.mxu0 0
        %883 = vmatpush1.bf16.msra.mxu0 0
        %884 = vmatprep.subr.bf16.mxu0 0
        %885 = vmatpush1.bf16.msra.mxu0 0
        %886 = vmatprep.subr.bf16.mxu0 0
        %887 = vmatpush1.bf16.msra.mxu0 0
        %888 = vmatprep.subr.bf16.mxu0 0
        %889 = vmatpush1.bf16.msra.mxu0 0
        %890 = vmatprep.subr.bf16.mxu0 0
        %891 = vmatpush1.bf16.msra.mxu0 0
        %892 = vmatprep.subr.bf16.mxu0 0
        %893 = vmatpush1.bf16.msra.mxu0 0
        %894 = vmatprep.subr.bf16.mxu0 0
        %895 = vmatpush1.bf16.msra.mxu0 0
        %896 = vmatprep.subr.bf16.mxu0 0
        %897 = vmatpush1.bf16.msra.mxu0 0
        %898 = vmatprep.subr.bf16.mxu0 0
        %899 = vmatpush1.bf16.msra.mxu0 0
        %900 = vmatprep.subr.bf16.mxu0 0
        %901 = vmatpush1.bf16.msra.mxu0 0
        %902 = vmatprep.subr.bf16.mxu0 0
        %903 = vmatpush1.bf16.msra.mxu0 0
        %904 = vmatprep.mubr.bf16.mxu0 0
        %905 = vmatmul.mubr.bf16.gmra.mrb[0].mxu0 %v336
        %v906 = vpop.f32.mrb[0].mxu0
        %v907 = vadd.f32 0.0, %v906
        %v908 = vpop.f32.mrb[0].mxu0
        %v909 = vpop.f32.mrb[0].mxu0
        %v910 = vadd.f32 0.0, %v909
        %v911 = vpop.f32.mrb[0].mxu0
        %912 = vmatprep.mubr.bf16.mxu0 0
        %913 = vmatmul.mubr.bf16.gmra.mrb[0].mxu0 %v339
        %v914 = vpop.f32.mrb[0].mxu0
        %v915 = vadd.f32 0.0, %v914
        %v916 = vpop.f32.mrb[0].mxu0
        %v917 = vpop.f32.mrb[0].mxu0
        %v918 = vadd.f32 0.0, %v917
        %v919 = vpop.f32.mrb[0].mxu0
        %920 = vmatprep.mubr.bf16.mxu0 0
        %921 = vmatmul.mubr.bf16.gmra.mrb[0].mxu0 %v342
        %v922 = vpop.f32.mrb[0].mxu0
        %v923 = vadd.f32 0.0, %v922
        %v924 = vpop.f32.mrb[0].mxu0
        %v925 = vpop.f32.mrb[0].mxu0
        %v926 = vadd.f32 0.0, %v925
        %v927 = vpop.f32.mrb[0].mxu0
        %928 = vdwg.mxu0
        %s929 = sld [smem:[#allocation4]]
        %v930 = vstv %s929
        %s931 = sld [smem:[#allocation2]]
        %v932 = vstv %s931
        %v933 = vmul.f32 %v932, %v379
        %v934 = vmul.f32 %v932, %v382
        %v935 = vadd.f32 %v930, %v933
        %v936 = vadd.f32 %v930, %v934
        %s937 = sld [smem:[#allocation2 + $0x80]]
        %v938 = vstv %s937
        %v939 = vmul.f32 %v938, %v387
        %v940 = vmul.f32 %v938, %v390
        %v941 = vadd.f32 %v935, %v939
        %v942 = vadd.f32 %v936, %v940
        %s943 = sld [smem:[#allocation2 + $0x100]]
        %v944 = vstv %s943
        %v945 = vmul.f32 %v944, %v395
        %v946 = vmul.f32 %v944, %v398
        %v947 = vadd.f32 %v941, %v945
        %v948 = vadd.f32 %v942, %v946
        %s949 = sld [smem:[#allocation2 + $0x180]]
        %v950 = vstv %s949
        %v951 = vmul.f32 %v950, %v445
        %v952 = vmul.f32 %v950, %v448
        %v953 = vadd.f32 %v947, %v951
        %v954 = vadd.f32 %v948, %v952
        %s955 = sld [smem:[#allocation2 + $0x200]]
        %v956 = vstv %s955
        %v957 = vmul.f32 %v956, %v453
        %v958 = vmul.f32 %v956, %v456
        %v959 = vadd.f32 %v953, %v957
        %v960 = vadd.f32 %v954, %v958
        %s961 = sld [smem:[#allocation2 + $0x280]]
        %v962 = vstv %s961
        %v963 = vmul.f32 %v962, %v461
        %v964 = vmul.f32 %v962, %v464
        %v965 = vadd.f32 %v959, %v963
        %v966 = vadd.f32 %v960, %v964
        %s967 = sld [smem:[#allocation2 + $0x300]]
        %v968 = vstv %s967
        %v969 = vmul.f32 %v968, %v511
        %v970 = vmul.f32 %v968, %v514
        %v971 = vadd.f32 %v965, %v969
        %v972 = vadd.f32 %v966, %v970
        %s973 = sld [smem:[#allocation2 + $0x380]]
        %v974 = vstv %s973
        %v975 = vmul.f32 %v974, %v519
        %v976 = vmul.f32 %v974, %v522
        %v977 = vadd.f32 %v971, %v975
        %v978 = vadd.f32 %v972, %v976
        %s979 = sld [smem:[#allocation2 + $0x400]]
        %v980 = vstv %s979
        %v981 = vmul.f32 %v980, %v527
        %v982 = vmul.f32 %v980, %v530
        %v983 = vadd.f32 %v977, %v981
        %v984 = vadd.f32 %v978, %v982
        %s985 = sld [smem:[#allocation2 + $0x480]]
        %v986 = vstv %s985
        %v987 = vmul.f32 %v986, %v577
        %v988 = vmul.f32 %v986, %v580
        %v989 = vadd.f32 %v983, %v987
        %v990 = vadd.f32 %v984, %v988
        %s991 = sld [smem:[#allocation2 + $0x500]]
        %v992 = vstv %s991
        %v993 = vmul.f32 %v992, %v585
        %v994 = vmul.f32 %v992, %v588
        %v995 = vadd.f32 %v989, %v993
        %v996 = vadd.f32 %v990, %v994
        %s997 = sld [smem:[#allocation2 + $0x580]]
        %v998 = vstv %s997
        %v999 = vmul.f32 %v998, %v593
        %v1000 = vmul.f32 %v998, %v596
        %v1001 = vadd.f32 %v995, %v999
        %v1002 = vadd.f32 %v996, %v1000
        %s1003 = sld [smem:[#allocation2 + $0x600]]
        %v1004 = vstv %s1003
        %v1005 = vmul.f32 %v1004, %v643
        %v1006 = vmul.f32 %v1004, %v646
        %v1007 = vadd.f32 %v1001, %v1005
        %v1008 = vadd.f32 %v1002, %v1006
        %s1009 = sld [smem:[#allocation2 + $0x680]]
        %v1010 = vstv %s1009
        %v1011 = vmul.f32 %v1010, %v651
        %v1012 = vmul.f32 %v1010, %v654
        %v1013 = vadd.f32 %v1007, %v1011
        %v1014 = vadd.f32 %v1008, %v1012
        %s1015 = sld [smem:[#allocation2 + $0x700]]
        %v1016 = vstv %s1015
        %v1017 = vmul.f32 %v1016, %v659
        %v1018 = vmul.f32 %v1016, %v662
        %v1019 = vadd.f32 %v1013, %v1017
        %v1020 = vadd.f32 %v1014, %v1018
        %s1021 = sld [smem:[#allocation2 + $0x780]]
        %v1022 = vstv %s1021
        %v1023 = vmul.f32 %v1022, %v709
        %v1024 = vmul.f32 %v1022, %v712
        %v1025 = vadd.f32 %v1019, %v1023
        %v1026 = vadd.f32 %v1020, %v1024
        %s1027 = sld [smem:[#allocation2 + $0x800]]
        %v1028 = vstv %s1027
        %v1029 = vmul.f32 %v1028, %v717
        %v1030 = vmul.f32 %v1028, %v720
        %v1031 = vadd.f32 %v1025, %v1029
        %v1032 = vadd.f32 %v1026, %v1030
        %s1033 = sld [smem:[#allocation2 + $0x880]]
        %v1034 = vstv %s1033
        %v1035 = vmul.f32 %v1034, %v725
        %v1036 = vmul.f32 %v1034, %v728
        %v1037 = vadd.f32 %v1031, %v1035
        %v1038 = vadd.f32 %v1032, %v1036
        %s1039 = sld [smem:[#allocation2 + $0x900]]
        %v1040 = vstv %s1039
        %v1041 = vmul.f32 %v1040, %v775
        %v1042 = vmul.f32 %v1040, %v778
        %v1043 = vadd.f32 %v1037, %v1041
        %v1044 = vadd.f32 %v1038, %v1042
        %s1045 = sld [smem:[#allocation2 + $0x980]]
        %v1046 = vstv %s1045
        %v1047 = vmul.f32 %v1046, %v783
        %v1048 = vmul.f32 %v1046, %v786
        %v1049 = vadd.f32 %v1043, %v1047
        %v1050 = vadd.f32 %v1044, %v1048
        %s1051 = sld [smem:[#allocation2 + $0xa00]]
        %v1052 = vstv %s1051
        %v1053 = vmul.f32 %v1052, %v791
        %v1054 = vmul.f32 %v1052, %v794
        %v1055 = vadd.f32 %v1049, %v1053
        %v1056 = vadd.f32 %v1050, %v1054
        %s1057 = sld [smem:[#allocation2 + $0xa80]]
        %v1058 = vstv %s1057
        %v1059 = vmul.f32 %v1058, %v841
        %v1060 = vmul.f32 %v1058, %v844
        %v1061 = vadd.f32 %v1055, %v1059
        %v1062 = vadd.f32 %v1056, %v1060
        %s1063 = sld [smem:[#allocation2 + $0xb00]]
        %v1064 = vstv %s1063
        %v1065 = vmul.f32 %v1064, %v849
        %v1066 = vmul.f32 %v1064, %v852
        %v1067 = vadd.f32 %v1061, %v1065
        %v1068 = vadd.f32 %v1062, %v1066
        %s1069 = sld [smem:[#allocation2 + $0xb80]]
        %v1070 = vstv %s1069
        %v1071 = vmul.f32 %v1070, %v857
        %v1072 = vmul.f32 %v1070, %v860
        %v1073 = vadd.f32 %v1067, %v1071
        %v1074 = vadd.f32 %v1068, %v1072
        %s1075 = sld [smem:[#allocation2 + $0xc00]]
        %v1076 = vstv %s1075
        %v1077 = vmul.f32 %v1076, %v907
        %v1078 = vmul.f32 %v1076, %v910
        %v1079 = vadd.f32 %v1073, %v1077
        %v1080 = vadd.f32 %v1074, %v1078
        %s1081 = sld [smem:[#allocation2 + $0xc80]]
        %v1082 = vstv %s1081
        %v1083 = vmul.f32 %v1082, %v915
        %v1084 = vmul.f32 %v1082, %v918
        %v1085 = vadd.f32 %v1079, %v1083
        %v1086 = vadd.f32 %v1080, %v1084
        %s1087 = sld [smem:[#allocation2 + $0xd00]]
        %v1088 = vstv %s1087
        %v1089 = vmul.f32 %v1088, %v923
        %v1090 = vmul.f32 %v1088, %v926
        %v1091 = vadd.f32 %v1085, %v1089
        %v1092 = vadd.f32 %v1086, %v1090
        %vm1093 = vcmask 261120
        %1094 = vst.msk [vmem:[%s274] sm:$0xff] %vm1093, %v1091
        %1095 = vst.msk [vmem:[%s274 + $0x8] sm:$0xff] %vm1093, %v1092
        %s1096 = sld [smem:[#allocation4 + $0x1]]
        %v1097 = vstv %s1096
        %s1098 = sld [smem:[#allocation2 + $0x1]]
        %v1099 = vstv %s1098
        %v1100 = vmul.f32 %v1099, %v379
        %v1101 = vmul.f32 %v1099, %v382
        %v1102 = vadd.f32 %v1097, %v1100
        %v1103 = vadd.f32 %v1097, %v1101
        %s1104 = sld [smem:[#allocation2 + $0x81]]
        %v1105 = vstv %s1104
        %v1106 = vmul.f32 %v1105, %v387
        %v1107 = vmul.f32 %v1105, %v390
        %v1108 = vadd.f32 %v1102, %v1106
        %v1109 = vadd.f32 %v1103, %v1107
        %s1110 = sld [smem:[#allocation2 + $0x101]]
        %v1111 = vstv %s1110
        %v1112 = vmul.f32 %v1111, %v395
        %v1113 = vmul.f32 %v1111, %v398
        %v1114 = vadd.f32 %v1108, %v1112
        %v1115 = vadd.f32 %v1109, %v1113
        %s1116 = sld [smem:[#allocation2 + $0x181]]
        %v1117 = vstv %s1116
        %v1118 = vmul.f32 %v1117, %v445
        %v1119 = vmul.f32 %v1117, %v448
        %v1120 = vadd.f32 %v1114, %v1118
        %v1121 = vadd.f32 %v1115, %v1119
        %s1122 = sld [smem:[#allocation2 + $0x201]]
        %v1123 = vstv %s1122
        %v1124 = vmul.f32 %v1123, %v453
        %v1125 = vmul.f32 %v1123, %v456
        %v1126 = vadd.f32 %v1120, %v1124
        %v1127 = vadd.f32 %v1121, %v1125
        %s1128 = sld [smem:[#allocation2 + $0x281]]
        %v1129 = vstv %s1128
        %v1130 = vmul.f32 %v1129, %v461
        %v1131 = vmul.f32 %v1129, %v464
        %v1132 = vadd.f32 %v1126, %v1130
        %v1133 = vadd.f32 %v1127, %v1131
        %s1134 = sld [smem:[#allocation2 + $0x301]]
        %v1135 = vstv %s1134
        %v1136 = vmul.f32 %v1135, %v511
        %v1137 = vmul.f32 %v1135, %v514
        %v1138 = vadd.f32 %v1132, %v1136
        %v1139 = vadd.f32 %v1133, %v1137
        %s1140 = sld [smem:[#allocation2 + $0x381]]
        %v1141 = vstv %s1140
        %v1142 = vmul.f32 %v1141, %v519
        %v1143 = vmul.f32 %v1141, %v522
        %v1144 = vadd.f32 %v1138, %v1142
        %v1145 = vadd.f32 %v1139, %v1143
        %s1146 = sld [smem:[#allocation2 + $0x401]]
        %v1147 = vstv %s1146
        %v1148 = vmul.f32 %v1147, %v527
        %v1149 = vmul.f32 %v1147, %v530
        %v1150 = vadd.f32 %v1144, %v1148
        %v1151 = vadd.f32 %v1145, %v1149
        %s1152 = sld [smem:[#allocation2 + $0x481]]
        %v1153 = vstv %s1152
        %v1154 = vmul.f32 %v1153, %v577
        %v1155 = vmul.f32 %v1153, %v580
        %v1156 = vadd.f32 %v1150, %v1154
        %v1157 = vadd.f32 %v1151, %v1155
        %s1158 = sld [smem:[#allocation2 + $0x501]]
        %v1159 = vstv %s1158
        %v1160 = vmul.f32 %v1159, %v585
        %v1161 = vmul.f32 %v1159, %v588
        %v1162 = vadd.f32 %v1156, %v1160
        %v1163 = vadd.f32 %v1157, %v1161
        %s1164 = sld [smem:[#allocation2 + $0x581]]
        %v1165 = vstv %s1164
        %v1166 = vmul.f32 %v1165, %v593
        %v1167 = vmul.f32 %v1165, %v596
        %v1168 = vadd.f32 %v1162, %v1166
        %v1169 = vadd.f32 %v1163, %v1167
        %s1170 = sld [smem:[#allocation2 + $0x601]]
        %v1171 = vstv %s1170
        %v1172 = vmul.f32 %v1171, %v643
        %v1173 = vmul.f32 %v1171, %v646
        %v1174 = vadd.f32 %v1168, %v1172
        %v1175 = vadd.f32 %v1169, %v1173
        %s1176 = sld [smem:[#allocation2 + $0x681]]
        %v1177 = vstv %s1176
        %v1178 = vmul.f32 %v1177, %v651
        %v1179 = vmul.f32 %v1177, %v654
        %v1180 = vadd.f32 %v1174, %v1178
        %v1181 = vadd.f32 %v1175, %v1179
        %s1182 = sld [smem:[#allocation2 + $0x701]]
        %v1183 = vstv %s1182
        %v1184 = vmul.f32 %v1183, %v659
        %v1185 = vmul.f32 %v1183, %v662
        %v1186 = vadd.f32 %v1180, %v1184
        %v1187 = vadd.f32 %v1181, %v1185
        %s1188 = sld [smem:[#allocation2 + $0x781]]
        %v1189 = vstv %s1188
        %v1190 = vmul.f32 %v1189, %v709
        %v1191 = vmul.f32 %v1189, %v712
        %v1192 = vadd.f32 %v1186, %v1190
        %v1193 = vadd.f32 %v1187, %v1191
        %s1194 = sld [smem:[#allocation2 + $0x801]]
        %v1195 = vstv %s1194
        %v1196 = vmul.f32 %v1195, %v717
        %v1197 = vmul.f32 %v1195, %v720
        %v1198 = vadd.f32 %v1192, %v1196
        %v1199 = vadd.f32 %v1193, %v1197
        %s1200 = sld [smem:[#allocation2 + $0x881]]
        %v1201 = vstv %s1200
        %v1202 = vmul.f32 %v1201, %v725
        %v1203 = vmul.f32 %v1201, %v728
        %v1204 = vadd.f32 %v1198, %v1202
        %v1205 = vadd.f32 %v1199, %v1203
        %s1206 = sld [smem:[#allocation2 + $0x901]]
        %v1207 = vstv %s1206
        %v1208 = vmul.f32 %v1207, %v775
        %v1209 = vmul.f32 %v1207, %v778
        %v1210 = vadd.f32 %v1204, %v1208
        %v1211 = vadd.f32 %v1205, %v1209
        %s1212 = sld [smem:[#allocation2 + $0x981]]
        %v1213 = vstv %s1212
        %v1214 = vmul.f32 %v1213, %v783
        %v1215 = vmul.f32 %v1213, %v786
        %v1216 = vadd.f32 %v1210, %v1214
        %v1217 = vadd.f32 %v1211, %v1215
        %s1218 = sld [smem:[#allocation2 + $0xa01]]
        %v1219 = vstv %s1218
        %v1220 = vmul.f32 %v1219, %v791
        %v1221 = vmul.f32 %v1219, %v794
        %v1222 = vadd.f32 %v1216, %v1220
        %v1223 = vadd.f32 %v1217, %v1221
        %s1224 = sld [smem:[#allocation2 + $0xa81]]
        %v1225 = vstv %s1224
        %v1226 = vmul.f32 %v1225, %v841
        %v1227 = vmul.f32 %v1225, %v844
        %v1228 = vadd.f32 %v1222, %v1226
        %v1229 = vadd.f32 %v1223, %v1227
        %s1230 = sld [smem:[#allocation2 + $0xb01]]
        %v1231 = vstv %s1230
        %v1232 = vmul.f32 %v1231, %v849
        %v1233 = vmul.f32 %v1231, %v852
        %v1234 = vadd.f32 %v1228, %v1232
        %v1235 = vadd.f32 %v1229, %v1233
        %s1236 = sld [smem:[#allocation2 + $0xb81]]
        %v1237 = vstv %s1236
        %v1238 = vmul.f32 %v1237, %v857
        %v1239 = vmul.f32 %v1237, %v860
        %v1240 = vadd.f32 %v1234, %v1238
        %v1241 = vadd.f32 %v1235, %v1239
        %s1242 = sld [smem:[#allocation2 + $0xc01]]
        %v1243 = vstv %s1242
        %v1244 = vmul.f32 %v1243, %v907
        %v1245 = vmul.f32 %v1243, %v910
        %v1246 = vadd.f32 %v1240, %v1244
        %v1247 = vadd.f32 %v1241, %v1245
        %s1248 = sld [smem:[#allocation2 + $0xc81]]
        %v1249 = vstv %s1248
        %v1250 = vmul.f32 %v1249, %v915
        %v1251 = vmul.f32 %v1249, %v918
        %v1252 = vadd.f32 %v1246, %v1250
        %v1253 = vadd.f32 %v1247, %v1251
        %s1254 = sld [smem:[#allocation2 + $0xd01]]
        %v1255 = vstv %s1254
        %v1256 = vmul.f32 %v1255, %v923
        %v1257 = vmul.f32 %v1255, %v926
        %v1258 = vadd.f32 %v1252, %v1256
        %v1259 = vadd.f32 %v1253, %v1257
        %s1260 = scalar_lea.vmem %s274, 16 [#allocation6]
        %1261 = vst.msk [vmem:[%s1260] sm:$0xff] %vm1093, %v1258
        %1262 = vst.msk [vmem:[%s1260 + $0x8] sm:$0xff] %vm1093, %v1259
        %s1263 = sld [smem:[#allocation4 + $0x2]]
        %v1264 = vstv %s1263
        %s1265 = sld [smem:[#allocation2 + $0x2]]
        %v1266 = vstv %s1265
        %v1267 = vmul.f32 %v1266, %v379
        %v1268 = vmul.f32 %v1266, %v382
        %v1269 = vadd.f32 %v1264, %v1267
        %v1270 = vadd.f32 %v1264, %v1268
        %s1271 = sld [smem:[#allocation2 + $0x82]]
        %v1272 = vstv %s1271
        %v1273 = vmul.f32 %v1272, %v387
        %v1274 = vmul.f32 %v1272, %v390
        %v1275 = vadd.f32 %v1269, %v1273
        %v1276 = vadd.f32 %v1270, %v1274
        %s1277 = sld [smem:[#allocation2 + $0x102]]
        %v1278 = vstv %s1277
        %v1279 = vmul.f32 %v1278, %v395
        %v1280 = vmul.f32 %v1278, %v398
        %v1281 = vadd.f32 %v1275, %v1279
        %v1282 = vadd.f32 %v1276, %v1280
        %s1283 = sld [smem:[#allocation2 + $0x182]]
        %v1284 = vstv %s1283
        %v1285 = vmul.f32 %v1284, %v445
        %v1286 = vmul.f32 %v1284, %v448
        %v1287 = vadd.f32 %v1281, %v1285
        %v1288 = vadd.f32 %v1282, %v1286
        %s1289 = sld [smem:[#allocation2 + $0x202]]
        %v1290 = vstv %s1289
        %v1291 = vmul.f32 %v1290, %v453
        %v1292 = vmul.f32 %v1290, %v456
        %v1293 = vadd.f32 %v1287, %v1291
        %v1294 = vadd.f32 %v1288, %v1292
        %s1295 = sld [smem:[#allocation2 + $0x282]]
        %v1296 = vstv %s1295
        %v1297 = vmul.f32 %v1296, %v461
        %v1298 = vmul.f32 %v1296, %v464
        %v1299 = vadd.f32 %v1293, %v1297
        %v1300 = vadd.f32 %v1294, %v1298
        %s1301 = sld [smem:[#allocation2 + $0x302]]
        %v1302 = vstv %s1301
        %v1303 = vmul.f32 %v1302, %v511
        %v1304 = vmul.f32 %v1302, %v514
        %v1305 = vadd.f32 %v1299, %v1303
        %v1306 = vadd.f32 %v1300, %v1304
        %s1307 = sld [smem:[#allocation2 + $0x382]]
        %v1308 = vstv %s1307
        %v1309 = vmul.f32 %v1308, %v519
        %v1310 = vmul.f32 %v1308, %v522
        %v1311 = vadd.f32 %v1305, %v1309
        %v1312 = vadd.f32 %v1306, %v1310
        %s1313 = sld [smem:[#allocation2 + $0x402]]
        %v1314 = vstv %s1313
        %v1315 = vmul.f32 %v1314, %v527
        %v1316 = vmul.f32 %v1314, %v530
        %v1317 = vadd.f32 %v1311, %v1315
        %v1318 = vadd.f32 %v1312, %v1316
        %s1319 = sld [smem:[#allocation2 + $0x482]]
        %v1320 = vstv %s1319
        %v1321 = vmul.f32 %v1320, %v577
        %v1322 = vmul.f32 %v1320, %v580
        %v1323 = vadd.f32 %v1317, %v1321
        %v1324 = vadd.f32 %v1318, %v1322
        %s1325 = sld [smem:[#allocation2 + $0x502]]
        %v1326 = vstv %s1325
        %v1327 = vmul.f32 %v1326, %v585
        %v1328 = vmul.f32 %v1326, %v588
        %v1329 = vadd.f32 %v1323, %v1327
        %v1330 = vadd.f32 %v1324, %v1328
        %s1331 = sld [smem:[#allocation2 + $0x582]]
        %v1332 = vstv %s1331
        %v1333 = vmul.f32 %v1332, %v593
        %v1334 = vmul.f32 %v1332, %v596
        %v1335 = vadd.f32 %v1329, %v1333
        %v1336 = vadd.f32 %v1330, %v1334
        %s1337 = sld [smem:[#allocation2 + $0x602]]
        %v1338 = vstv %s1337
        %v1339 = vmul.f32 %v1338, %v643
        %v1340 = vmul.f32 %v1338, %v646
        %v1341 = vadd.f32 %v1335, %v1339
        %v1342 = vadd.f32 %v1336, %v1340
        %s1343 = sld [smem:[#allocation2 + $0x682]]
        %v1344 = vstv %s1343
        %v1345 = vmul.f32 %v1344, %v651
        %v1346 = vmul.f32 %v1344, %v654
        %v1347 = vadd.f32 %v1341, %v1345
        %v1348 = vadd.f32 %v1342, %v1346
        %s1349 = sld [smem:[#allocation2 + $0x702]]
        %v1350 = vstv %s1349
        %v1351 = vmul.f32 %v1350, %v659
        %v1352 = vmul.f32 %v1350, %v662
        %v1353 = vadd.f32 %v1347, %v1351
        %v1354 = vadd.f32 %v1348, %v1352
        %s1355 = sld [smem:[#allocation2 + $0x782]]
        %v1356 = vstv %s1355
        %v1357 = vmul.f32 %v1356, %v709
        %v1358 = vmul.f32 %v1356, %v712
        %v1359 = vadd.f32 %v1353, %v1357
        %v1360 = vadd.f32 %v1354, %v1358
        %s1361 = sld [smem:[#allocation2 + $0x802]]
        %v1362 = vstv %s1361
        %v1363 = vmul.f32 %v1362, %v717
        %v1364 = vmul.f32 %v1362, %v720
        %v1365 = vadd.f32 %v1359, %v1363
        %v1366 = vadd.f32 %v1360, %v1364
        %s1367 = sld [smem:[#allocation2 + $0x882]]
        %v1368 = vstv %s1367
        %v1369 = vmul.f32 %v1368, %v725
        %v1370 = vmul.f32 %v1368, %v728
        %v1371 = vadd.f32 %v1365, %v1369
        %v1372 = vadd.f32 %v1366, %v1370
        %s1373 = sld [smem:[#allocation2 + $0x902]]
        %v1374 = vstv %s1373
        %v1375 = vmul.f32 %v1374, %v775
        %v1376 = vmul.f32 %v1374, %v778
        %v1377 = vadd.f32 %v1371, %v1375
        %v1378 = vadd.f32 %v1372, %v1376
        %s1379 = sld [smem:[#allocation2 + $0x982]]
        %v1380 = vstv %s1379
        %v1381 = vmul.f32 %v1380, %v783
        %v1382 = vmul.f32 %v1380, %v786
        %v1383 = vadd.f32 %v1377, %v1381
        %v1384 = vadd.f32 %v1378, %v1382
        %s1385 = sld [smem:[#allocation2 + $0xa02]]
        %v1386 = vstv %s1385
        %v1387 = vmul.f32 %v1386, %v791
        %v1388 = vmul.f32 %v1386, %v794
        %v1389 = vadd.f32 %v1383, %v1387
        %v1390 = vadd.f32 %v1384, %v1388
        %s1391 = sld [smem:[#allocation2 + $0xa82]]
        %v1392 = vstv %s1391
        %v1393 = vmul.f32 %v1392, %v841
        %v1394 = vmul.f32 %v1392, %v844
        %v1395 = vadd.f32 %v1389, %v1393
        %v1396 = vadd.f32 %v1390, %v1394
        %s1397 = sld [smem:[#allocation2 + $0xb02]]
        %v1398 = vstv %s1397
        %v1399 = vmul.f32 %v1398, %v849
        %v1400 = vmul.f32 %v1398, %v852
        %v1401 = vadd.f32 %v1395, %v1399
        %v1402 = vadd.f32 %v1396, %v1400
        %s1403 = sld [smem:[#allocation2 + $0xb82]]
        %v1404 = vstv %s1403
        %v1405 = vmul.f32 %v1404, %v857
        %v1406 = vmul.f32 %v1404, %v860
        %v1407 = vadd.f32 %v1401, %v1405
        %v1408 = vadd.f32 %v1402, %v1406
        %s1409 = sld [smem:[#allocation2 + $0xc02]]
        %v1410 = vstv %s1409
        %v1411 = vmul.f32 %v1410, %v907
        %v1412 = vmul.f32 %v1410, %v910
        %v1413 = vadd.f32 %v1407, %v1411
        %v1414 = vadd.f32 %v1408, %v1412
        %s1415 = sld [smem:[#allocation2 + $0xc82]]
        %v1416 = vstv %s1415
        %v1417 = vmul.f32 %v1416, %v915
        %v1418 = vmul.f32 %v1416, %v918
        %v1419 = vadd.f32 %v1413, %v1417
        %v1420 = vadd.f32 %v1414, %v1418
        %s1421 = sld [smem:[#allocation2 + $0xd02]]
        %v1422 = vstv %s1421
        %v1423 = vmul.f32 %v1422, %v923
        %v1424 = vmul.f32 %v1422, %v926
        %v1425 = vadd.f32 %v1419, %v1423
        %v1426 = vadd.f32 %v1420, %v1424
        %s1427 = scalar_lea.vmem %s274, 32 [#allocation6]
        %1428 = vst.msk [vmem:[%s1427] sm:$0xff] %vm1093, %v1425
        %1429 = vst.msk [vmem:[%s1427 + $0x8] sm:$0xff] %vm1093, %v1426
        %s1430 = sld [smem:[#allocation4 + $0x3]]
        %v1431 = vstv %s1430
        %s1432 = sld [smem:[#allocation2 + $0x3]]
        %v1433 = vstv %s1432
        %v1434 = vmul.f32 %v1433, %v379
        %v1435 = vmul.f32 %v1433, %v382
        %v1436 = vadd.f32 %v1431, %v1434
        %v1437 = vadd.f32 %v1431, %v1435
        %s1438 = sld [smem:[#allocation2 + $0x83]]
        %v1439 = vstv %s1438
        %v1440 = vmul.f32 %v1439, %v387
        %v1441 = vmul.f32 %v1439, %v390
        %v1442 = vadd.f32 %v1436, %v1440
        %v1443 = vadd.f32 %v1437, %v1441
        %s1444 = sld [smem:[#allocation2 + $0x103]]
        %v1445 = vstv %s1444
        %v1446 = vmul.f32 %v1445, %v395
        %v1447 = vmul.f32 %v1445, %v398
        %v1448 = vadd.f32 %v1442, %v1446
        %v1449 = vadd.f32 %v1443, %v1447
        %s1450 = sld [smem:[#allocation2 + $0x183]]
        %v1451 = vstv %s1450
        %v1452 = vmul.f32 %v1451, %v445
        %v1453 = vmul.f32 %v1451, %v448
        %v1454 = vadd.f32 %v1448, %v1452
        %v1455 = vadd.f32 %v1449, %v1453
        %s1456 = sld [smem:[#allocation2 + $0x203]]
        %v1457 = vstv %s1456
        %v1458 = vmul.f32 %v1457, %v453
        %v1459 = vmul.f32 %v1457, %v456
        %v1460 = vadd.f32 %v1454, %v1458
        %v1461 = vadd.f32 %v1455, %v1459
        %s1462 = sld [smem:[#allocation2 + $0x283]]
        %v1463 = vstv %s1462
        %v1464 = vmul.f32 %v1463, %v461
        %v1465 = vmul.f32 %v1463, %v464
        %v1466 = vadd.f32 %v1460, %v1464
        %v1467 = vadd.f32 %v1461, %v1465
        %s1468 = sld [smem:[#allocation2 + $0x303]]
        %v1469 = vstv %s1468
        %v1470 = vmul.f32 %v1469, %v511
        %v1471 = vmul.f32 %v1469, %v514
        %v1472 = vadd.f32 %v1466, %v1470
        %v1473 = vadd.f32 %v1467, %v1471
        %s1474 = sld [smem:[#allocation2 + $0x383]]
        %v1475 = vstv %s1474
        %v1476 = vmul.f32 %v1475, %v519
        %v1477 = vmul.f32 %v1475, %v522
        %v1478 = vadd.f32 %v1472, %v1476
        %v1479 = vadd.f32 %v1473, %v1477
        %s1480 = sld [smem:[#allocation2 + $0x403]]
        %v1481 = vstv %s1480
        %v1482 = vmul.f32 %v1481, %v527
        %v1483 = vmul.f32 %v1481, %v530
        %v1484 = vadd.f32 %v1478, %v1482
        %v1485 = vadd.f32 %v1479, %v1483
        %s1486 = sld [smem:[#allocation2 + $0x483]]
        %v1487 = vstv %s1486
        %v1488 = vmul.f32 %v1487, %v577
        %v1489 = vmul.f32 %v1487, %v580
        %v1490 = vadd.f32 %v1484, %v1488
        %v1491 = vadd.f32 %v1485, %v1489
        %s1492 = sld [smem:[#allocation2 + $0x503]]
        %v1493 = vstv %s1492
        %v1494 = vmul.f32 %v1493, %v585
        %v1495 = vmul.f32 %v1493, %v588
        %v1496 = vadd.f32 %v1490, %v1494
        %v1497 = vadd.f32 %v1491, %v1495
        %s1498 = sld [smem:[#allocation2 + $0x583]]
        %v1499 = vstv %s1498
        %v1500 = vmul.f32 %v1499, %v593
        %v1501 = vmul.f32 %v1499, %v596
        %v1502 = vadd.f32 %v1496, %v1500
        %v1503 = vadd.f32 %v1497, %v1501
        %s1504 = sld [smem:[#allocation2 + $0x603]]
        %v1505 = vstv %s1504
        %v1506 = vmul.f32 %v1505, %v643
        %v1507 = vmul.f32 %v1505, %v646
        %v1508 = vadd.f32 %v1502, %v1506
        %v1509 = vadd.f32 %v1503, %v1507
        %s1510 = sld [smem:[#allocation2 + $0x683]]
        %v1511 = vstv %s1510
        %v1512 = vmul.f32 %v1511, %v651
        %v1513 = vmul.f32 %v1511, %v654
        %v1514 = vadd.f32 %v1508, %v1512
        %v1515 = vadd.f32 %v1509, %v1513
        %s1516 = sld [smem:[#allocation2 + $0x703]]
        %v1517 = vstv %s1516
        %v1518 = vmul.f32 %v1517, %v659
        %v1519 = vmul.f32 %v1517, %v662
        %v1520 = vadd.f32 %v1514, %v1518
        %v1521 = vadd.f32 %v1515, %v1519
        %s1522 = sld [smem:[#allocation2 + $0x783]]
        %v1523 = vstv %s1522
        %v1524 = vmul.f32 %v1523, %v709
        %v1525 = vmul.f32 %v1523, %v712
        %v1526 = vadd.f32 %v1520, %v1524
        %v1527 = vadd.f32 %v1521, %v1525
        %s1528 = sld [smem:[#allocation2 + $0x803]]
        %v1529 = vstv %s1528
        %v1530 = vmul.f32 %v1529, %v717
        %v1531 = vmul.f32 %v1529, %v720
        %v1532 = vadd.f32 %v1526, %v1530
        %v1533 = vadd.f32 %v1527, %v1531
        %s1534 = sld [smem:[#allocation2 + $0x883]]
        %v1535 = vstv %s1534
        %v1536 = vmul.f32 %v1535, %v725
        %v1537 = vmul.f32 %v1535, %v728
        %v1538 = vadd.f32 %v1532, %v1536
        %v1539 = vadd.f32 %v1533, %v1537
        %s1540 = sld [smem:[#allocation2 + $0x903]]
        %v1541 = vstv %s1540
        %v1542 = vmul.f32 %v1541, %v775
        %v1543 = vmul.f32 %v1541, %v778
        %v1544 = vadd.f32 %v1538, %v1542
        %v1545 = vadd.f32 %v1539, %v1543
        %s1546 = sld [smem:[#allocation2 + $0x983]]
        %v1547 = vstv %s1546
        %v1548 = vmul.f32 %v1547, %v783
        %v1549 = vmul.f32 %v1547, %v786
        %v1550 = vadd.f32 %v1544, %v1548
        %v1551 = vadd.f32 %v1545, %v1549
        %s1552 = sld [smem:[#allocation2 + $0xa03]]
        %v1553 = vstv %s1552
        %v1554 = vmul.f32 %v1553, %v791
        %v1555 = vmul.f32 %v1553, %v794
        %v1556 = vadd.f32 %v1550, %v1554
        %v1557 = vadd.f32 %v1551, %v1555
        %s1558 = sld [smem:[#allocation2 + $0xa83]]
        %v1559 = vstv %s1558
        %v1560 = vmul.f32 %v1559, %v841
        %v1561 = vmul.f32 %v1559, %v844
        %v1562 = vadd.f32 %v1556, %v1560
        %v1563 = vadd.f32 %v1557, %v1561
        %s1564 = sld [smem:[#allocation2 + $0xb03]]
        %v1565 = vstv %s1564
        %v1566 = vmul.f32 %v1565, %v849
        %v1567 = vmul.f32 %v1565, %v852
        %v1568 = vadd.f32 %v1562, %v1566
        %v1569 = vadd.f32 %v1563, %v1567
        %s1570 = sld [smem:[#allocation2 + $0xb83]]
        %v1571 = vstv %s1570
        %v1572 = vmul.f32 %v1571, %v857
        %v1573 = vmul.f32 %v1571, %v860
        %v1574 = vadd.f32 %v1568, %v1572
        %v1575 = vadd.f32 %v1569, %v1573
        %s1576 = sld [smem:[#allocation2 + $0xc03]]
        %v1577 = vstv %s1576
        %v1578 = vmul.f32 %v1577, %v907
        %v1579 = vmul.f32 %v1577, %v910
        %v1580 = vadd.f32 %v1574, %v1578
        %v1581 = vadd.f32 %v1575, %v1579
        %s1582 = sld [smem:[#allocation2 + $0xc83]]
        %v1583 = vstv %s1582
        %v1584 = vmul.f32 %v1583, %v915
        %v1585 = vmul.f32 %v1583, %v918
        %v1586 = vadd.f32 %v1580, %v1584
        %v1587 = vadd.f32 %v1581, %v1585
        %s1588 = sld [smem:[#allocation2 + $0xd03]]
        %v1589 = vstv %s1588
        %v1590 = vmul.f32 %v1589, %v923
        %v1591 = vmul.f32 %v1589, %v926
        %v1592 = vadd.f32 %v1586, %v1590
        %v1593 = vadd.f32 %v1587, %v1591
        %s1594 = scalar_lea.vmem %s274, 48 [#allocation6]
        %1595 = vst.msk [vmem:[%s1594] sm:$0xff] %vm1093, %v1592
        %1596 = vst.msk [vmem:[%s1594 + $0x8] sm:$0xff] %vm1093, %v1593
        %v1597 = vld [vmem:[%s274] sm:$0xff]
        %v1598 = vld [vmem:[%s274 + $0x8] sm:$0xff]
        %v1599 = vld [vmem:[%s274 + $0x10] sm:$0xff]
        %v1600 = vld [vmem:[%s274 + $0x18] sm:$0xff]
        %v1601 = vld [vmem:[%s274 + $0x20] sm:$0xff]
        %v1602 = vld [vmem:[%s274 + $0x28] sm:$0xff]
        %v1603 = vld [vmem:[%s274 + $0x30] sm:$0xff]
        %v1604 = vld [vmem:[%s274 + $0x38] sm:$0xff]
        %v1605 = vsel %vm1093, %v1597, 0.0
        %1606 = vadd.xlane.f32.xlu0 %v1605
        %v1607 = vpop.xlane.xlu0 %1606
        %v1608 = vsel %vm1093, %v1598, 0.0
        %1609 = vadd.xlane.f32.xlu0 %v1608
        %v1610 = vpop.xlane.xlu0 %1609
        %v1611 = vsel %vm1093, %v1599, 0.0
        %1612 = vadd.xlane.f32.xlu0 %v1611
        %v1613 = vpop.xlane.xlu0 %1612
        %v1614 = vsel %vm1093, %v1600, 0.0
        %1615 = vadd.xlane.f32.xlu0 %v1614
        %v1616 = vpop.xlane.xlu0 %1615
        %v1617 = vsel %vm1093, %v1601, 0.0
        %1618 = vadd.xlane.f32.xlu0 %v1617
        %v1619 = vpop.xlane.xlu0 %1618
        %v1620 = vsel %vm1093, %v1602, 0.0
        %1621 = vadd.xlane.f32.xlu0 %v1620
        %v1622 = vpop.xlane.xlu0 %1621
        %v1623 = vsel %vm1093, %v1603, 0.0
        %1624 = vadd.xlane.f32.xlu0 %v1623
        %v1625 = vpop.xlane.xlu0 %1624
        %v1626 = vsel %vm1093, %v1604, 0.0
        %1627 = vadd.xlane.f32.xlu0 %v1626
        %v1628 = vpop.xlane.xlu0 %1627
        %v1637 = vlaneseq
        %v1638 = vand.u32 %v1637, 127
        %v1639 = vlaneseq
        %v1640 = vshrl.u32 %v1639, 7
        %v1641 = vsub.s32 %v1638, %v1640
        %v1642 = vrot.slane %v1607, %v1641
        %v1643 = vadd.s32 %v1638, 4294967288
        %v1644 = vlaneseq
        %v1645 = vshrl.u32 %v1644, 7
        %v1646 = vsub.s32 %v1643, %v1645
        %v1647 = vrot.slane %v1610, %v1646
        %vm1648 = vcmask 130112
        %v1649 = vsel %vm1648, %v1647, %v1642
        %v1650 = vlaneseq
        %v1651 = vshrl.u32 %v1650, 7
        %v1652 = vsub.s32 %v1638, %v1651
        %v1653 = vrot.slane %v1613, %v1652
        %v1654 = vlaneseq
        %v1655 = vshrl.u32 %v1654, 7
        %v1656 = vsub.s32 %v1643, %v1655
        %v1657 = vrot.slane %v1616, %v1656
        %v1658 = vsel %vm1648, %v1657, %v1653
        %v1659 = vlaneseq
        %v1660 = vshrl.u32 %v1659, 7
        %v1661 = vsub.s32 %v1638, %v1660
        %v1662 = vrot.slane %v1619, %v1661
        %v1663 = vlaneseq
        %v1664 = vshrl.u32 %v1663, 7
        %v1665 = vsub.s32 %v1643, %v1664
        %v1666 = vrot.slane %v1622, %v1665
        %v1667 = vsel %vm1648, %v1666, %v1662
        %v1668 = vlaneseq
        %v1669 = vshrl.u32 %v1668, 7
        %v1670 = vsub.s32 %v1638, %v1669
        %v1671 = vrot.slane %v1625, %v1670
        %v1672 = vlaneseq
        %v1673 = vshrl.u32 %v1672, 7
        %v1674 = vsub.s32 %v1643, %v1673
        %v1675 = vrot.slane %v1628, %v1674
        %v1676 = vsel %vm1648, %v1675, %v1671
        %vm1677 = vcmask 1041409
        %v1678 = vsel %vm1677, %v1658, %v1649
        %vm1679 = vcmask 1042434
        %v1680 = vsel %vm1679, %v1667, %v1678
        %vm1681 = vcmask 1043459
        %v1682 = vsel %vm1681, %v1676, %v1680
        %vm1684 = vcmask 125952
        %v1685 = vsel %vm1684, %v1682, 0.0
        %1686 = vadd.xlane.f32.xlu0 %v1685
        %v1687 = vpop.xlane.xlu0 %1686
        %vm1688 = vcmask 3072
        %1689 = vst.msk [vmem:[%s303] sm:$0xf] %vm1688, %v1687
        %v1690 = vmul.f32 %v1597, %v1597
        %v1691 = vmul.f32 %v1598, %v1598
        %v1692 = vmul.f32 %v1599, %v1599
        %v1693 = vmul.f32 %v1600, %v1600
        %v1694 = vmul.f32 %v1601, %v1601
        %v1695 = vmul.f32 %v1602, %v1602
        %v1696 = vmul.f32 %v1603, %v1603
        %v1697 = vmul.f32 %v1604, %v1604
        %v1698 = vsel %vm1093, %v1690, 0.0
        %1699 = vadd.xlane.f32.xlu0 %v1698
        %v1700 = vpop.xlane.xlu0 %1699
        %v1701 = vsel %vm1093, %v1691, 0.0
        %1702 = vadd.xlane.f32.xlu0 %v1701
        %v1703 = vpop.xlane.xlu0 %1702
        %v1704 = vsel %vm1093, %v1692, 0.0
        %1705 = vadd.xlane.f32.xlu0 %v1704
        %v1706 = vpop.xlane.xlu0 %1705
        %v1707 = vsel %vm1093, %v1693, 0.0
        %1708 = vadd.xlane.f32.xlu0 %v1707
        %v1709 = vpop.xlane.xlu0 %1708
        %v1710 = vsel %vm1093, %v1694, 0.0
        %1711 = vadd.xlane.f32.xlu0 %v1710
        %v1712 = vpop.xlane.xlu0 %1711
        %v1713 = vsel %vm1093, %v1695, 0.0
        %1714 = vadd.xlane.f32.xlu0 %v1713
        %v1715 = vpop.xlane.xlu0 %1714
        %v1716 = vsel %vm1093, %v1696, 0.0
        %1717 = vadd.xlane.f32.xlu0 %v1716
        %v1718 = vpop.xlane.xlu0 %1717
        %v1719 = vsel %vm1093, %v1697, 0.0
        %1720 = vadd.xlane.f32.xlu0 %v1719
        %v1721 = vpop.xlane.xlu0 %1720
        %v1730 = vlaneseq
        %v1731 = vshrl.u32 %v1730, 7
        %v1732 = vsub.s32 %v1638, %v1731
        %v1733 = vrot.slane %v1700, %v1732
        %v1734 = vlaneseq
        %v1735 = vshrl.u32 %v1734, 7
        %v1736 = vsub.s32 %v1643, %v1735
        %v1737 = vrot.slane %v1703, %v1736
        %v1738 = vsel %vm1648, %v1737, %v1733
        %v1739 = vlaneseq
        %v1740 = vshrl.u32 %v1739, 7
        %v1741 = vsub.s32 %v1638, %v1740
        %v1742 = vrot.slane %v1706, %v1741
        %v1743 = vlaneseq
        %v1744 = vshrl.u32 %v1743, 7
        %v1745 = vsub.s32 %v1643, %v1744
        %v1746 = vrot.slane %v1709, %v1745
        %v1747 = vsel %vm1648, %v1746, %v1742
        %v1748 = vlaneseq
        %v1749 = vshrl.u32 %v1748, 7
        %v1750 = vsub.s32 %v1638, %v1749
        %v1751 = vrot.slane %v1712, %v1750
        %v1752 = vlaneseq
        %v1753 = vshrl.u32 %v1752, 7
        %v1754 = vsub.s32 %v1643, %v1753
        %v1755 = vrot.slane %v1715, %v1754
        %v1756 = vsel %vm1648, %v1755, %v1751
        %v1757 = vlaneseq
        %v1758 = vshrl.u32 %v1757, 7
        %v1759 = vsub.s32 %v1638, %v1758
        %v1760 = vrot.slane %v1718, %v1759
        %v1761 = vlaneseq
        %v1762 = vshrl.u32 %v1761, 7
        %v1763 = vsub.s32 %v1643, %v1762
        %v1764 = vrot.slane %v1721, %v1763
        %v1765 = vsel %vm1648, %v1764, %v1760
        %v1766 = vsel %vm1677, %v1747, %v1738
        %v1767 = vsel %vm1679, %v1756, %v1766
        %v1768 = vsel %vm1681, %v1765, %v1767
        %v1770 = vsel %vm1684, %v1768, 0.0
        %1771 = vadd.xlane.f32.xlu0 %v1770
        %v1772 = vpop.xlane.xlu0 %1771
        %vm1773 = vcmask 11272
        %1774 = vst.msk [vmem:[%s303] sm:$0xf] %vm1773, %v1772
        %s1775 = sand.u32 %s135, 1
        %s1776 = sand.u32 %s135, 1
        %s1777 = smul.addr %s1776, 64
        %s1778 = scalar_lea.vmem [#allocation6], %s1777
        %p1779 = scmp.lt.s32.totalorder %s23, 1
        %s1780 = scalar_select %p1779, %s23, 1
        %p1781 = scmp.lt.s32.totalorder %s24, 1
        %s1782 = scalar_select %p1781, %s24, 1
        %s1783 = smul.addr %s1780, 2
        %s1784 = sadd.s32 %s1782, %s1783
        %s1785 = smul.addr %s1784, 4
        %s1786 = scalar_lea.vmem %s5, %s1785
        // Predicated region
        $region45: #{multi_input_forward.2} parent=35 // pred_check
          %p1787 = pneg %p145
        $region46: #{multi_input_forward.2} parent=35 // pred_check_branch
          %1789 = sbr.rel (%p1787) target = $region48
        $region47: #{multi_input_forward.2} parent=35 // pred_region
          %s1790 = smul.u32 2, %s24
          %s1791 = smul.addr %s23, 16
          %s1792 = sadd.s32 %s1790, %s1791
          %s1793 = smul.addr %s1792, 8
          %s1794 = scalar_lea.vmem %s4, %s1793
          // Predicated region
          $region49: #{multi_input_forward.2} parent=47 // pred_check
            _
          $region50: #{multi_input_forward.2} parent=47 // pred_check_branch
            %1796 = sbr.rel (0) target = $region52
          $region51: #{multi_input_forward.2} parent=47 // pred_region
            // Predicated region
            $region53: #{multi_input_forward.2} parent=51 // pred_check
              _
            $region54: #{multi_input_forward.2} parent=51 // pred_check_branch
              %1798 = sbr.rel (0) target = $region56
            $region55: #{multi_input_forward.2} parent=51 // pred_region
              // Predicated region
              $region68: #{multi_input_forward.2} parent=55 // pred_check
                _
              $region69: #{multi_input_forward.2} parent=55 // pred_check_branch
                %1827 = sbr.rel (0) target = $region71
              $region70: #{multi_input_forward.2} parent=55 // pred_region
                loop: start=0, step=1, limit=1
                $region72: #{multi_input_forward.2} parent=70 // loop_pre_header
                  _
                $region73: #{multi_input_forward.2} parent=70 // loop_header
                  %s1829 = sphi 0, %s1833
                  %p1830 = scmp.ge.s32.totalorder %s1829, 1
                  %s1834 = sphi %s1778, %s1778
                  %s1835 = sphi %s1794, %s1794
                $region74: #{multi_input_forward.2} parent=70 // loop_header_branch
                  %1832 = sbr.rel (%p1830) target = $region78
                $region75: #{multi_input_forward.2} parent=70 // loop_body
                  %v1836 = vld [vmem:[%s1834] sm:$0xff]
                  %1837 = vst [vmem:[%s1835] sm:$0xff] %v1836
                  %v1838 = vld [vmem:[%s1834 + $0x8] sm:$0xff]
                  %1839 = vst [vmem:[%s1835 + $0x8] sm:$0xff] %v1838
                  %v1840 = vld [vmem:[%s1834 + $0x10] sm:$0xff]
                  %1841 = vst [vmem:[%s1835 + $0x20] sm:$0xff] %v1840
                  %v1842 = vld [vmem:[%s1834 + $0x18] sm:$0xff]
                  %1843 = vst [vmem:[%s1835 + $0x28] sm:$0xff] %v1842
                  %v1844 = vld [vmem:[%s1834 + $0x20] sm:$0xff]
                  %1845 = vst [vmem:[%s1835 + $0x40] sm:$0xff] %v1844
                  %v1846 = vld [vmem:[%s1834 + $0x28] sm:$0xff]
                  %1847 = vst [vmem:[%s1835 + $0x48] sm:$0xff] %v1846
                  %v1848 = vld [vmem:[%s1834 + $0x30] sm:$0xff]
                  %1849 = vst [vmem:[%s1835 + $0x60] sm:$0xff] %v1848
                  %v1850 = vld [vmem:[%s1834 + $0x38] sm:$0xff]
                  %1851 = vst [vmem:[%s1835 + $0x68] sm:$0xff] %v1850
                $region76: #{multi_input_forward.2} parent=70 // loop_footer
                  %s1833 = sadd.s32 1, %s1829
                $region77: #{multi_input_forward.2} parent=70 // loop_footer_branch
                  %1828 = sbr.rel target = $region73
                $region78: #{multi_input_forward.2} parent=70 // loop_exit
                  _
              $region71: #{multi_input_forward.2} parent=55 // pred_fallthru
                _
              // Predicated region
              $region79: #{multi_input_forward.2} parent=55 // pred_check
                _
              $region80: #{multi_input_forward.2} parent=55 // pred_check_branch
                %1853 = sbr.rel target = $region82
              $region81: #{multi_input_forward.2} parent=55 // pred_region
                _
              $region82: #{multi_input_forward.2} parent=55 // pred_fallthru
                _
            $region56: #{multi_input_forward.2} parent=51 // pred_fallthru
              _
            // Predicated region
            $region57: #{multi_input_forward.2} parent=51 // pred_check
              _
            $region58: #{multi_input_forward.2} parent=51 // pred_check_branch
              %1800 = sbr.rel target = $region60
            $region59: #{multi_input_forward.2} parent=51 // pred_region
              loop: start=0, step=1, limit=1
              $region61: #{multi_input_forward.2} parent=59 // loop_pre_header
                _
              $region62: #{multi_input_forward.2} parent=59 // loop_header
                %s1803 = sphi 0, %s1807
                %p1804 = scmp.ge.s32.totalorder %s1803, 1
                %s1808 = sphi %s1778, %s1778
                %s1809 = sphi %s1794, %s1794
              $region63: #{multi_input_forward.2} parent=59 // loop_header_branch
                %1806 = sbr.rel (%p1804) target = $region67
              $region64: #{multi_input_forward.2} parent=59 // loop_body
                %v1810 = vld [vmem:[%s1808] sm:$0xff]
                %1811 = vst [vmem:[%s1809] sm:$0xff] %v1810
                %v1812 = vld [vmem:[%s1808 + $0x8] sm:$0xff]
                %1813 = vst [vmem:[%s1809 + $0x8] sm:$0xff] %v1812
                %v1814 = vld [vmem:[%s1808 + $0x10] sm:$0xff]
                %1815 = vst [vmem:[%s1809 + $0x20] sm:$0xff] %v1814
                %v1816 = vld [vmem:[%s1808 + $0x18] sm:$0xff]
                %1817 = vst [vmem:[%s1809 + $0x28] sm:$0xff] %v1816
                %v1818 = vld [vmem:[%s1808 + $0x20] sm:$0xff]
                %1819 = vst [vmem:[%s1809 + $0x40] sm:$0xff] %v1818
                %v1820 = vld [vmem:[%s1808 + $0x28] sm:$0xff]
                %1821 = vst [vmem:[%s1809 + $0x48] sm:$0xff] %v1820
                %v1822 = vld [vmem:[%s1808 + $0x30] sm:$0xff]
                %1823 = vst [vmem:[%s1809 + $0x60] sm:$0xff] %v1822
                %v1824 = vld [vmem:[%s1808 + $0x38] sm:$0xff]
                %1825 = vst [vmem:[%s1809 + $0x68] sm:$0xff] %v1824
              $region65: #{multi_input_forward.2} parent=59 // loop_footer
                %s1807 = sadd.s32 1, %s1803
              $region66: #{multi_input_forward.2} parent=59 // loop_footer_branch
                %1802 = sbr.rel target = $region62
              $region67: #{multi_input_forward.2} parent=59 // loop_exit
                _
            $region60: #{multi_input_forward.2} parent=51 // pred_fallthru
              _
          $region52: #{multi_input_forward.2} parent=47 // pred_fallthru
            _
          %1854 = vnop
        $region48: #{multi_input_forward.2} parent=35 // pred_fallthru
          _
        // Predicated region
        $region83: #{multi_input_forward.2} parent=35 // pred_check
          %p1855 = pneg %p173
        $region84: #{multi_input_forward.2} parent=35 // pred_check_branch
          %1857 = sbr.rel (%p1855) target = $region86
        $region85: #{multi_input_forward.2} parent=35 // pred_region
          _
        $region86: #{multi_input_forward.2} parent=35 // pred_fallthru
          _
      $region36: #{multi_input_forward.2} parent=5 // pred_fallthru
        _
      %p1858 = scmp.le.s32.totalorder 2, %s14
      // Predicated region
      $region87: #{multi_input_forward.2} parent=5 // pred_check
        %p1859 = pneg %p1858
      $region88: #{multi_input_forward.2} parent=5 // pred_check_branch
        %1861 = sbr.rel (%p1859) target = $region90
      $region89: #{multi_input_forward.2} parent=5 // pred_region
        %s1862 = ssub.s32 %s14, 2
        // Predicated region
        $region91: #{multi_input_forward.2} parent=89 // pred_check
          %p1863 = pneg %p151
        $region92: #{multi_input_forward.2} parent=89 // pred_check_branch
          %1865 = sbr.rel (%p1863) target = $region94
        $region93: #{multi_input_forward.2} parent=89 // pred_region
          %s1866 = sand.u32 %s136, 1
          %s1867 = sand.u32 %s136, 1
          %s1868 = smul.addr %s1867, 64
          %s1869 = scalar_lea.vmem [#allocation6], %s1868
        $region94: #{multi_input_forward.2} parent=89 // pred_fallthru
          _
        // Predicated region
        $region95: #{multi_input_forward.2} parent=89 // pred_check
          %p1870 = pneg %p179
        $region96: #{multi_input_forward.2} parent=89 // pred_check_branch
          %1872 = sbr.rel (%p1870) target = $region98
        $region97: #{multi_input_forward.2} parent=89 // pred_region
          %p1873 = scmp.lt.s32.totalorder %s25, 1
          %s1874 = scalar_select %p1873, %s25, 1
          %p1875 = scmp.lt.s32.totalorder %s26, 1
          %s1876 = scalar_select %p1875, %s26, 1
          %s1877 = smul.addr %s1874, 2
          %s1878 = sadd.s32 %s1876, %s1877
          %s1879 = smul.addr %s1878, 4
          %s1880 = scalar_lea.vmem %s5, %s1879
        $region98: #{multi_input_forward.2} parent=89 // pred_fallthru
          _
      $region90: #{multi_input_forward.2} parent=5 // pred_fallthru
        _
    $region6: #{multi_input_forward.2} parent=1 // loop_footer
      %s18 = sadd.s32 1, %s14
    $region7: #{multi_input_forward.2} parent=1 // loop_footer_branch
      %13 = sbr.rel target = $region3
    $region8: #{multi_input_forward.2} parent=1 // loop_exit
      _
    %1881 = vsyncpa [#allocation3], 1
    %s1882 = scalar_lea.sflag [#allocation3], 1
    %1883 = vsyncpa %s1882, 1
    %1884 = vsyncpa [#allocation5], 1

</llo_original>
